<compile_context>
chip_gen: v7x
topology: tpu7x:2x2x1
jax: 0.10.0
libtpu: 0.0.40
codegen_flags: <defaults>
</compile_context>

<pallas_src>
import functools
import math

import jax
import jax.numpy as jnp
from jax.experimental import pallas as pl
from jax.experimental.pallas import tpu as pltpu


def _layernorm(x, gamma, beta, eps=1e-5):
    mean = jnp.mean(x, axis=-1, keepdims=True)
    var = jnp.mean((x - mean) ** 2, axis=-1, keepdims=True)
    return (x - mean) * jax.lax.rsqrt(var + eps) * gamma + beta


def _gelu(x):
    # TODO(synk): tanh-approximate GELU; PyTorch nn.GELU defaults to the erf form,
    # so compare against the reference with a small tolerance.
    c = 0.7978845608028654
    return 0.5 * x * (1.0 + jnp.tanh(c * (x + 0.044715 * x * x * x)))


def _regressor_kernel(
    x_in_ref, vis_ref,
    wq_ref, bq_ref, wk_ref, bk_ref, wv_ref, bv_ref, wo_ref, bo_ref,
    g1_ref, beta1_ref, w1_ref, b1_ref, w2_ref, b2_ref, g2_ref, beta2_ref,
    a1_ref, a2_ref,
    out_ref,
    kv_ref,
    *, num_layers, num_heads, seq_vis, seq_mask):
    Bb = x_in_ref.shape[0]
    D = x_in_ref.shape[2]
    dk = D // num_heads
    Skv = seq_vis + seq_mask
    M = Bb * seq_mask

    # Visible half of the KV buffer is layer-invariant: write it once per batch
    # block; only the mask-token half is refreshed inside the layer loop.
    kv_ref[:, :seq_vis, :] = vis_ref[...].astype(jnp.float32)

    # Flattened (Bb*Sm, D) layer carry (stays in registers/VMEM across layers).
    x2 = x_in_ref[...].astype(jnp.float32).reshape(M, D)

    for l in range(num_layers):                       # static unroll; weights VMEM-resident
        kv_ref[:, seq_vis:, :] = x2.reshape(Bb, seq_mask, D)
        kv2 = kv_ref[...].reshape(Bb * Skv, D)

        # Fused full-width projections (softmax scale pre-folded into wq/bq).
        q2 = jnp.dot(x2, wq_ref[l], preferred_element_type=jnp.float32) + bq_ref[l]
        k2 = jnp.dot(kv2, wk_ref[l], preferred_element_type=jnp.float32) + bk_ref[l]
        v2 = jnp.dot(kv2, wv_ref[l], preferred_element_type=jnp.float32) + bv_ref[l]
        q3 = q2.reshape(Bb, seq_mask, D)
        k3 = k2.reshape(Bb, Skv, D)
        v3 = v2.reshape(Bb, Skv, D)

        wo_l = wo_ref[l]                              # (D, D), sliced per head on sublanes
        attn = jnp.zeros((M, D), jnp.float32) + bo_ref[l]
        for h in range(num_heads):
            lo, hi = h * dk, (h + 1) * dk
            qh = q3[:, :, lo:hi]                      # lane slices of activations
            kh = k3[:, :, lo:hi]
            vh = v3[:, :, lo:hi]
            s = jnp.einsum("bqd,bkd->bqk", qh, kh,
                           preferred_element_type=jnp.float32)      # (Bb, Sm, Skv)
            s = s - jnp.max(s, axis=-1, keepdims=True)
            p = jnp.exp(s)
            inv = pl.reciprocal(jnp.sum(p, axis=-1, keepdims=True), approx=True)  # EUP slot
            ctx = jnp.einsum("bqk,bkd->bqd", p, vh,
                             preferred_element_type=jnp.float32) * inv            # (Bb, Sm, dk)
            attn = attn + jnp.dot(ctx.reshape(M, dk), wo_l[lo:hi, :],
                                  preferred_element_type=jnp.float32)

        # SublayerConnection 1: residual (scaled by a1, read from SMEM) + LayerNorm.
        # TODO(synk): dropout inside the sublayer connection is omitted (inference).
        y = _layernorm(x2 + a1_ref[l] * attn, g1_ref[l], beta1_ref[l])

        # PointWiseFeedForward: Linear -> GELU -> Linear.
        hdn = _gelu(jnp.dot(y, w1_ref[l], preferred_element_type=jnp.float32) + b1_ref[l])
        ffn = jnp.dot(hdn, w2_ref[l], preferred_element_type=jnp.float32) + b2_ref[l]

        # SublayerConnection 2.
        x2 = _layernorm(y + a2_ref[l] * ffn, g2_ref[l], beta2_ref[l])

    out_ref[...] = x2.reshape(Bb, seq_mask, D).astype(out_ref.dtype)


def _pick_batch_block(batch):
    # Up to 8 examples per block, but keep >= 2 grid programs so both v7x
    # TensorCores get work when batch allows it.
    for bb in (8, 4, 2):
        if batch % bb == 0 and batch // bb >= 2:
            return bb
    return 1


def regressor_forward(rep_visible, rep_mask_token, layer_params, num_heads,
                      batch_block=None):
    """Regressor.forward: all CrossAttnTRMBlock layers fused into one pallas_call."""
    B, Sm, D = rep_mask_token.shape
    Sv = rep_visible.shape[1]
    L = len(layer_params)
    dk = D // num_heads

    Bb = _pick_batch_block(B) if batch_block is None else batch_block
    assert B % Bb == 0, "batch block must divide batch"
    grid = (B // Bb,)

    def stk(name):
        return jnp.stack([p[name] for p in layer_params], axis=0)

    # Wrapper-side parameter prep (no runtime cost in the kernel).
    scale = 1.0 / math.sqrt(dk)
    wq = stk("wq") * scale                 # fold 1/sqrt(dk) into the Q projection
    bq = stk("bq") * scale
    wk = stk("wk"); bk = stk("bk")
    wv = stk("wv"); bv = stk("bv")
    wo = stk("wo"); bo = stk("bo")
    g1 = stk("g1"); beta1 = stk("beta1")
    w1 = stk("w1"); b1 = stk("b1"); w2 = stk("w2"); b2 = stk("b2")
    g2 = stk("g2"); beta2 = stk("beta2")
    a1 = stk("a1").reshape(L)              # scalar residual gains -> SMEM
    a2 = stk("a2").reshape(L)

    def batch_spec(S):
        return pl.BlockSpec((Bb, S, D), lambda b: (b, 0, 0))

    def resident(arr):
        # Full (L, ...) block with a constant index_map: DMA'd once, VMEM-resident
        # for every grid step.
        nd = arr.ndim
        return pl.BlockSpec(arr.shape, lambda b, _n=nd: (0,) * _n)

    smem_spec = pl.BlockSpec(memory_space=pltpu.MemorySpace.SMEM)

    in_specs = [
        batch_spec(Sm),                    # rep_mask_token (initial carry)
        batch_spec(Sv),                    # rep_visible
        resident(wq), resident(bq),        # fused (L, D, D) / (L, 1, D)
        resident(wk), resident(bk),
        resident(wv), resident(bv),
        resident(wo), resident(bo),
        resident(g1), resident(beta1),
        resident(w1), resident(b1),        # (L, D, F) / (L, 1, F)
        resident(w2), resident(b2),        # (L, F, D) / (L, 1, D)
        resident(g2), resident(beta2),
        smem_spec,                         # a1 (L,) scalars in SMEM
        smem_spec,                         # a2 (L,) scalars in SMEM
    ]

    kernel = functools.partial(
        _regressor_kernel,
        num_layers=L, num_heads=num_heads, seq_vis=Sv, seq_mask=Sm)

    return pl.pallas_call(
        kernel,
        out_shape=jax.ShapeDtypeStruct((B, Sm, D), rep_mask_token.dtype),
        grid=grid,                                         # batch blocks only
        in_specs=in_specs,
        out_specs=pl.BlockSpec((Bb, Sm, D), lambda b: (b, 0, 0)),
        scratch_shapes=[pltpu.VMEM((Bb, Sv + Sm, D), jnp.float32)],  # persistent kv buffer
        compiler_params=pltpu.CompilerParams(
            dimension_semantics=("parallel",)),
    )(
        rep_mask_token, rep_visible,
        wq, bq, wk, bk, wv, bv, wo, bo,
        g1, beta1,
        w1, b1, w2, b2,
        g2, beta2,
        a1, a2,
    )


def regressor_reference(rep_visible, rep_mask_token, layer_params, num_heads):
    """Pure-JAX reference of the same forward pass (for correctness checking)."""
    x = rep_mask_token
    D = x.shape[-1]
    dk = D // num_heads
    for p in layer_params:
        kv = jnp.concatenate([rep_visible, x], axis=1)
        q = x @ p["wq"] + p["bq"]
        k = kv @ p["wk"] + p["bk"]
        v = kv @ p["wv"] + p["bv"]
        B, Sm, _ = q.shape
        Skv = kv.shape[1]
        qh = q.reshape(B, Sm, num_heads, dk).transpose(0, 2, 1, 3)
        kh = k.reshape(B, Skv, num_heads, dk).transpose(0, 2, 1, 3)
        vh = v.reshape(B, Skv, num_heads, dk).transpose(0, 2, 1, 3)
        s = jnp.einsum("bhqd,bhkd->bhqk", qh, kh) / math.sqrt(dk)
        pa = jax.nn.softmax(s, axis=-1)
        ctx = jnp.einsum("bhqk,bhkd->bhqd", pa, vh).transpose(0, 2, 1, 3).reshape(B, Sm, D)
        attn = ctx @ p["wo"] + p["bo"]
        y = _layernorm(x + p["a1"][0, 0] * attn, p["g1"], p["beta1"])
        ffn = _gelu(y @ p["w1"] + p["b1"]) @ p["w2"] + p["b2"]
        x = _layernorm(y + p["a2"][0, 0] * ffn, p["g2"], p["beta2"])
    return x


def init_layer_params(key, d_model, d_ffn):
    """Deterministic synthetic parameter init (xavier-normal-ish weights, zero biases)."""
    ks = jax.random.split(key, 6)

    def xavier(k, shape):
        fan_in, fan_out = shape
        std = math.sqrt(2.0 / (fan_in + fan_out))
        return (std * jax.random.normal(k, shape)).astype(jnp.float32)

    # NOTE: the PyTorch module initializes the residual scale to 1e-8; we use 1.0
    # here so the attention / FFN branches actually contribute in this synthetic run.
    alpha = jnp.ones((1, 1), jnp.float32)
    return dict(
        wq=xavier(ks[0], (d_model, d_model)), bq=jnp.zeros((1, d_model), jnp.float32),
        wk=xavier(ks[1], (d_model, d_model)), bk=jnp.zeros((1, d_model), jnp.float32),
        wv=xavier(ks[2], (d_model, d_model)), bv=jnp.zeros((1, d_model), jnp.float32),
        wo=xavier(ks[3], (d_model, d_model)), bo=jnp.zeros((1, d_model), jnp.float32),
        a1=alpha,
        g1=jnp.ones((1, d_model), jnp.float32), beta1=jnp.zeros((1, d_model), jnp.float32),
        w1=xavier(ks[4], (d_model, d_ffn)), b1=jnp.zeros((1, d_ffn), jnp.float32),
        w2=xavier(ks[5], (d_ffn, d_model)), b2=jnp.zeros((1, d_model), jnp.float32),
        a2=alpha,
        g2=jnp.ones((1, d_model), jnp.float32), beta2=jnp.zeros((1, d_model), jnp.float32),
    )


if __name__ == "__main__":
    # Small shapes consistent with the module's forward signature.
    B, Sv, Sm = 2, 8, 8
    d_model, attn_heads, d_ffn, num_layers = 32, 4, 64, 2

    key = jax.random.PRNGKey(0)
    kv_key, km_key, kp_key = jax.random.split(key, 3)
    rep_visible = jax.random.normal(kv_key, (B, Sv, d_model), jnp.float32)
    rep_mask_token = jax.random.normal(km_key, (B, Sm, d_model), jnp.float32)

    layer_params = [
        init_layer_params(k, d_model, d_ffn)
        for k in jax.random.split(kp_key, num_layers)
    ]

    out = regressor_forward(rep_visible, rep_mask_token, layer_params, attn_heads)
    jax.block_until_ready(out)
    assert out.shape == (B, Sm, d_model) and out.dtype == jnp.float32

    # Loose-tolerance check against the pure-JAX reference (approx reciprocal in the
    # kernel softmax introduces a few-ULP deviation).
    ref = regressor_reference(rep_visible, rep_mask_token, layer_params, attn_heads)
    assert jnp.allclose(out, ref, atol=1e-2, rtol=1e-2), "mismatch vs JAX reference"

    print("KERNEL_OK")
</pallas_src>

<mosaic_0001>
module attributes {stable_mosaic.version = 11 : i64} {
  func.func @_regressor_kernel(%arg0: i32, %arg1: memref<1x8x32xf32, #tpu.memory_space<vmem>>, %arg2: memref<1x8x32xf32, #tpu.memory_space<vmem>>, %arg3: memref<2x32x32xf32, #tpu.memory_space<vmem>>, %arg4: memref<2x1x32xf32, #tpu.memory_space<vmem>>, %arg5: memref<2x32x32xf32, #tpu.memory_space<vmem>>, %arg6: memref<2x1x32xf32, #tpu.memory_space<vmem>>, %arg7: memref<2x32x32xf32, #tpu.memory_space<vmem>>, %arg8: memref<2x1x32xf32, #tpu.memory_space<vmem>>, %arg9: memref<2x32x32xf32, #tpu.memory_space<vmem>>, %arg10: memref<2x1x32xf32, #tpu.memory_space<vmem>>, %arg11: memref<2x1x32xf32, #tpu.memory_space<vmem>>, %arg12: memref<2x1x32xf32, #tpu.memory_space<vmem>>, %arg13: memref<2x32x64xf32, #tpu.memory_space<vmem>>, %arg14: memref<2x1x64xf32, #tpu.memory_space<vmem>>, %arg15: memref<2x64x32xf32, #tpu.memory_space<vmem>>, %arg16: memref<2x1x32xf32, #tpu.memory_space<vmem>>, %arg17: memref<2x1x32xf32, #tpu.memory_space<vmem>>, %arg18: memref<2x1x32xf32, #tpu.memory_space<vmem>>, %arg19: memref<2xf32, #tpu.memory_space<smem>>, %arg20: memref<2xf32, #tpu.memory_space<smem>>, %arg21: memref<1x8x32xf32, #tpu.memory_space<vmem>>, %arg22: memref<1x16x32xf32, #tpu.memory_space<vmem>>) attributes {dimension_semantics = [#tpu.dimension_semantics<parallel>], iteration_bounds = array<i64: 2>, scalar_prefetch = 0 : i64, scratch_operands = 1 : i64, tpu.core_type = #tpu.core_type<tc>, window_params = [{transform_indices = @transform_0, window_bounds = array<i64: 1, 8, 32>}, {transform_indices = @transform_1, window_bounds = array<i64: 1, 8, 32>}, {pipeline_mode = #tpu.pipeline_mode<synchronous>, transform_indices = @transform_2, window_bounds = array<i64: 2, 32, 32>}, {pipeline_mode = #tpu.pipeline_mode<synchronous>, transform_indices = @transform_3, window_bounds = array<i64: 2, 1, 32>}, {pipeline_mode = #tpu.pipeline_mode<synchronous>, transform_indices = @transform_4, window_bounds = array<i64: 2, 32, 32>}, {pipeline_mode = #tpu.pipeline_mode<synchronous>, transform_indices = @transform_5, window_bounds = array<i64: 2, 1, 32>}, {pipeline_mode = #tpu.pipeline_mode<synchronous>, transform_indices = @transform_6, window_bounds = array<i64: 2, 32, 32>}, {pipeline_mode = #tpu.pipeline_mode<synchronous>, transform_indices = @transform_7, window_bounds = array<i64: 2, 1, 32>}, {pipeline_mode = #tpu.pipeline_mode<synchronous>, transform_indices = @transform_8, window_bounds = array<i64: 2, 32, 32>}, {pipeline_mode = #tpu.pipeline_mode<synchronous>, transform_indices = @transform_9, window_bounds = array<i64: 2, 1, 32>}, {pipeline_mode = #tpu.pipeline_mode<synchronous>, transform_indices = @transform_10, window_bounds = array<i64: 2, 1, 32>}, {pipeline_mode = #tpu.pipeline_mode<synchronous>, transform_indices = @transform_11, window_bounds = array<i64: 2, 1, 32>}, {pipeline_mode = #tpu.pipeline_mode<synchronous>, transform_indices = @transform_12, window_bounds = array<i64: 2, 32, 64>}, {pipeline_mode = #tpu.pipeline_mode<synchronous>, transform_indices = @transform_13, window_bounds = array<i64: 2, 1, 64>}, {pipeline_mode = #tpu.pipeline_mode<synchronous>, transform_indices = @transform_14, window_bounds = array<i64: 2, 64, 32>}, {pipeline_mode = #tpu.pipeline_mode<synchronous>, transform_indices = @transform_15, window_bounds = array<i64: 2, 1, 32>}, {pipeline_mode = #tpu.pipeline_mode<synchronous>, transform_indices = @transform_16, window_bounds = array<i64: 2, 1, 32>}, {pipeline_mode = #tpu.pipeline_mode<synchronous>, transform_indices = @transform_17, window_bounds = array<i64: 2, 1, 32>}, {transform_indices = @transform_18, window_bounds = array<i64: 2>}, {transform_indices = @transform_19, window_bounds = array<i64: 2>}, {transform_indices = @transform_20, window_bounds = array<i64: 1, 8, 32>}]} {
    %c0 = arith.constant 0 : index
    %c0_0 = arith.constant 0 : index
    %c0_1 = arith.constant 0 : index
    %0 = vector.load %arg2[%c0, %c0_0, %c0_1] : memref<1x8x32xf32, #tpu.memory_space<vmem>>, vector<1x8x32xf32>
    %c0_2 = arith.constant 0 : index
    %c0_3 = arith.constant 0 : index
    %c0_4 = arith.constant 0 : index
    %1 = vector.load %arg22[%c0_2, %c0_3, %c0_4] : memref<1x16x32xf32, #tpu.memory_space<vmem>>, vector<1x8x32xf32>
    tpu.vector_store %arg22[%c0_2, %c0_3, %c0_4], %0 {strides = array<i32>} : memref<1x16x32xf32, #tpu.memory_space<vmem>>, vector<1x8x32xf32>,
    %c0_5 = arith.constant 0 : index
    %c0_6 = arith.constant 0 : index
    %c0_7 = arith.constant 0 : index
    %2 = vector.load %arg1[%c0_5, %c0_6, %c0_7] : memref<1x8x32xf32, #tpu.memory_space<vmem>>, vector<1x8x32xf32>
    %3 = vector.shape_cast %2 : vector<1x8x32xf32> to vector<8x32xf32>
    %4 = vector.shape_cast %3 : vector<8x32xf32> to vector<1x8x32xf32>
    %c0_8 = arith.constant 0 : index
    %c8 = arith.constant 8 : index
    %c0_9 = arith.constant 0 : index
    %5 = vector.load %arg22[%c0_8, %c8, %c0_9] : memref<1x16x32xf32, #tpu.memory_space<vmem>>, vector<1x8x32xf32>
    tpu.vector_store %arg22[%c0_8, %c8, %c0_9], %4 {strides = array<i32>} : memref<1x16x32xf32, #tpu.memory_space<vmem>>, vector<1x8x32xf32>,
    %c0_10 = arith.constant 0 : index
    %c0_11 = arith.constant 0 : index
    %c0_12 = arith.constant 0 : index
    %6 = vector.load %arg22[%c0_10, %c0_11, %c0_12] : memref<1x16x32xf32, #tpu.memory_space<vmem>>, vector<1x16x32xf32>
    %7 = vector.shape_cast %6 : vector<1x16x32xf32> to vector<16x32xf32>
    %c0_13 = arith.constant 0 : index
    %c0_14 = arith.constant 0 : index
    %c0_15 = arith.constant 0 : index
    %8 = vector.load %arg3[%c0_13, %c0_14, %c0_15] : memref<2x32x32xf32, #tpu.memory_space<vmem>>, vector<1x32x32xf32>
    %9 = vector.shape_cast %8 : vector<1x32x32xf32> to vector<32x32xf32>
    %cst = arith.constant dense<0.000000e+00> : vector<8x32xf32>
    %10 = tpu.matmul %3, %9, %cst {dimension_numbers = #tpu.dot_dimension_numbers<[1], [0], [0], [1], [0, 0, 1, 1], [], []>} : vector<8x32xf32>, vector<32x32xf32>, vector<8x32xf32> -> vector<8x32xf32>
    %c0_16 = arith.constant 0 : index
    %c0_17 = arith.constant 0 : index
    %c0_18 = arith.constant 0 : index
    %11 = vector.load %arg4[%c0_16, %c0_17, %c0_18] : memref<2x1x32xf32, #tpu.memory_space<vmem>>, vector<1x1x32xf32>
    %12 = vector.shape_cast %11 : vector<1x1x32xf32> to vector<1x32xf32>
    %13 = vector.broadcast %12 : vector<1x32xf32> to vector<8x32xf32>
    %14 = arith.addf %10, %13 : vector<8x32xf32>
    %c0_19 = arith.constant 0 : index
    %c0_20 = arith.constant 0 : index
    %c0_21 = arith.constant 0 : index
    %15 = vector.load %arg5[%c0_19, %c0_20, %c0_21] : memref<2x32x32xf32, #tpu.memory_space<vmem>>, vector<1x32x32xf32>
    %16 = vector.shape_cast %15 : vector<1x32x32xf32> to vector<32x32xf32>
    %cst_22 = arith.constant dense<0.000000e+00> : vector<16x32xf32>
    %17 = tpu.matmul %7, %16, %cst_22 {dimension_numbers = #tpu.dot_dimension_numbers<[1], [0], [0], [1], [0, 0, 1, 1], [], []>} : vector<16x32xf32>, vector<32x32xf32>, vector<16x32xf32> -> vector<16x32xf32>
    %c0_23 = arith.constant 0 : index
    %c0_24 = arith.constant 0 : index
    %c0_25 = arith.constant 0 : index
    %18 = vector.load %arg6[%c0_23, %c0_24, %c0_25] : memref<2x1x32xf32, #tpu.memory_space<vmem>>, vector<1x1x32xf32>
    %19 = vector.shape_cast %18 : vector<1x1x32xf32> to vector<1x32xf32>
    %20 = vector.broadcast %19 : vector<1x32xf32> to vector<16x32xf32>
    %21 = arith.addf %17, %20 : vector<16x32xf32>
    %c0_26 = arith.constant 0 : index
    %c0_27 = arith.constant 0 : index
    %c0_28 = arith.constant 0 : index
    %22 = vector.load %arg7[%c0_26, %c0_27, %c0_28] : memref<2x32x32xf32, #tpu.memory_space<vmem>>, vector<1x32x32xf32>
    %23 = vector.shape_cast %22 : vector<1x32x32xf32> to vector<32x32xf32>
    %cst_29 = arith.constant dense<0.000000e+00> : vector<16x32xf32>
    %24 = tpu.matmul %7, %23, %cst_29 {dimension_numbers = #tpu.dot_dimension_numbers<[1], [0], [0], [1], [0, 0, 1, 1], [], []>} : vector<16x32xf32>, vector<32x32xf32>, vector<16x32xf32> -> vector<16x32xf32>
    %c0_30 = arith.constant 0 : index
    %c0_31 = arith.constant 0 : index
    %c0_32 = arith.constant 0 : index
    %25 = vector.load %arg8[%c0_30, %c0_31, %c0_32] : memref<2x1x32xf32, #tpu.memory_space<vmem>>, vector<1x1x32xf32>
    %26 = vector.shape_cast %25 : vector<1x1x32xf32> to vector<1x32xf32>
    %27 = vector.broadcast %26 : vector<1x32xf32> to vector<16x32xf32>
    %28 = arith.addf %24, %27 : vector<16x32xf32>
    %29 = vector.shape_cast %14 : vector<8x32xf32> to vector<1x8x32xf32>
    %30 = vector.shape_cast %21 : vector<16x32xf32> to vector<1x16x32xf32>
    %31 = vector.shape_cast %28 : vector<16x32xf32> to vector<1x16x32xf32>
    %c0_33 = arith.constant 0 : index
    %c0_34 = arith.constant 0 : index
    %c0_35 = arith.constant 0 : index
    %32 = vector.load %arg9[%c0_33, %c0_34, %c0_35] : memref<2x32x32xf32, #tpu.memory_space<vmem>>, vector<1x32x32xf32>
    %33 = vector.shape_cast %32 : vector<1x32x32xf32> to vector<32x32xf32>
    %cst_36 = arith.constant 0.000000e+00 : f32
    %34 = vector.broadcast %cst_36 : f32 to vector<8x32xf32>
    %c0_37 = arith.constant 0 : index
    %c0_38 = arith.constant 0 : index
    %c0_39 = arith.constant 0 : index
    %35 = vector.load %arg10[%c0_37, %c0_38, %c0_39] : memref<2x1x32xf32, #tpu.memory_space<vmem>>, vector<1x1x32xf32>
    %36 = vector.shape_cast %35 : vector<1x1x32xf32> to vector<1x32xf32>
    %37 = vector.broadcast %36 : vector<1x32xf32> to vector<8x32xf32>
    %38 = arith.addf %34, %37 : vector<8x32xf32>
    %39 = vector.extract_strided_slice %29 {offsets = [0, 0, 0], sizes = [1, 8, 8], strides = [1, 1, 1]} : vector<1x8x32xf32> to vector<1x8x8xf32>
    %40 = vector.extract_strided_slice %30 {offsets = [0, 0, 0], sizes = [1, 16, 8], strides = [1, 1, 1]} : vector<1x16x32xf32> to vector<1x16x8xf32>
    %41 = vector.extract_strided_slice %31 {offsets = [0, 0, 0], sizes = [1, 16, 8], strides = [1, 1, 1]} : vector<1x16x32xf32> to vector<1x16x8xf32>
    "tpu.trace_start"() <{level = 10 : i32, message = "bqd,bkd->bqk"}> : () -> ()
    %cst_40 = arith.constant dense<0.000000e+00> : vector<1x8x16xf32>
    %42 = tpu.matmul %39, %40, %cst_40 {dimension_numbers = #tpu.dot_dimension_numbers<[2], [2], [1], [1], [0, 0, 0, 1, 1, 1], [0], [0]>} : vector<1x8x8xf32>, vector<1x16x8xf32>, vector<1x8x16xf32> -> vector<1x8x16xf32>
    "tpu.trace_stop"() : () -> ()
    %cst_41 = arith.constant dense<0xFF800000> : vector<1x8xf32>
    %43 = vector.multi_reduction <maximumf>, %42, %cst_41 [2] : vector<1x8x16xf32> to vector<1x8xf32>
    %44 = vector.shape_cast %43 : vector<1x8xf32> to vector<1x8x1xf32>
    %45 = vector.broadcast %44 : vector<1x8x1xf32> to vector<1x8x16xf32>
    %46 = arith.subf %42, %45 : vector<1x8x16xf32>
    %47 = math.exp %46 : vector<1x8x16xf32>
    %cst_42 = arith.constant dense<0.000000e+00> : vector<1x8xf32>
    %48 = vector.multi_reduction <add>, %47, %cst_42 [2] : vector<1x8x16xf32> to vector<1x8xf32>
    %49 = vector.shape_cast %48 : vector<1x8xf32> to vector<1x8x1xf32>
    %50 = tpu.reciprocal %49 {approx = true} : vector<1x8x1xf32> -> vector<1x8x1xf32>
    "tpu.trace_start"() <{level = 10 : i32, message = "bqk,bkd->bqd"}> : () -> ()
    %cst_43 = arith.constant dense<0.000000e+00> : vector<1x8x8xf32>
    %51 = tpu.matmul %47, %41, %cst_43 {dimension_numbers = #tpu.dot_dimension_numbers<[2], [1], [1], [2], [0, 0, 0, 1, 1, 2], [0], [0]>} : vector<1x8x16xf32>, vector<1x16x8xf32>, vector<1x8x8xf32> -> vector<1x8x8xf32>
    "tpu.trace_stop"() : () -> ()
    %52 = vector.broadcast %50 : vector<1x8x1xf32> to vector<1x8x8xf32>
    %53 = arith.mulf %51, %52 : vector<1x8x8xf32>
    %54 = vector.shape_cast %53 : vector<1x8x8xf32> to vector<8x8xf32>
    %55 = vector.extract_strided_slice %33 {offsets = [0, 0], sizes = [8, 32], strides = [1, 1]} : vector<32x32xf32> to vector<8x32xf32>
    %cst_44 = arith.constant dense<0.000000e+00> : vector<8x32xf32>
    %56 = tpu.matmul %54, %55, %cst_44 {dimension_numbers = #tpu.dot_dimension_numbers<[1], [0], [0], [1], [0, 0, 1, 1], [], []>} : vector<8x8xf32>, vector<8x32xf32>, vector<8x32xf32> -> vector<8x32xf32>
    %57 = arith.addf %38, %56 : vector<8x32xf32>
    %58 = vector.extract_strided_slice %29 {offsets = [0, 0, 8], sizes = [1, 8, 8], strides = [1, 1, 1]} : vector<1x8x32xf32> to vector<1x8x8xf32>
    %59 = vector.extract_strided_slice %30 {offsets = [0, 0, 8], sizes = [1, 16, 8], strides = [1, 1, 1]} : vector<1x16x32xf32> to vector<1x16x8xf32>
    %60 = vector.extract_strided_slice %31 {offsets = [0, 0, 8], sizes = [1, 16, 8], strides = [1, 1, 1]} : vector<1x16x32xf32> to vector<1x16x8xf32>
    "tpu.trace_start"() <{level = 10 : i32, message = "bqd,bkd->bqk"}> : () -> ()
    %cst_45 = arith.constant dense<0.000000e+00> : vector<1x8x16xf32>
    %61 = tpu.matmul %58, %59, %cst_45 {dimension_numbers = #tpu.dot_dimension_numbers<[2], [2], [1], [1], [0, 0, 0, 1, 1, 1], [0], [0]>} : vector<1x8x8xf32>, vector<1x16x8xf32>, vector<1x8x16xf32> -> vector<1x8x16xf32>
    "tpu.trace_stop"() : () -> ()
    %cst_46 = arith.constant dense<0xFF800000> : vector<1x8xf32>
    %62 = vector.multi_reduction <maximumf>, %61, %cst_46 [2] : vector<1x8x16xf32> to vector<1x8xf32>
    %63 = vector.shape_cast %62 : vector<1x8xf32> to vector<1x8x1xf32>
    %64 = vector.broadcast %63 : vector<1x8x1xf32> to vector<1x8x16xf32>
    %65 = arith.subf %61, %64 : vector<1x8x16xf32>
    %66 = math.exp %65 : vector<1x8x16xf32>
    %cst_47 = arith.constant dense<0.000000e+00> : vector<1x8xf32>
    %67 = vector.multi_reduction <add>, %66, %cst_47 [2] : vector<1x8x16xf32> to vector<1x8xf32>
    %68 = vector.shape_cast %67 : vector<1x8xf32> to vector<1x8x1xf32>
    %69 = tpu.reciprocal %68 {approx = true} : vector<1x8x1xf32> -> vector<1x8x1xf32>
    "tpu.trace_start"() <{level = 10 : i32, message = "bqk,bkd->bqd"}> : () -> ()
    %cst_48 = arith.constant dense<0.000000e+00> : vector<1x8x8xf32>
    %70 = tpu.matmul %66, %60, %cst_48 {dimension_numbers = #tpu.dot_dimension_numbers<[2], [1], [1], [2], [0, 0, 0, 1, 1, 2], [0], [0]>} : vector<1x8x16xf32>, vector<1x16x8xf32>, vector<1x8x8xf32> -> vector<1x8x8xf32>
    "tpu.trace_stop"() : () -> ()
    %71 = vector.broadcast %69 : vector<1x8x1xf32> to vector<1x8x8xf32>
    %72 = arith.mulf %70, %71 : vector<1x8x8xf32>
    %73 = vector.shape_cast %72 : vector<1x8x8xf32> to vector<8x8xf32>
    %74 = vector.extract_strided_slice %33 {offsets = [8, 0], sizes = [8, 32], strides = [1, 1]} : vector<32x32xf32> to vector<8x32xf32>
    %cst_49 = arith.constant dense<0.000000e+00> : vector<8x32xf32>
    %75 = tpu.matmul %73, %74, %cst_49 {dimension_numbers = #tpu.dot_dimension_numbers<[1], [0], [0], [1], [0, 0, 1, 1], [], []>} : vector<8x8xf32>, vector<8x32xf32>, vector<8x32xf32> -> vector<8x32xf32>
    %76 = arith.addf %57, %75 : vector<8x32xf32>
    %77 = vector.extract_strided_slice %29 {offsets = [0, 0, 16], sizes = [1, 8, 8], strides = [1, 1, 1]} : vector<1x8x32xf32> to vector<1x8x8xf32>
    %78 = vector.extract_strided_slice %30 {offsets = [0, 0, 16], sizes = [1, 16, 8], strides = [1, 1, 1]} : vector<1x16x32xf32> to vector<1x16x8xf32>
    %79 = vector.extract_strided_slice %31 {offsets = [0, 0, 16], sizes = [1, 16, 8], strides = [1, 1, 1]} : vector<1x16x32xf32> to vector<1x16x8xf32>
    "tpu.trace_start"() <{level = 10 : i32, message = "bqd,bkd->bqk"}> : () -> ()
    %cst_50 = arith.constant dense<0.000000e+00> : vector<1x8x16xf32>
    %80 = tpu.matmul %77, %78, %cst_50 {dimension_numbers = #tpu.dot_dimension_numbers<[2], [2], [1], [1], [0, 0, 0, 1, 1, 1], [0], [0]>} : vector<1x8x8xf32>, vector<1x16x8xf32>, vector<1x8x16xf32> -> vector<1x8x16xf32>
    "tpu.trace_stop"() : () -> ()
    %cst_51 = arith.constant dense<0xFF800000> : vector<1x8xf32>
    %81 = vector.multi_reduction <maximumf>, %80, %cst_51 [2] : vector<1x8x16xf32> to vector<1x8xf32>
    %82 = vector.shape_cast %81 : vector<1x8xf32> to vector<1x8x1xf32>
    %83 = vector.broadcast %82 : vector<1x8x1xf32> to vector<1x8x16xf32>
    %84 = arith.subf %80, %83 : vector<1x8x16xf32>
    %85 = math.exp %84 : vector<1x8x16xf32>
    %cst_52 = arith.constant dense<0.000000e+00> : vector<1x8xf32>
    %86 = vector.multi_reduction <add>, %85, %cst_52 [2] : vector<1x8x16xf32> to vector<1x8xf32>
    %87 = vector.shape_cast %86 : vector<1x8xf32> to vector<1x8x1xf32>
    %88 = tpu.reciprocal %87 {approx = true} : vector<1x8x1xf32> -> vector<1x8x1xf32>
    "tpu.trace_start"() <{level = 10 : i32, message = "bqk,bkd->bqd"}> : () -> ()
    %cst_53 = arith.constant dense<0.000000e+00> : vector<1x8x8xf32>
    %89 = tpu.matmul %85, %79, %cst_53 {dimension_numbers = #tpu.dot_dimension_numbers<[2], [1], [1], [2], [0, 0, 0, 1, 1, 2], [0], [0]>} : vector<1x8x16xf32>, vector<1x16x8xf32>, vector<1x8x8xf32> -> vector<1x8x8xf32>
    "tpu.trace_stop"() : () -> ()
    %90 = vector.broadcast %88 : vector<1x8x1xf32> to vector<1x8x8xf32>
    %91 = arith.mulf %89, %90 : vector<1x8x8xf32>
    %92 = vector.shape_cast %91 : vector<1x8x8xf32> to vector<8x8xf32>
    %93 = vector.extract_strided_slice %33 {offsets = [16, 0], sizes = [8, 32], strides = [1, 1]} : vector<32x32xf32> to vector<8x32xf32>
    %cst_54 = arith.constant dense<0.000000e+00> : vector<8x32xf32>
    %94 = tpu.matmul %92, %93, %cst_54 {dimension_numbers = #tpu.dot_dimension_numbers<[1], [0], [0], [1], [0, 0, 1, 1], [], []>} : vector<8x8xf32>, vector<8x32xf32>, vector<8x32xf32> -> vector<8x32xf32>
    %95 = arith.addf %76, %94 : vector<8x32xf32>
    %96 = vector.extract_strided_slice %29 {offsets = [0, 0, 24], sizes = [1, 8, 8], strides = [1, 1, 1]} : vector<1x8x32xf32> to vector<1x8x8xf32>
    %97 = vector.extract_strided_slice %30 {offsets = [0, 0, 24], sizes = [1, 16, 8], strides = [1, 1, 1]} : vector<1x16x32xf32> to vector<1x16x8xf32>
    %98 = vector.extract_strided_slice %31 {offsets = [0, 0, 24], sizes = [1, 16, 8], strides = [1, 1, 1]} : vector<1x16x32xf32> to vector<1x16x8xf32>
    "tpu.trace_start"() <{level = 10 : i32, message = "bqd,bkd->bqk"}> : () -> ()
    %cst_55 = arith.constant dense<0.000000e+00> : vector<1x8x16xf32>
    %99 = tpu.matmul %96, %97, %cst_55 {dimension_numbers = #tpu.dot_dimension_numbers<[2], [2], [1], [1], [0, 0, 0, 1, 1, 1], [0], [0]>} : vector<1x8x8xf32>, vector<1x16x8xf32>, vector<1x8x16xf32> -> vector<1x8x16xf32>
    "tpu.trace_stop"() : () -> ()
    %cst_56 = arith.constant dense<0xFF800000> : vector<1x8xf32>
    %100 = vector.multi_reduction <maximumf>, %99, %cst_56 [2] : vector<1x8x16xf32> to vector<1x8xf32>
    %101 = vector.shape_cast %100 : vector<1x8xf32> to vector<1x8x1xf32>
    %102 = vector.broadcast %101 : vector<1x8x1xf32> to vector<1x8x16xf32>
    %103 = arith.subf %99, %102 : vector<1x8x16xf32>
    %104 = math.exp %103 : vector<1x8x16xf32>
    %cst_57 = arith.constant dense<0.000000e+00> : vector<1x8xf32>
    %105 = vector.multi_reduction <add>, %104, %cst_57 [2] : vector<1x8x16xf32> to vector<1x8xf32>
    %106 = vector.shape_cast %105 : vector<1x8xf32> to vector<1x8x1xf32>
    %107 = tpu.reciprocal %106 {approx = true} : vector<1x8x1xf32> -> vector<1x8x1xf32>
    "tpu.trace_start"() <{level = 10 : i32, message = "bqk,bkd->bqd"}> : () -> ()
    %cst_58 = arith.constant dense<0.000000e+00> : vector<1x8x8xf32>
    %108 = tpu.matmul %104, %98, %cst_58 {dimension_numbers = #tpu.dot_dimension_numbers<[2], [1], [1], [2], [0, 0, 0, 1, 1, 2], [0], [0]>} : vector<1x8x16xf32>, vector<1x16x8xf32>, vector<1x8x8xf32> -> vector<1x8x8xf32>
    "tpu.trace_stop"() : () -> ()
    %109 = vector.broadcast %107 : vector<1x8x1xf32> to vector<1x8x8xf32>
    %110 = arith.mulf %108, %109 : vector<1x8x8xf32>
    %111 = vector.shape_cast %110 : vector<1x8x8xf32> to vector<8x8xf32>
    %112 = vector.extract_strided_slice %33 {offsets = [24, 0], sizes = [8, 32], strides = [1, 1]} : vector<32x32xf32> to vector<8x32xf32>
    %cst_59 = arith.constant dense<0.000000e+00> : vector<8x32xf32>
    %113 = tpu.matmul %111, %112, %cst_59 {dimension_numbers = #tpu.dot_dimension_numbers<[1], [0], [0], [1], [0, 0, 1, 1], [], []>} : vector<8x8xf32>, vector<8x32xf32>, vector<8x32xf32> -> vector<8x32xf32>
    %114 = arith.addf %95, %113 : vector<8x32xf32>
    %c0_60 = arith.constant 0 : index
    %115 = memref.load %arg19[%c0_60] : memref<2xf32, #tpu.memory_space<smem>>
    %116 = vector.broadcast %115 : f32 to vector<8x32xf32>
    %117 = arith.mulf %116, %114 : vector<8x32xf32>
    %118 = arith.addf %3, %117 : vector<8x32xf32>
    %c0_61 = arith.constant 0 : index
    %c0_62 = arith.constant 0 : index
    %c0_63 = arith.constant 0 : index
    %119 = vector.load %arg11[%c0_61, %c0_62, %c0_63] : memref<2x1x32xf32, #tpu.memory_space<vmem>>, vector<1x1x32xf32>
    %120 = vector.shape_cast %119 : vector<1x1x32xf32> to vector<1x32xf32>
    %c0_64 = arith.constant 0 : index
    %c0_65 = arith.constant 0 : index
    %c0_66 = arith.constant 0 : index
    %121 = vector.load %arg12[%c0_64, %c0_65, %c0_66] : memref<2x1x32xf32, #tpu.memory_space<vmem>>, vector<1x1x32xf32>
    %122 = vector.shape_cast %121 : vector<1x1x32xf32> to vector<1x32xf32>
    %cst_67 = arith.constant dense<0.000000e+00> : vector<8xf32>
    %123 = vector.multi_reduction <add>, %118, %cst_67 [1] : vector<8x32xf32> to vector<8xf32>
    %124 = vector.shape_cast %123 : vector<8xf32> to vector<8x1xf32>
    %cst_68 = arith.constant 3.200000e+01 : f32
    %125 = vector.broadcast %cst_68 : f32 to vector<8x1xf32>
    %126 = arith.divf %124, %125 : vector<8x1xf32>
    %127 = vector.broadcast %126 : vector<8x1xf32> to vector<8x32xf32>
    %128 = arith.subf %118, %127 : vector<8x32xf32>
    %129 = arith.mulf %128, %128 : vector<8x32xf32>
    %cst_69 = arith.constant dense<0.000000e+00> : vector<8xf32>
    %130 = vector.multi_reduction <add>, %129, %cst_69 [1] : vector<8x32xf32> to vector<8xf32>
    %131 = vector.shape_cast %130 : vector<8xf32> to vector<8x1xf32>
    %cst_70 = arith.constant 3.200000e+01 : f32
    %132 = vector.broadcast %cst_70 : f32 to vector<8x1xf32>
    %133 = arith.divf %131, %132 : vector<8x1xf32>
    %134 = vector.broadcast %126 : vector<8x1xf32> to vector<8x32xf32>
    %135 = arith.subf %118, %134 : vector<8x32xf32>
    %cst_71 = arith.constant 9.99999974E-6 : f32
    %136 = vector.broadcast %cst_71 : f32 to vector<8x1xf32>
    %137 = arith.addf %133, %136 : vector<8x1xf32>
    %138 = math.rsqrt %137 : vector<8x1xf32>
    %139 = vector.broadcast %138 : vector<8x1xf32> to vector<8x32xf32>
    %140 = arith.mulf %135, %139 : vector<8x32xf32>
    %141 = vector.broadcast %120 : vector<1x32xf32> to vector<8x32xf32>
    %142 = arith.mulf %140, %141 : vector<8x32xf32>
    %143 = vector.broadcast %122 : vector<1x32xf32> to vector<8x32xf32>
    %144 = arith.addf %142, %143 : vector<8x32xf32>
    %c0_72 = arith.constant 0 : index
    %c0_73 = arith.constant 0 : index
    %c0_74 = arith.constant 0 : index
    %145 = vector.load %arg13[%c0_72, %c0_73, %c0_74] : memref<2x32x64xf32, #tpu.memory_space<vmem>>, vector<1x32x64xf32>
    %146 = vector.shape_cast %145 : vector<1x32x64xf32> to vector<32x64xf32>
    %cst_75 = arith.constant dense<0.000000e+00> : vector<8x64xf32>
    %147 = tpu.matmul %144, %146, %cst_75 {dimension_numbers = #tpu.dot_dimension_numbers<[1], [0], [0], [1], [0, 0, 1, 1], [], []>} : vector<8x32xf32>, vector<32x64xf32>, vector<8x64xf32> -> vector<8x64xf32>
    %c0_76 = arith.constant 0 : index
    %c0_77 = arith.constant 0 : index
    %c0_78 = arith.constant 0 : index
    %148 = vector.load %arg14[%c0_76, %c0_77, %c0_78] : memref<2x1x64xf32, #tpu.memory_space<vmem>>, vector<1x1x64xf32>
    %149 = vector.shape_cast %148 : vector<1x1x64xf32> to vector<1x64xf32>
    %150 = vector.broadcast %149 : vector<1x64xf32> to vector<8x64xf32>
    %151 = arith.addf %147, %150 : vector<8x64xf32>
    %cst_79 = arith.constant 5.000000e-01 : f32
    %152 = vector.broadcast %cst_79 : f32 to vector<8x64xf32>
    %153 = arith.mulf %152, %151 : vector<8x64xf32>
    %cst_80 = arith.constant 4.471500e-02 : f32
    %154 = vector.broadcast %cst_80 : f32 to vector<8x64xf32>
    %155 = arith.mulf %154, %151 : vector<8x64xf32>
    %156 = arith.mulf %155, %151 : vector<8x64xf32>
    %157 = arith.mulf %156, %151 : vector<8x64xf32>
    %158 = arith.addf %151, %157 : vector<8x64xf32>
    %cst_81 = arith.constant 0.797884583 : f32
    %159 = vector.broadcast %cst_81 : f32 to vector<8x64xf32>
    %160 = arith.mulf %159, %158 : vector<8x64xf32>
    %161 = math.tanh %160 : vector<8x64xf32>
    %cst_82 = arith.constant 1.000000e+00 : f32
    %162 = vector.broadcast %cst_82 : f32 to vector<8x64xf32>
    %163 = arith.addf %162, %161 : vector<8x64xf32>
    %164 = arith.mulf %153, %163 : vector<8x64xf32>
    %c0_83 = arith.constant 0 : index
    %c0_84 = arith.constant 0 : index
    %c0_85 = arith.constant 0 : index
    %165 = vector.load %arg15[%c0_83, %c0_84, %c0_85] : memref<2x64x32xf32, #tpu.memory_space<vmem>>, vector<1x64x32xf32>
    %166 = vector.shape_cast %165 : vector<1x64x32xf32> to vector<64x32xf32>
    %cst_86 = arith.constant dense<0.000000e+00> : vector<8x32xf32>
    %167 = tpu.matmul %164, %166, %cst_86 {dimension_numbers = #tpu.dot_dimension_numbers<[1], [0], [0], [1], [0, 0, 1, 1], [], []>} : vector<8x64xf32>, vector<64x32xf32>, vector<8x32xf32> -> vector<8x32xf32>
    %c0_87 = arith.constant 0 : index
    %c0_88 = arith.constant 0 : index
    %c0_89 = arith.constant 0 : index
    %168 = vector.load %arg16[%c0_87, %c0_88, %c0_89] : memref<2x1x32xf32, #tpu.memory_space<vmem>>, vector<1x1x32xf32>
    %169 = vector.shape_cast %168 : vector<1x1x32xf32> to vector<1x32xf32>
    %170 = vector.broadcast %169 : vector<1x32xf32> to vector<8x32xf32>
    %171 = arith.addf %167, %170 : vector<8x32xf32>
    %c0_90 = arith.constant 0 : index
    %172 = memref.load %arg20[%c0_90] : memref<2xf32, #tpu.memory_space<smem>>
    %173 = vector.broadcast %172 : f32 to vector<8x32xf32>
    %174 = arith.mulf %173, %171 : vector<8x32xf32>
    %175 = arith.addf %144, %174 : vector<8x32xf32>
    %c0_91 = arith.constant 0 : index
    %c0_92 = arith.constant 0 : index
    %c0_93 = arith.constant 0 : index
    %176 = vector.load %arg17[%c0_91, %c0_92, %c0_93] : memref<2x1x32xf32, #tpu.memory_space<vmem>>, vector<1x1x32xf32>
    %177 = vector.shape_cast %176 : vector<1x1x32xf32> to vector<1x32xf32>
    %c0_94 = arith.constant 0 : index
    %c0_95 = arith.constant 0 : index
    %c0_96 = arith.constant 0 : index
    %178 = vector.load %arg18[%c0_94, %c0_95, %c0_96] : memref<2x1x32xf32, #tpu.memory_space<vmem>>, vector<1x1x32xf32>
    %179 = vector.shape_cast %178 : vector<1x1x32xf32> to vector<1x32xf32>
    %cst_97 = arith.constant dense<0.000000e+00> : vector<8xf32>
    %180 = vector.multi_reduction <add>, %175, %cst_97 [1] : vector<8x32xf32> to vector<8xf32>
    %181 = vector.shape_cast %180 : vector<8xf32> to vector<8x1xf32>
    %cst_98 = arith.constant 3.200000e+01 : f32
    %182 = vector.broadcast %cst_98 : f32 to vector<8x1xf32>
    %183 = arith.divf %181, %182 : vector<8x1xf32>
    %184 = vector.broadcast %183 : vector<8x1xf32> to vector<8x32xf32>
    %185 = arith.subf %175, %184 : vector<8x32xf32>
    %186 = arith.mulf %185, %185 : vector<8x32xf32>
    %cst_99 = arith.constant dense<0.000000e+00> : vector<8xf32>
    %187 = vector.multi_reduction <add>, %186, %cst_99 [1] : vector<8x32xf32> to vector<8xf32>
    %188 = vector.shape_cast %187 : vector<8xf32> to vector<8x1xf32>
    %cst_100 = arith.constant 3.200000e+01 : f32
    %189 = vector.broadcast %cst_100 : f32 to vector<8x1xf32>
    %190 = arith.divf %188, %189 : vector<8x1xf32>
    %191 = vector.broadcast %183 : vector<8x1xf32> to vector<8x32xf32>
    %192 = arith.subf %175, %191 : vector<8x32xf32>
    %cst_101 = arith.constant 9.99999974E-6 : f32
    %193 = vector.broadcast %cst_101 : f32 to vector<8x1xf32>
    %194 = arith.addf %190, %193 : vector<8x1xf32>
    %195 = math.rsqrt %194 : vector<8x1xf32>
    %196 = vector.broadcast %195 : vector<8x1xf32> to vector<8x32xf32>
    %197 = arith.mulf %192, %196 : vector<8x32xf32>
    %198 = vector.broadcast %177 : vector<1x32xf32> to vector<8x32xf32>
    %199 = arith.mulf %197, %198 : vector<8x32xf32>
    %200 = vector.broadcast %179 : vector<1x32xf32> to vector<8x32xf32>
    %201 = arith.addf %199, %200 : vector<8x32xf32>
    %202 = vector.shape_cast %201 : vector<8x32xf32> to vector<1x8x32xf32>
    %c0_102 = arith.constant 0 : index
    %c8_103 = arith.constant 8 : index
    %c0_104 = arith.constant 0 : index
    %203 = vector.load %arg22[%c0_102, %c8_103, %c0_104] : memref<1x16x32xf32, #tpu.memory_space<vmem>>, vector<1x8x32xf32>
    tpu.vector_store %arg22[%c0_102, %c8_103, %c0_104], %202 {strides = array<i32>} : memref<1x16x32xf32, #tpu.memory_space<vmem>>, vector<1x8x32xf32>,
    %c0_105 = arith.constant 0 : index
    %c0_106 = arith.constant 0 : index
    %c0_107 = arith.constant 0 : index
    %204 = vector.load %arg22[%c0_105, %c0_106, %c0_107] : memref<1x16x32xf32, #tpu.memory_space<vmem>>, vector<1x16x32xf32>
    %205 = vector.shape_cast %204 : vector<1x16x32xf32> to vector<16x32xf32>
    %c1 = arith.constant 1 : index
    %c0_108 = arith.constant 0 : index
    %c0_109 = arith.constant 0 : index
    %206 = vector.load %arg3[%c1, %c0_108, %c0_109] : memref<2x32x32xf32, #tpu.memory_space<vmem>>, vector<1x32x32xf32>
    %207 = vector.shape_cast %206 : vector<1x32x32xf32> to vector<32x32xf32>
    %cst_110 = arith.constant dense<0.000000e+00> : vector<8x32xf32>
    %208 = tpu.matmul %201, %207, %cst_110 {dimension_numbers = #tpu.dot_dimension_numbers<[1], [0], [0], [1], [0, 0, 1, 1], [], []>} : vector<8x32xf32>, vector<32x32xf32>, vector<8x32xf32> -> vector<8x32xf32>
    %c1_111 = arith.constant 1 : index
    %c0_112 = arith.constant 0 : index
    %c0_113 = arith.constant 0 : index
    %209 = vector.load %arg4[%c1_111, %c0_112, %c0_113] : memref<2x1x32xf32, #tpu.memory_space<vmem>>, vector<1x1x32xf32>
    %210 = vector.shape_cast %209 : vector<1x1x32xf32> to vector<1x32xf32>
    %211 = vector.broadcast %210 : vector<1x32xf32> to vector<8x32xf32>
    %212 = arith.addf %208, %211 : vector<8x32xf32>
    %c1_114 = arith.constant 1 : index
    %c0_115 = arith.constant 0 : index
    %c0_116 = arith.constant 0 : index
    %213 = vector.load %arg5[%c1_114, %c0_115, %c0_116] : memref<2x32x32xf32, #tpu.memory_space<vmem>>, vector<1x32x32xf32>
    %214 = vector.shape_cast %213 : vector<1x32x32xf32> to vector<32x32xf32>
    %cst_117 = arith.constant dense<0.000000e+00> : vector<16x32xf32>
    %215 = tpu.matmul %205, %214, %cst_117 {dimension_numbers = #tpu.dot_dimension_numbers<[1], [0], [0], [1], [0, 0, 1, 1], [], []>} : vector<16x32xf32>, vector<32x32xf32>, vector<16x32xf32> -> vector<16x32xf32>
    %c1_118 = arith.constant 1 : index
    %c0_119 = arith.constant 0 : index
    %c0_120 = arith.constant 0 : index
    %216 = vector.load %arg6[%c1_118, %c0_119, %c0_120] : memref<2x1x32xf32, #tpu.memory_space<vmem>>, vector<1x1x32xf32>
    %217 = vector.shape_cast %216 : vector<1x1x32xf32> to vector<1x32xf32>
    %218 = vector.broadcast %217 : vector<1x32xf32> to vector<16x32xf32>
    %219 = arith.addf %215, %218 : vector<16x32xf32>
    %c1_121 = arith.constant 1 : index
    %c0_122 = arith.constant 0 : index
    %c0_123 = arith.constant 0 : index
    %220 = vector.load %arg7[%c1_121, %c0_122, %c0_123] : memref<2x32x32xf32, #tpu.memory_space<vmem>>, vector<1x32x32xf32>
    %221 = vector.shape_cast %220 : vector<1x32x32xf32> to vector<32x32xf32>
    %cst_124 = arith.constant dense<0.000000e+00> : vector<16x32xf32>
    %222 = tpu.matmul %205, %221, %cst_124 {dimension_numbers = #tpu.dot_dimension_numbers<[1], [0], [0], [1], [0, 0, 1, 1], [], []>} : vector<16x32xf32>, vector<32x32xf32>, vector<16x32xf32> -> vector<16x32xf32>
    %c1_125 = arith.constant 1 : index
    %c0_126 = arith.constant 0 : index
    %c0_127 = arith.constant 0 : index
    %223 = vector.load %arg8[%c1_125, %c0_126, %c0_127] : memref<2x1x32xf32, #tpu.memory_space<vmem>>, vector<1x1x32xf32>
    %224 = vector.shape_cast %223 : vector<1x1x32xf32> to vector<1x32xf32>
    %225 = vector.broadcast %224 : vector<1x32xf32> to vector<16x32xf32>
    %226 = arith.addf %222, %225 : vector<16x32xf32>
    %227 = vector.shape_cast %212 : vector<8x32xf32> to vector<1x8x32xf32>
    %228 = vector.shape_cast %219 : vector<16x32xf32> to vector<1x16x32xf32>
    %229 = vector.shape_cast %226 : vector<16x32xf32> to vector<1x16x32xf32>
    %c1_128 = arith.constant 1 : index
    %c0_129 = arith.constant 0 : index
    %c0_130 = arith.constant 0 : index
    %230 = vector.load %arg9[%c1_128, %c0_129, %c0_130] : memref<2x32x32xf32, #tpu.memory_space<vmem>>, vector<1x32x32xf32>
    %231 = vector.shape_cast %230 : vector<1x32x32xf32> to vector<32x32xf32>
    %cst_131 = arith.constant 0.000000e+00 : f32
    %232 = vector.broadcast %cst_131 : f32 to vector<8x32xf32>
    %c1_132 = arith.constant 1 : index
    %c0_133 = arith.constant 0 : index
    %c0_134 = arith.constant 0 : index
    %233 = vector.load %arg10[%c1_132, %c0_133, %c0_134] : memref<2x1x32xf32, #tpu.memory_space<vmem>>, vector<1x1x32xf32>
    %234 = vector.shape_cast %233 : vector<1x1x32xf32> to vector<1x32xf32>
    %235 = vector.broadcast %234 : vector<1x32xf32> to vector<8x32xf32>
    %236 = arith.addf %232, %235 : vector<8x32xf32>
    %237 = vector.extract_strided_slice %227 {offsets = [0, 0, 0], sizes = [1, 8, 8], strides = [1, 1, 1]} : vector<1x8x32xf32> to vector<1x8x8xf32>
    %238 = vector.extract_strided_slice %228 {offsets = [0, 0, 0], sizes = [1, 16, 8], strides = [1, 1, 1]} : vector<1x16x32xf32> to vector<1x16x8xf32>
    %239 = vector.extract_strided_slice %229 {offsets = [0, 0, 0], sizes = [1, 16, 8], strides = [1, 1, 1]} : vector<1x16x32xf32> to vector<1x16x8xf32>
    "tpu.trace_start"() <{level = 10 : i32, message = "bqd,bkd->bqk"}> : () -> ()
    %cst_135 = arith.constant dense<0.000000e+00> : vector<1x8x16xf32>
    %240 = tpu.matmul %237, %238, %cst_135 {dimension_numbers = #tpu.dot_dimension_numbers<[2], [2], [1], [1], [0, 0, 0, 1, 1, 1], [0], [0]>} : vector<1x8x8xf32>, vector<1x16x8xf32>, vector<1x8x16xf32> -> vector<1x8x16xf32>
    "tpu.trace_stop"() : () -> ()
    %cst_136 = arith.constant dense<0xFF800000> : vector<1x8xf32>
    %241 = vector.multi_reduction <maximumf>, %240, %cst_136 [2] : vector<1x8x16xf32> to vector<1x8xf32>
    %242 = vector.shape_cast %241 : vector<1x8xf32> to vector<1x8x1xf32>
    %243 = vector.broadcast %242 : vector<1x8x1xf32> to vector<1x8x16xf32>
    %244 = arith.subf %240, %243 : vector<1x8x16xf32>
    %245 = math.exp %244 : vector<1x8x16xf32>
    %cst_137 = arith.constant dense<0.000000e+00> : vector<1x8xf32>
    %246 = vector.multi_reduction <add>, %245, %cst_137 [2] : vector<1x8x16xf32> to vector<1x8xf32>
    %247 = vector.shape_cast %246 : vector<1x8xf32> to vector<1x8x1xf32>
    %248 = tpu.reciprocal %247 {approx = true} : vector<1x8x1xf32> -> vector<1x8x1xf32>
    "tpu.trace_start"() <{level = 10 : i32, message = "bqk,bkd->bqd"}> : () -> ()
    %cst_138 = arith.constant dense<0.000000e+00> : vector<1x8x8xf32>
    %249 = tpu.matmul %245, %239, %cst_138 {dimension_numbers = #tpu.dot_dimension_numbers<[2], [1], [1], [2], [0, 0, 0, 1, 1, 2], [0], [0]>} : vector<1x8x16xf32>, vector<1x16x8xf32>, vector<1x8x8xf32> -> vector<1x8x8xf32>
    "tpu.trace_stop"() : () -> ()
    %250 = vector.broadcast %248 : vector<1x8x1xf32> to vector<1x8x8xf32>
    %251 = arith.mulf %249, %250 : vector<1x8x8xf32>
    %252 = vector.shape_cast %251 : vector<1x8x8xf32> to vector<8x8xf32>
    %253 = vector.extract_strided_slice %231 {offsets = [0, 0], sizes = [8, 32], strides = [1, 1]} : vector<32x32xf32> to vector<8x32xf32>
    %cst_139 = arith.constant dense<0.000000e+00> : vector<8x32xf32>
    %254 = tpu.matmul %252, %253, %cst_139 {dimension_numbers = #tpu.dot_dimension_numbers<[1], [0], [0], [1], [0, 0, 1, 1], [], []>} : vector<8x8xf32>, vector<8x32xf32>, vector<8x32xf32> -> vector<8x32xf32>
    %255 = arith.addf %236, %254 : vector<8x32xf32>
    %256 = vector.extract_strided_slice %227 {offsets = [0, 0, 8], sizes = [1, 8, 8], strides = [1, 1, 1]} : vector<1x8x32xf32> to vector<1x8x8xf32>
    %257 = vector.extract_strided_slice %228 {offsets = [0, 0, 8], sizes = [1, 16, 8], strides = [1, 1, 1]} : vector<1x16x32xf32> to vector<1x16x8xf32>
    %258 = vector.extract_strided_slice %229 {offsets = [0, 0, 8], sizes = [1, 16, 8], strides = [1, 1, 1]} : vector<1x16x32xf32> to vector<1x16x8xf32>
    "tpu.trace_start"() <{level = 10 : i32, message = "bqd,bkd->bqk"}> : () -> ()
    %cst_140 = arith.constant dense<0.000000e+00> : vector<1x8x16xf32>
    %259 = tpu.matmul %256, %257, %cst_140 {dimension_numbers = #tpu.dot_dimension_numbers<[2], [2], [1], [1], [0, 0, 0, 1, 1, 1], [0], [0]>} : vector<1x8x8xf32>, vector<1x16x8xf32>, vector<1x8x16xf32> -> vector<1x8x16xf32>
    "tpu.trace_stop"() : () -> ()
    %cst_141 = arith.constant dense<0xFF800000> : vector<1x8xf32>
    %260 = vector.multi_reduction <maximumf>, %259, %cst_141 [2] : vector<1x8x16xf32> to vector<1x8xf32>
    %261 = vector.shape_cast %260 : vector<1x8xf32> to vector<1x8x1xf32>
    %262 = vector.broadcast %261 : vector<1x8x1xf32> to vector<1x8x16xf32>
    %263 = arith.subf %259, %262 : vector<1x8x16xf32>
    %264 = math.exp %263 : vector<1x8x16xf32>
    %cst_142 = arith.constant dense<0.000000e+00> : vector<1x8xf32>
    %265 = vector.multi_reduction <add>, %264, %cst_142 [2] : vector<1x8x16xf32> to vector<1x8xf32>
    %266 = vector.shape_cast %265 : vector<1x8xf32> to vector<1x8x1xf32>
    %267 = tpu.reciprocal %266 {approx = true} : vector<1x8x1xf32> -> vector<1x8x1xf32>
    "tpu.trace_start"() <{level = 10 : i32, message = "bqk,bkd->bqd"}> : () -> ()
    %cst_143 = arith.constant dense<0.000000e+00> : vector<1x8x8xf32>
    %268 = tpu.matmul %264, %258, %cst_143 {dimension_numbers = #tpu.dot_dimension_numbers<[2], [1], [1], [2], [0, 0, 0, 1, 1, 2], [0], [0]>} : vector<1x8x16xf32>, vector<1x16x8xf32>, vector<1x8x8xf32> -> vector<1x8x8xf32>
    "tpu.trace_stop"() : () -> ()
    %269 = vector.broadcast %267 : vector<1x8x1xf32> to vector<1x8x8xf32>
    %270 = arith.mulf %268, %269 : vector<1x8x8xf32>
    %271 = vector.shape_cast %270 : vector<1x8x8xf32> to vector<8x8xf32>
    %272 = vector.extract_strided_slice %231 {offsets = [8, 0], sizes = [8, 32], strides = [1, 1]} : vector<32x32xf32> to vector<8x32xf32>
    %cst_144 = arith.constant dense<0.000000e+00> : vector<8x32xf32>
    %273 = tpu.matmul %271, %272, %cst_144 {dimension_numbers = #tpu.dot_dimension_numbers<[1], [0], [0], [1], [0, 0, 1, 1], [], []>} : vector<8x8xf32>, vector<8x32xf32>, vector<8x32xf32> -> vector<8x32xf32>
    %274 = arith.addf %255, %273 : vector<8x32xf32>
    %275 = vector.extract_strided_slice %227 {offsets = [0, 0, 16], sizes = [1, 8, 8], strides = [1, 1, 1]} : vector<1x8x32xf32> to vector<1x8x8xf32>
    %276 = vector.extract_strided_slice %228 {offsets = [0, 0, 16], sizes = [1, 16, 8], strides = [1, 1, 1]} : vector<1x16x32xf32> to vector<1x16x8xf32>
    %277 = vector.extract_strided_slice %229 {offsets = [0, 0, 16], sizes = [1, 16, 8], strides = [1, 1, 1]} : vector<1x16x32xf32> to vector<1x16x8xf32>
    "tpu.trace_start"() <{level = 10 : i32, message = "bqd,bkd->bqk"}> : () -> ()
    %cst_145 = arith.constant dense<0.000000e+00> : vector<1x8x16xf32>
    %278 = tpu.matmul %275, %276, %cst_145 {dimension_numbers = #tpu.dot_dimension_numbers<[2], [2], [1], [1], [0, 0, 0, 1, 1, 1], [0], [0]>} : vector<1x8x8xf32>, vector<1x16x8xf32>, vector<1x8x16xf32> -> vector<1x8x16xf32>
    "tpu.trace_stop"() : () -> ()
    %cst_146 = arith.constant dense<0xFF800000> : vector<1x8xf32>
    %279 = vector.multi_reduction <maximumf>, %278, %cst_146 [2] : vector<1x8x16xf32> to vector<1x8xf32>
    %280 = vector.shape_cast %279 : vector<1x8xf32> to vector<1x8x1xf32>
    %281 = vector.broadcast %280 : vector<1x8x1xf32> to vector<1x8x16xf32>
    %282 = arith.subf %278, %281 : vector<1x8x16xf32>
    %283 = math.exp %282 : vector<1x8x16xf32>
    %cst_147 = arith.constant dense<0.000000e+00> : vector<1x8xf32>
    %284 = vector.multi_reduction <add>, %283, %cst_147 [2] : vector<1x8x16xf32> to vector<1x8xf32>
    %285 = vector.shape_cast %284 : vector<1x8xf32> to vector<1x8x1xf32>
    %286 = tpu.reciprocal %285 {approx = true} : vector<1x8x1xf32> -> vector<1x8x1xf32>
    "tpu.trace_start"() <{level = 10 : i32, message = "bqk,bkd->bqd"}> : () -> ()
    %cst_148 = arith.constant dense<0.000000e+00> : vector<1x8x8xf32>
    %287 = tpu.matmul %283, %277, %cst_148 {dimension_numbers = #tpu.dot_dimension_numbers<[2], [1], [1], [2], [0, 0, 0, 1, 1, 2], [0], [0]>} : vector<1x8x16xf32>, vector<1x16x8xf32>, vector<1x8x8xf32> -> vector<1x8x8xf32>
    "tpu.trace_stop"() : () -> ()
    %288 = vector.broadcast %286 : vector<1x8x1xf32> to vector<1x8x8xf32>
    %289 = arith.mulf %287, %288 : vector<1x8x8xf32>
    %290 = vector.shape_cast %289 : vector<1x8x8xf32> to vector<8x8xf32>
    %291 = vector.extract_strided_slice %231 {offsets = [16, 0], sizes = [8, 32], strides = [1, 1]} : vector<32x32xf32> to vector<8x32xf32>
    %cst_149 = arith.constant dense<0.000000e+00> : vector<8x32xf32>
    %292 = tpu.matmul %290, %291, %cst_149 {dimension_numbers = #tpu.dot_dimension_numbers<[1], [0], [0], [1], [0, 0, 1, 1], [], []>} : vector<8x8xf32>, vector<8x32xf32>, vector<8x32xf32> -> vector<8x32xf32>
    %293 = arith.addf %274, %292 : vector<8x32xf32>
    %294 = vector.extract_strided_slice %227 {offsets = [0, 0, 24], sizes = [1, 8, 8], strides = [1, 1, 1]} : vector<1x8x32xf32> to vector<1x8x8xf32>
    %295 = vector.extract_strided_slice %228 {offsets = [0, 0, 24], sizes = [1, 16, 8], strides = [1, 1, 1]} : vector<1x16x32xf32> to vector<1x16x8xf32>
    %296 = vector.extract_strided_slice %229 {offsets = [0, 0, 24], sizes = [1, 16, 8], strides = [1, 1, 1]} : vector<1x16x32xf32> to vector<1x16x8xf32>
    "tpu.trace_start"() <{level = 10 : i32, message = "bqd,bkd->bqk"}> : () -> ()
    %cst_150 = arith.constant dense<0.000000e+00> : vector<1x8x16xf32>
    %297 = tpu.matmul %294, %295, %cst_150 {dimension_numbers = #tpu.dot_dimension_numbers<[2], [2], [1], [1], [0, 0, 0, 1, 1, 1], [0], [0]>} : vector<1x8x8xf32>, vector<1x16x8xf32>, vector<1x8x16xf32> -> vector<1x8x16xf32>
    "tpu.trace_stop"() : () -> ()
    %cst_151 = arith.constant dense<0xFF800000> : vector<1x8xf32>
    %298 = vector.multi_reduction <maximumf>, %297, %cst_151 [2] : vector<1x8x16xf32> to vector<1x8xf32>
    %299 = vector.shape_cast %298 : vector<1x8xf32> to vector<1x8x1xf32>
    %300 = vector.broadcast %299 : vector<1x8x1xf32> to vector<1x8x16xf32>
    %301 = arith.subf %297, %300 : vector<1x8x16xf32>
    %302 = math.exp %301 : vector<1x8x16xf32>
    %cst_152 = arith.constant dense<0.000000e+00> : vector<1x8xf32>
    %303 = vector.multi_reduction <add>, %302, %cst_152 [2] : vector<1x8x16xf32> to vector<1x8xf32>
    %304 = vector.shape_cast %303 : vector<1x8xf32> to vector<1x8x1xf32>
    %305 = tpu.reciprocal %304 {approx = true} : vector<1x8x1xf32> -> vector<1x8x1xf32>
    "tpu.trace_start"() <{level = 10 : i32, message = "bqk,bkd->bqd"}> : () -> ()
    %cst_153 = arith.constant dense<0.000000e+00> : vector<1x8x8xf32>
    %306 = tpu.matmul %302, %296, %cst_153 {dimension_numbers = #tpu.dot_dimension_numbers<[2], [1], [1], [2], [0, 0, 0, 1, 1, 2], [0], [0]>} : vector<1x8x16xf32>, vector<1x16x8xf32>, vector<1x8x8xf32> -> vector<1x8x8xf32>
    "tpu.trace_stop"() : () -> ()
    %307 = vector.broadcast %305 : vector<1x8x1xf32> to vector<1x8x8xf32>
    %308 = arith.mulf %306, %307 : vector<1x8x8xf32>
    %309 = vector.shape_cast %308 : vector<1x8x8xf32> to vector<8x8xf32>
    %310 = vector.extract_strided_slice %231 {offsets = [24, 0], sizes = [8, 32], strides = [1, 1]} : vector<32x32xf32> to vector<8x32xf32>
    %cst_154 = arith.constant dense<0.000000e+00> : vector<8x32xf32>
    %311 = tpu.matmul %309, %310, %cst_154 {dimension_numbers = #tpu.dot_dimension_numbers<[1], [0], [0], [1], [0, 0, 1, 1], [], []>} : vector<8x8xf32>, vector<8x32xf32>, vector<8x32xf32> -> vector<8x32xf32>
    %312 = arith.addf %293, %311 : vector<8x32xf32>
    %c1_155 = arith.constant 1 : index
    %313 = memref.load %arg19[%c1_155] : memref<2xf32, #tpu.memory_space<smem>>
    %314 = vector.broadcast %313 : f32 to vector<8x32xf32>
    %315 = arith.mulf %314, %312 : vector<8x32xf32>
    %316 = arith.addf %201, %315 : vector<8x32xf32>
    %c1_156 = arith.constant 1 : index
    %c0_157 = arith.constant 0 : index
    %c0_158 = arith.constant 0 : index
    %317 = vector.load %arg11[%c1_156, %c0_157, %c0_158] : memref<2x1x32xf32, #tpu.memory_space<vmem>>, vector<1x1x32xf32>
    %318 = vector.shape_cast %317 : vector<1x1x32xf32> to vector<1x32xf32>
    %c1_159 = arith.constant 1 : index
    %c0_160 = arith.constant 0 : index
    %c0_161 = arith.constant 0 : index
    %319 = vector.load %arg12[%c1_159, %c0_160, %c0_161] : memref<2x1x32xf32, #tpu.memory_space<vmem>>, vector<1x1x32xf32>
    %320 = vector.shape_cast %319 : vector<1x1x32xf32> to vector<1x32xf32>
    %cst_162 = arith.constant dense<0.000000e+00> : vector<8xf32>
    %321 = vector.multi_reduction <add>, %316, %cst_162 [1] : vector<8x32xf32> to vector<8xf32>
    %322 = vector.shape_cast %321 : vector<8xf32> to vector<8x1xf32>
    %cst_163 = arith.constant 3.200000e+01 : f32
    %323 = vector.broadcast %cst_163 : f32 to vector<8x1xf32>
    %324 = arith.divf %322, %323 : vector<8x1xf32>
    %325 = vector.broadcast %324 : vector<8x1xf32> to vector<8x32xf32>
    %326 = arith.subf %316, %325 : vector<8x32xf32>
    %327 = arith.mulf %326, %326 : vector<8x32xf32>
    %cst_164 = arith.constant dense<0.000000e+00> : vector<8xf32>
    %328 = vector.multi_reduction <add>, %327, %cst_164 [1] : vector<8x32xf32> to vector<8xf32>
    %329 = vector.shape_cast %328 : vector<8xf32> to vector<8x1xf32>
    %cst_165 = arith.constant 3.200000e+01 : f32
    %330 = vector.broadcast %cst_165 : f32 to vector<8x1xf32>
    %331 = arith.divf %329, %330 : vector<8x1xf32>
    %332 = vector.broadcast %324 : vector<8x1xf32> to vector<8x32xf32>
    %333 = arith.subf %316, %332 : vector<8x32xf32>
    %cst_166 = arith.constant 9.99999974E-6 : f32
    %334 = vector.broadcast %cst_166 : f32 to vector<8x1xf32>
    %335 = arith.addf %331, %334 : vector<8x1xf32>
    %336 = math.rsqrt %335 : vector<8x1xf32>
    %337 = vector.broadcast %336 : vector<8x1xf32> to vector<8x32xf32>
    %338 = arith.mulf %333, %337 : vector<8x32xf32>
    %339 = vector.broadcast %318 : vector<1x32xf32> to vector<8x32xf32>
    %340 = arith.mulf %338, %339 : vector<8x32xf32>
    %341 = vector.broadcast %320 : vector<1x32xf32> to vector<8x32xf32>
    %342 = arith.addf %340, %341 : vector<8x32xf32>
    %c1_167 = arith.constant 1 : index
    %c0_168 = arith.constant 0 : index
    %c0_169 = arith.constant 0 : index
    %343 = vector.load %arg13[%c1_167, %c0_168, %c0_169] : memref<2x32x64xf32, #tpu.memory_space<vmem>>, vector<1x32x64xf32>
    %344 = vector.shape_cast %343 : vector<1x32x64xf32> to vector<32x64xf32>
    %cst_170 = arith.constant dense<0.000000e+00> : vector<8x64xf32>
    %345 = tpu.matmul %342, %344, %cst_170 {dimension_numbers = #tpu.dot_dimension_numbers<[1], [0], [0], [1], [0, 0, 1, 1], [], []>} : vector<8x32xf32>, vector<32x64xf32>, vector<8x64xf32> -> vector<8x64xf32>
    %c1_171 = arith.constant 1 : index
    %c0_172 = arith.constant 0 : index
    %c0_173 = arith.constant 0 : index
    %346 = vector.load %arg14[%c1_171, %c0_172, %c0_173] : memref<2x1x64xf32, #tpu.memory_space<vmem>>, vector<1x1x64xf32>
    %347 = vector.shape_cast %346 : vector<1x1x64xf32> to vector<1x64xf32>
    %348 = vector.broadcast %347 : vector<1x64xf32> to vector<8x64xf32>
    %349 = arith.addf %345, %348 : vector<8x64xf32>
    %cst_174 = arith.constant 5.000000e-01 : f32
    %350 = vector.broadcast %cst_174 : f32 to vector<8x64xf32>
    %351 = arith.mulf %350, %349 : vector<8x64xf32>
    %cst_175 = arith.constant 4.471500e-02 : f32
    %352 = vector.broadcast %cst_175 : f32 to vector<8x64xf32>
    %353 = arith.mulf %352, %349 : vector<8x64xf32>
    %354 = arith.mulf %353, %349 : vector<8x64xf32>
    %355 = arith.mulf %354, %349 : vector<8x64xf32>
    %356 = arith.addf %349, %355 : vector<8x64xf32>
    %cst_176 = arith.constant 0.797884583 : f32
    %357 = vector.broadcast %cst_176 : f32 to vector<8x64xf32>
    %358 = arith.mulf %357, %356 : vector<8x64xf32>
    %359 = math.tanh %358 : vector<8x64xf32>
    %cst_177 = arith.constant 1.000000e+00 : f32
    %360 = vector.broadcast %cst_177 : f32 to vector<8x64xf32>
    %361 = arith.addf %360, %359 : vector<8x64xf32>
    %362 = arith.mulf %351, %361 : vector<8x64xf32>
    %c1_178 = arith.constant 1 : index
    %c0_179 = arith.constant 0 : index
    %c0_180 = arith.constant 0 : index
    %363 = vector.load %arg15[%c1_178, %c0_179, %c0_180] : memref<2x64x32xf32, #tpu.memory_space<vmem>>, vector<1x64x32xf32>
    %364 = vector.shape_cast %363 : vector<1x64x32xf32> to vector<64x32xf32>
    %cst_181 = arith.constant dense<0.000000e+00> : vector<8x32xf32>
    %365 = tpu.matmul %362, %364, %cst_181 {dimension_numbers = #tpu.dot_dimension_numbers<[1], [0], [0], [1], [0, 0, 1, 1], [], []>} : vector<8x64xf32>, vector<64x32xf32>, vector<8x32xf32> -> vector<8x32xf32>
    %c1_182 = arith.constant 1 : index
    %c0_183 = arith.constant 0 : index
    %c0_184 = arith.constant 0 : index
    %366 = vector.load %arg16[%c1_182, %c0_183, %c0_184] : memref<2x1x32xf32, #tpu.memory_space<vmem>>, vector<1x1x32xf32>
    %367 = vector.shape_cast %366 : vector<1x1x32xf32> to vector<1x32xf32>
    %368 = vector.broadcast %367 : vector<1x32xf32> to vector<8x32xf32>
    %369 = arith.addf %365, %368 : vector<8x32xf32>
    %c1_185 = arith.constant 1 : index
    %370 = memref.load %arg20[%c1_185] : memref<2xf32, #tpu.memory_space<smem>>
    %371 = vector.broadcast %370 : f32 to vector<8x32xf32>
    %372 = arith.mulf %371, %369 : vector<8x32xf32>
    %373 = arith.addf %342, %372 : vector<8x32xf32>
    %c1_186 = arith.constant 1 : index
    %c0_187 = arith.constant 0 : index
    %c0_188 = arith.constant 0 : index
    %374 = vector.load %arg17[%c1_186, %c0_187, %c0_188] : memref<2x1x32xf32, #tpu.memory_space<vmem>>, vector<1x1x32xf32>
    %375 = vector.shape_cast %374 : vector<1x1x32xf32> to vector<1x32xf32>
    %c1_189 = arith.constant 1 : index
    %c0_190 = arith.constant 0 : index
    %c0_191 = arith.constant 0 : index
    %376 = vector.load %arg18[%c1_189, %c0_190, %c0_191] : memref<2x1x32xf32, #tpu.memory_space<vmem>>, vector<1x1x32xf32>
    %377 = vector.shape_cast %376 : vector<1x1x32xf32> to vector<1x32xf32>
    %cst_192 = arith.constant dense<0.000000e+00> : vector<8xf32>
    %378 = vector.multi_reduction <add>, %373, %cst_192 [1] : vector<8x32xf32> to vector<8xf32>
    %379 = vector.shape_cast %378 : vector<8xf32> to vector<8x1xf32>
    %cst_193 = arith.constant 3.200000e+01 : f32
    %380 = vector.broadcast %cst_193 : f32 to vector<8x1xf32>
    %381 = arith.divf %379, %380 : vector<8x1xf32>
    %382 = vector.broadcast %381 : vector<8x1xf32> to vector<8x32xf32>
    %383 = arith.subf %373, %382 : vector<8x32xf32>
    %384 = arith.mulf %383, %383 : vector<8x32xf32>
    %cst_194 = arith.constant dense<0.000000e+00> : vector<8xf32>
    %385 = vector.multi_reduction <add>, %384, %cst_194 [1] : vector<8x32xf32> to vector<8xf32>
    %386 = vector.shape_cast %385 : vector<8xf32> to vector<8x1xf32>
    %cst_195 = arith.constant 3.200000e+01 : f32
    %387 = vector.broadcast %cst_195 : f32 to vector<8x1xf32>
    %388 = arith.divf %386, %387 : vector<8x1xf32>
    %389 = vector.broadcast %381 : vector<8x1xf32> to vector<8x32xf32>
    %390 = arith.subf %373, %389 : vector<8x32xf32>
    %cst_196 = arith.constant 9.99999974E-6 : f32
    %391 = vector.broadcast %cst_196 : f32 to vector<8x1xf32>
    %392 = arith.addf %388, %391 : vector<8x1xf32>
    %393 = math.rsqrt %392 : vector<8x1xf32>
    %394 = vector.broadcast %393 : vector<8x1xf32> to vector<8x32xf32>
    %395 = arith.mulf %390, %394 : vector<8x32xf32>
    %396 = vector.broadcast %375 : vector<1x32xf32> to vector<8x32xf32>
    %397 = arith.mulf %395, %396 : vector<8x32xf32>
    %398 = vector.broadcast %377 : vector<1x32xf32> to vector<8x32xf32>
    %399 = arith.addf %397, %398 : vector<8x32xf32>
    %400 = vector.shape_cast %399 : vector<8x32xf32> to vector<1x8x32xf32>
    %c0_197 = arith.constant 0 : index
    %c0_198 = arith.constant 0 : index
    %c0_199 = arith.constant 0 : index
    %401 = vector.load %arg21[%c0_197, %c0_198, %c0_199] : memref<1x8x32xf32, #tpu.memory_space<vmem>>, vector<1x8x32xf32>
    tpu.vector_store %arg21[%c0_197, %c0_198, %c0_199], %400 {strides = array<i32>} : memref<1x8x32xf32, #tpu.memory_space<vmem>>, vector<1x8x32xf32>,
    return
  }
  func.func @transform_0(%arg0: i32) -> (i32, i32, i32) {
    %c0_i32 = arith.constant 0 : i32
    %c0_i32_0 = arith.constant 0 : i32
    %c0_i32_1 = arith.constant 0 : i32
    return %arg0, %c0_i32, %c0_i32_0 : i32, i32, i32
  }
  func.func @transform_1(%arg0: i32) -> (i32, i32, i32) {
    %c0_i32 = arith.constant 0 : i32
    %c0_i32_0 = arith.constant 0 : i32
    %c0_i32_1 = arith.constant 0 : i32
    return %arg0, %c0_i32, %c0_i32_0 : i32, i32, i32
  }
  func.func @transform_2(%arg0: i32) -> (i32, i32, i32) {
    %c0_i32 = arith.constant 0 : i32
    %c0_i32_0 = arith.constant 0 : i32
    %c0_i32_1 = arith.constant 0 : i32
    %c0_i32_2 = arith.constant 0 : i32
    return %c0_i32, %c0_i32_0, %c0_i32_1 : i32, i32, i32
  }
  func.func @transform_3(%arg0: i32) -> (i32, i32, i32) {
    %c0_i32 = arith.constant 0 : i32
    %c0_i32_0 = arith.constant 0 : i32
    %c0_i32_1 = arith.constant 0 : i32
    %c0_i32_2 = arith.constant 0 : i32
    return %c0_i32, %c0_i32_0, %c0_i32_1 : i32, i32, i32
  }
  func.func @transform_4(%arg0: i32) -> (i32, i32, i32) {
    %c0_i32 = arith.constant 0 : i32
    %c0_i32_0 = arith.constant 0 : i32
    %c0_i32_1 = arith.constant 0 : i32
    %c0_i32_2 = arith.constant 0 : i32
    return %c0_i32, %c0_i32_0, %c0_i32_1 : i32, i32, i32
  }
  func.func @transform_5(%arg0: i32) -> (i32, i32, i32) {
    %c0_i32 = arith.constant 0 : i32
    %c0_i32_0 = arith.constant 0 : i32
    %c0_i32_1 = arith.constant 0 : i32
    %c0_i32_2 = arith.constant 0 : i32
    return %c0_i32, %c0_i32_0, %c0_i32_1 : i32, i32, i32
  }
  func.func @transform_6(%arg0: i32) -> (i32, i32, i32) {
    %c0_i32 = arith.constant 0 : i32
    %c0_i32_0 = arith.constant 0 : i32
    %c0_i32_1 = arith.constant 0 : i32
    %c0_i32_2 = arith.constant 0 : i32
    return %c0_i32, %c0_i32_0, %c0_i32_1 : i32, i32, i32
  }
  func.func @transform_7(%arg0: i32) -> (i32, i32, i32) {
    %c0_i32 = arith.constant 0 : i32
    %c0_i32_0 = arith.constant 0 : i32
    %c0_i32_1 = arith.constant 0 : i32
    %c0_i32_2 = arith.constant 0 : i32
    return %c0_i32, %c0_i32_0, %c0_i32_1 : i32, i32, i32
  }
  func.func @transform_8(%arg0: i32) -> (i32, i32, i32) {
    %c0_i32 = arith.constant 0 : i32
    %c0_i32_0 = arith.constant 0 : i32
    %c0_i32_1 = arith.constant 0 : i32
    %c0_i32_2 = arith.constant 0 : i32
    return %c0_i32, %c0_i32_0, %c0_i32_1 : i32, i32, i32
  }
  func.func @transform_9(%arg0: i32) -> (i32, i32, i32) {
    %c0_i32 = arith.constant 0 : i32
    %c0_i32_0 = arith.constant 0 : i32
    %c0_i32_1 = arith.constant 0 : i32
    %c0_i32_2 = arith.constant 0 : i32
    return %c0_i32, %c0_i32_0, %c0_i32_1 : i32, i32, i32
  }
  func.func @transform_10(%arg0: i32) -> (i32, i32, i32) {
    %c0_i32 = arith.constant 0 : i32
    %c0_i32_0 = arith.constant 0 : i32
    %c0_i32_1 = arith.constant 0 : i32
    %c0_i32_2 = arith.constant 0 : i32
    return %c0_i32, %c0_i32_0, %c0_i32_1 : i32, i32, i32
  }
  func.func @transform_11(%arg0: i32) -> (i32, i32, i32) {
    %c0_i32 = arith.constant 0 : i32
    %c0_i32_0 = arith.constant 0 : i32
    %c0_i32_1 = arith.constant 0 : i32
    %c0_i32_2 = arith.constant 0 : i32
    return %c0_i32, %c0_i32_0, %c0_i32_1 : i32, i32, i32
  }
  func.func @transform_12(%arg0: i32) -> (i32, i32, i32) {
    %c0_i32 = arith.constant 0 : i32
    %c0_i32_0 = arith.constant 0 : i32
    %c0_i32_1 = arith.constant 0 : i32
    %c0_i32_2 = arith.constant 0 : i32
    return %c0_i32, %c0_i32_0, %c0_i32_1 : i32, i32, i32
  }
  func.func @transform_13(%arg0: i32) -> (i32, i32, i32) {
    %c0_i32 = arith.constant 0 : i32
    %c0_i32_0 = arith.constant 0 : i32
    %c0_i32_1 = arith.constant 0 : i32
    %c0_i32_2 = arith.constant 0 : i32
    return %c0_i32, %c0_i32_0, %c0_i32_1 : i32, i32, i32
  }
  func.func @transform_14(%arg0: i32) -> (i32, i32, i32) {
    %c0_i32 = arith.constant 0 : i32
    %c0_i32_0 = arith.constant 0 : i32
    %c0_i32_1 = arith.constant 0 : i32
    %c0_i32_2 = arith.constant 0 : i32
    return %c0_i32, %c0_i32_0, %c0_i32_1 : i32, i32, i32
  }
  func.func @transform_15(%arg0: i32) -> (i32, i32, i32) {
    %c0_i32 = arith.constant 0 : i32
    %c0_i32_0 = arith.constant 0 : i32
    %c0_i32_1 = arith.constant 0 : i32
    %c0_i32_2 = arith.constant 0 : i32
    return %c0_i32, %c0_i32_0, %c0_i32_1 : i32, i32, i32
  }
  func.func @transform_16(%arg0: i32) -> (i32, i32, i32) {
    %c0_i32 = arith.constant 0 : i32
    %c0_i32_0 = arith.constant 0 : i32
    %c0_i32_1 = arith.constant 0 : i32
    %c0_i32_2 = arith.constant 0 : i32
    return %c0_i32, %c0_i32_0, %c0_i32_1 : i32, i32, i32
  }
  func.func @transform_17(%arg0: i32) -> (i32, i32, i32) {
    %c0_i32 = arith.constant 0 : i32
    %c0_i32_0 = arith.constant 0 : i32
    %c0_i32_1 = arith.constant 0 : i32
    %c0_i32_2 = arith.constant 0 : i32
    return %c0_i32, %c0_i32_0, %c0_i32_1 : i32, i32, i32
  }
  func.func @transform_18(%arg0: i32) -> i32 {
    %c0_i32 = arith.constant 0 : i32
    %c0_i32_0 = arith.constant 0 : i32
    return %c0_i32 : i32
  }
  func.func @transform_19(%arg0: i32) -> i32 {
    %c0_i32 = arith.constant 0 : i32
    %c0_i32_0 = arith.constant 0 : i32
    return %c0_i32 : i32
  }
  func.func @transform_20(%arg0: i32) -> (i32, i32, i32) {
    %c0_i32 = arith.constant 0 : i32
    %c0_i32_0 = arith.constant 0 : i32
    %c0_i32_1 = arith.constant 0 : i32
    return %arg0, %c0_i32, %c0_i32_0 : i32, i32, i32
  }
}

</mosaic_0001>

<llo_original>
// kernel: tpu_custom_call.1
$region0: #{tpu_custom_call.1}
  #allocation0 [shape = 'u32[]', space=smem, size = 0x4, offset = 0x4, fixed_abs, tag = 'smem constant byte address 0x4 - core index']
  #allocation1 [shape = 'u32[144,128]{1,0:T(1,128)}', space=vmem, size = 0x12000, scoped, tag = 'internal scratch']
  #allocation2 [shape = 'f32[1,16,32]{2,1,0:T(8,128)}', space=vmem, size = 0x2000, scoped, tag = 'scratch operand']
  %s0 = inlined_call_operand.hbm [shape: f32[2,8,32], index: 0, kind: input, shape index: {}]
  %s1 = inlined_call_operand.hbm [shape: f32[2,8,32], index: 1, kind: input, shape index: {}]
  %s2 = inlined_call_operand.vmem [shape: f32[2,32,32], index: 2, kind: input, shape index: {}]
  %s3 = inlined_call_operand.vmem [shape: f32[2,1,32], index: 3, kind: input, shape index: {}]
  %s4 = inlined_call_operand.vmem [shape: f32[2,32,32], index: 4, kind: input, shape index: {}]
  %s5 = inlined_call_operand.vmem [shape: f32[2,1,32], index: 5, kind: input, shape index: {}]
  %s6 = inlined_call_operand.vmem [shape: f32[2,32,32], index: 6, kind: input, shape index: {}]
  %s7 = inlined_call_operand.vmem [shape: f32[2,1,32], index: 7, kind: input, shape index: {}]
  %s8 = inlined_call_operand.hbm [shape: f32[2,32,32], index: 8, kind: input, shape index: {}]
  %s9 = inlined_call_operand.vmem [shape: f32[2,1,32], index: 9, kind: input, shape index: {}]
  %s10 = inlined_call_operand.vmem [shape: f32[2,1,32], index: 10, kind: input, shape index: {}]
  %s11 = inlined_call_operand.vmem [shape: f32[2,1,32], index: 11, kind: input, shape index: {}]
  %s12 = inlined_call_operand.hbm [shape: f32[2,32,64], index: 12, kind: input, shape index: {}]
  %s13 = inlined_call_operand.vmem [shape: f32[2,1,64], index: 13, kind: input, shape index: {}]
  %s14 = inlined_call_operand.vmem [shape: f32[2,64,32], index: 14, kind: input, shape index: {}]
  %s15 = inlined_call_operand.vmem [shape: f32[2,1,32], index: 15, kind: input, shape index: {}]
  %s16 = inlined_call_operand.vmem [shape: f32[2,1,32], index: 16, kind: input, shape index: {}]
  %s17 = inlined_call_operand.vmem [shape: f32[2,1,32], index: 17, kind: input, shape index: {}]
  %s18 = inlined_call_operand.vmem [shape: f32[2], index: 18, kind: input, shape index: {}]
  %s19 = inlined_call_operand.vmem [shape: f32[2], index: 19, kind: input, shape index: {}]
  %s20 = inlined_call_operand.hbm [shape: f32[2,8,32], index: 20, kind: output, shape index: {}]
  %s21 = sld [smem:[#allocation0]]
  $region137: #{tpu_custom_call.1} parent=0
    _
  %s23 = ssub.s32 1, %s21
  %s24 = scalar_select 0, %s23, %s21
  $region1: #{tpu_custom_call.1} parent=0
    #allocation3 [shape = 'u8[8192]{0}', space=vmem, size = 0x2000, scoped, tag = 'input window, operand 0']
    #allocation4 [shape = 's32[2]{0}', space=sflag, size = 0x8, scoped, tag = 'scoped memory for tpu_custom_call.1']
    #allocation5 [shape = 's32[2]{0}', space=sflag, size = 0x8, scoped, tag = 'scoped memory for tpu_custom_call.1']
    #allocation6 [shape = 's32[2]{0}', space=sflag, size = 0x8, scoped, tag = 'scoped memory for tpu_custom_call.1']
    #allocation7 [shape = 'u8[8192]{0}', space=vmem, size = 0x2000, scoped, tag = 'input window, operand 1']
    #allocation8 [shape = 's32[2]{0}', space=sflag, size = 0x8, scoped, tag = 'scoped memory for tpu_custom_call.1']
    #allocation9 [shape = 'u8[32768]{0}', space=vmem, size = 0x8000, scoped, tag = 'input window, operand 8, single buffered']
    #allocation10 [shape = 'u8[32768]{0}', space=vmem, size = 0x8000, scoped, tag = 'input window, operand 12, single buffered']
    #allocation11 [shape = 's32[1]{0}', space=sflag, size = 0x4, scoped, tag = 'scoped memory for tpu_custom_call.1']
    #allocation12 [shape = 'u8[512]{0}', space=smem, size = 0x200, scoped, tag = 'input window, operand 18, single buffered']
    #allocation13 [shape = 'u8[512]{0}', space=smem, size = 0x200, scoped, tag = 'input window, operand 19, single buffered']
    #allocation14 [shape = 's32[1]{0}', space=sflag, size = 0x4, scoped, tag = 'scoped memory for tpu_custom_call.1']
    #allocation15 [shape = 'u8[8192]{0}', space=vmem, size = 0x2000, scoped, tag = 'output window, operand 0']
    %25 = vsyncpa [#allocation4], 0
    %s26 = scalar_lea.sflag [#allocation4], 1
    %27 = vsyncpa %s26, 0
    %28 = vsyncpa [#allocation8], 0
    %s29 = scalar_lea.sflag [#allocation8], 1
    %30 = vsyncpa %s29, 0
    %31 = vsyncpa [#allocation11], 0
    %32 = vsyncpa [#allocation6], 0
    %33 = vsyncpa [#allocation14], 0
    %34 = vsyncpa [#allocation5], 0
    %s35 = scalar_lea.sflag [#allocation5], 1
    %36 = vsyncpa %s35, 0
    loop: start=0, step=1, limit=4
    $region2: #{tpu_custom_call.1} parent=1 // loop_pre_header
      _
    $region3: #{tpu_custom_call.1} parent=1 // loop_header
      %s38 = sphi 0, %s42
      %p39 = scmp.ge.s32.totalorder %s38, 4
      %s48 = sphi 0, %s50
      %s51 = sphi 0, %s48
      %s52 = sphi 0, %s51
      %s68 = sphi 0, %s52
      %s74 = sphi 0, %s76
      %s77 = sphi 0, %s74
      %s78 = sphi 0, %s77
      %s94 = sphi 0, %s78
      %s98 = sphi 0, %s98
      %s100 = sphi 0, %s98
      %s101 = sphi 0, %s100
      %s115 = sphi 0, %s101
      %s119 = sphi 0, %s119
      %s121 = sphi 0, %s119
      %s122 = sphi 0, %s121
      %s136 = sphi 0, %s122
      %s140 = sphi 0, %s140
      %s142 = sphi 0, %s140
      %s143 = sphi 0, %s142
      %s157 = sphi 0, %s143
      %s161 = sphi 0, %s161
      %s163 = sphi 0, %s161
      %s164 = sphi 0, %s163
      %s178 = sphi 0, %s164
      %s182 = sphi 0, %s182
      %s184 = sphi 0, %s182
      %s185 = sphi 0, %s184
      %s199 = sphi 0, %s185
      %s203 = sphi 0, %s203
      %s205 = sphi 0, %s203
      %s206 = sphi 0, %s205
      %s220 = sphi 0, %s206
      %s224 = sphi 0, %s224
      %s226 = sphi 0, %s224
      %s227 = sphi 0, %s226
      %s241 = sphi 0, %s227
      %s245 = sphi 0, %s245
      %s247 = sphi 0, %s245
      %s248 = sphi 0, %s247
      %s262 = sphi 0, %s248
      %s266 = sphi 0, %s266
      %s268 = sphi 0, %s266
      %s269 = sphi 0, %s268
      %s283 = sphi 0, %s269
      %s287 = sphi 0, %s287
      %s289 = sphi 0, %s287
      %s290 = sphi 0, %s289
      %s304 = sphi 0, %s290
      %s308 = sphi 0, %s308
      %s310 = sphi 0, %s308
      %s311 = sphi 0, %s310
      %s325 = sphi 0, %s311
      %s329 = sphi 0, %s329
      %s331 = sphi 0, %s329
      %s332 = sphi 0, %s331
      %s346 = sphi 0, %s332
      %s350 = sphi 0, %s350
      %s352 = sphi 0, %s350
      %s353 = sphi 0, %s352
      %s367 = sphi 0, %s353
      %s371 = sphi 0, %s371
      %s373 = sphi 0, %s371
      %s374 = sphi 0, %s373
      %s388 = sphi 0, %s374
      %s392 = sphi 0, %s392
      %s394 = sphi 0, %s392
      %s395 = sphi 0, %s394
      %s409 = sphi 0, %s395
      %s413 = sphi 0, %s413
      %s415 = sphi 0, %s413
      %s416 = sphi 0, %s415
      %s430 = sphi 0, %s416
      %s434 = sphi 0, %s434
      %s436 = sphi 0, %s434
      %s437 = sphi 0, %s436
      %s451 = sphi 0, %s437
      %s455 = sphi 0, %s455
      %s457 = sphi 0, %s455
      %s458 = sphi 0, %s457
      %s472 = sphi 0, %s458
      %s478 = sphi 0, %s480
      %s481 = sphi 0, %s478
      %s482 = sphi 0, %s481
      %s498 = sphi 0, %s482
    $region4: #{tpu_custom_call.1} parent=1 // loop_header_branch
      %41 = sbr.rel (%p39) target = $region8
    $region5: #{tpu_custom_call.1} parent=1 // loop_body
      %s43 = ssub.s32 %s38, 1
      %s44 = ssub.s32 %s38, 2
      %s45 = sadd.s32 %s38, 1
      %s46 = ssub.s32 %s38, %s45
      %p47 = scmp.eq.s32.totalorder %s46, 0
      %s49 = sadd.s32 %s48, 1
      %s50 = scalar_select %p47, %s48, %s49
      %p53 = pneg %p47
      %p54 = scmp.eq.s32.totalorder %s38, 1
      %p55 = por %p53, %p54
      %p56 = scmp.ne.s32.totalorder %s48, %s51
      %p57 = scmp.eq.s32.totalorder %s38, 0
      %p58 = por %p56, %p57
      %p59 = scmp.ne.s32.totalorder %s48, %s51
      %p60 = scmp.eq.s32.totalorder %s43, 1
      %p61 = por %p59, %p60
      %p62 = scmp.ne.s32.totalorder %s51, %s52
      %p63 = scmp.eq.s32.totalorder %s43, 0
      %p64 = por %p62, %p63
      %p65 = scmp.ne.s32.totalorder %s51, %s52
      %p66 = scmp.eq.s32.totalorder %s44, 1
      %p67 = por %p65, %p66
      %p69 = scmp.ne.s32.totalorder %s52, %s68
      %p70 = scmp.eq.s32.totalorder %s44, 0
      %p71 = por %p69, %p70
      %s72 = ssub.s32 %s38, %s45
      %p73 = scmp.eq.s32.totalorder %s72, 0
      %s75 = sadd.s32 %s74, 1
      %s76 = scalar_select %p73, %s74, %s75
      %p79 = pneg %p73
      %p80 = scmp.eq.s32.totalorder %s38, 1
      %p81 = por %p79, %p80
      %p82 = scmp.ne.s32.totalorder %s74, %s77
      %p83 = scmp.eq.s32.totalorder %s38, 0
      %p84 = por %p82, %p83
      %p85 = scmp.ne.s32.totalorder %s74, %s77
      %p86 = scmp.eq.s32.totalorder %s43, 1
      %p87 = por %p85, %p86
      %p88 = scmp.ne.s32.totalorder %s77, %s78
      %p89 = scmp.eq.s32.totalorder %s43, 0
      %p90 = por %p88, %p89
      %p91 = scmp.ne.s32.totalorder %s77, %s78
      %p92 = scmp.eq.s32.totalorder %s44, 1
      %p93 = por %p91, %p92
      %p95 = scmp.ne.s32.totalorder %s78, %s94
      %p96 = scmp.eq.s32.totalorder %s44, 0
      %p97 = por %p95, %p96
      %s99 = sadd.s32 %s98, 1
      %p102 = scmp.eq.s32.totalorder %s38, 1
      %p103 = scmp.ne.s32.totalorder %s98, %s100
      %p104 = scmp.eq.s32.totalorder %s38, 0
      %p105 = por %p103, %p104
      %p106 = scmp.ne.s32.totalorder %s98, %s100
      %p107 = scmp.eq.s32.totalorder %s43, 1
      %p108 = por %p106, %p107
      %p109 = scmp.ne.s32.totalorder %s100, %s101
      %p110 = scmp.eq.s32.totalorder %s43, 0
      %p111 = por %p109, %p110
      %p112 = scmp.ne.s32.totalorder %s100, %s101
      %p113 = scmp.eq.s32.totalorder %s44, 1
      %p114 = por %p112, %p113
      %p116 = scmp.ne.s32.totalorder %s101, %s115
      %p117 = scmp.eq.s32.totalorder %s44, 0
      %p118 = por %p116, %p117
      %s120 = sadd.s32 %s119, 1
      %p123 = scmp.eq.s32.totalorder %s38, 1
      %p124 = scmp.ne.s32.totalorder %s119, %s121
      %p125 = scmp.eq.s32.totalorder %s38, 0
      %p126 = por %p124, %p125
      %p127 = scmp.ne.s32.totalorder %s119, %s121
      %p128 = scmp.eq.s32.totalorder %s43, 1
      %p129 = por %p127, %p128
      %p130 = scmp.ne.s32.totalorder %s121, %s122
      %p131 = scmp.eq.s32.totalorder %s43, 0
      %p132 = por %p130, %p131
      %p133 = scmp.ne.s32.totalorder %s121, %s122
      %p134 = scmp.eq.s32.totalorder %s44, 1
      %p135 = por %p133, %p134
      %p137 = scmp.ne.s32.totalorder %s122, %s136
      %p138 = scmp.eq.s32.totalorder %s44, 0
      %p139 = por %p137, %p138
      %s141 = sadd.s32 %s140, 1
      %p144 = scmp.eq.s32.totalorder %s38, 1
      %p145 = scmp.ne.s32.totalorder %s140, %s142
      %p146 = scmp.eq.s32.totalorder %s38, 0
      %p147 = por %p145, %p146
      %p148 = scmp.ne.s32.totalorder %s140, %s142
      %p149 = scmp.eq.s32.totalorder %s43, 1
      %p150 = por %p148, %p149
      %p151 = scmp.ne.s32.totalorder %s142, %s143
      %p152 = scmp.eq.s32.totalorder %s43, 0
      %p153 = por %p151, %p152
      %p154 = scmp.ne.s32.totalorder %s142, %s143
      %p155 = scmp.eq.s32.totalorder %s44, 1
      %p156 = por %p154, %p155
      %p158 = scmp.ne.s32.totalorder %s143, %s157
      %p159 = scmp.eq.s32.totalorder %s44, 0
      %p160 = por %p158, %p159
      %s162 = sadd.s32 %s161, 1
      %p165 = scmp.eq.s32.totalorder %s38, 1
      %p166 = scmp.ne.s32.totalorder %s161, %s163
      %p167 = scmp.eq.s32.totalorder %s38, 0
      %p168 = por %p166, %p167
      %p169 = scmp.ne.s32.totalorder %s161, %s163
      %p170 = scmp.eq.s32.totalorder %s43, 1
      %p171 = por %p169, %p170
      %p172 = scmp.ne.s32.totalorder %s163, %s164
      %p173 = scmp.eq.s32.totalorder %s43, 0
      %p174 = por %p172, %p173
      %p175 = scmp.ne.s32.totalorder %s163, %s164
      %p176 = scmp.eq.s32.totalorder %s44, 1
      %p177 = por %p175, %p176
      %p179 = scmp.ne.s32.totalorder %s164, %s178
      %p180 = scmp.eq.s32.totalorder %s44, 0
      %p181 = por %p179, %p180
      %s183 = sadd.s32 %s182, 1
      %p186 = scmp.eq.s32.totalorder %s38, 1
      %p187 = scmp.ne.s32.totalorder %s182, %s184
      %p188 = scmp.eq.s32.totalorder %s38, 0
      %p189 = por %p187, %p188
      %p190 = scmp.ne.s32.totalorder %s182, %s184
      %p191 = scmp.eq.s32.totalorder %s43, 1
      %p192 = por %p190, %p191
      %p193 = scmp.ne.s32.totalorder %s184, %s185
      %p194 = scmp.eq.s32.totalorder %s43, 0
      %p195 = por %p193, %p194
      %p196 = scmp.ne.s32.totalorder %s184, %s185
      %p197 = scmp.eq.s32.totalorder %s44, 1
      %p198 = por %p196, %p197
      %p200 = scmp.ne.s32.totalorder %s185, %s199
      %p201 = scmp.eq.s32.totalorder %s44, 0
      %p202 = por %p200, %p201
      %s204 = sadd.s32 %s203, 1
      %p207 = scmp.eq.s32.totalorder %s38, 1
      %p208 = scmp.ne.s32.totalorder %s203, %s205
      %p209 = scmp.eq.s32.totalorder %s38, 0
      %p210 = por %p208, %p209
      %p211 = scmp.ne.s32.totalorder %s203, %s205
      %p212 = scmp.eq.s32.totalorder %s43, 1
      %p213 = por %p211, %p212
      %p214 = scmp.ne.s32.totalorder %s205, %s206
      %p215 = scmp.eq.s32.totalorder %s43, 0
      %p216 = por %p214, %p215
      %p217 = scmp.ne.s32.totalorder %s205, %s206
      %p218 = scmp.eq.s32.totalorder %s44, 1
      %p219 = por %p217, %p218
      %p221 = scmp.ne.s32.totalorder %s206, %s220
      %p222 = scmp.eq.s32.totalorder %s44, 0
      %p223 = por %p221, %p222
      %s225 = sadd.s32 %s224, 1
      %p228 = scmp.eq.s32.totalorder %s38, 1
      %p229 = scmp.ne.s32.totalorder %s224, %s226
      %p230 = scmp.eq.s32.totalorder %s38, 0
      %p231 = por %p229, %p230
      %p232 = scmp.ne.s32.totalorder %s224, %s226
      %p233 = scmp.eq.s32.totalorder %s43, 1
      %p234 = por %p232, %p233
      %p235 = scmp.ne.s32.totalorder %s226, %s227
      %p236 = scmp.eq.s32.totalorder %s43, 0
      %p237 = por %p235, %p236
      %p238 = scmp.ne.s32.totalorder %s226, %s227
      %p239 = scmp.eq.s32.totalorder %s44, 1
      %p240 = por %p238, %p239
      %p242 = scmp.ne.s32.totalorder %s227, %s241
      %p243 = scmp.eq.s32.totalorder %s44, 0
      %p244 = por %p242, %p243
      %s246 = sadd.s32 %s245, 1
      %p249 = scmp.eq.s32.totalorder %s38, 1
      %p250 = scmp.ne.s32.totalorder %s245, %s247
      %p251 = scmp.eq.s32.totalorder %s38, 0
      %p252 = por %p250, %p251
      %p253 = scmp.ne.s32.totalorder %s245, %s247
      %p254 = scmp.eq.s32.totalorder %s43, 1
      %p255 = por %p253, %p254
      %p256 = scmp.ne.s32.totalorder %s247, %s248
      %p257 = scmp.eq.s32.totalorder %s43, 0
      %p258 = por %p256, %p257
      %p259 = scmp.ne.s32.totalorder %s247, %s248
      %p260 = scmp.eq.s32.totalorder %s44, 1
      %p261 = por %p259, %p260
      %p263 = scmp.ne.s32.totalorder %s248, %s262
      %p264 = scmp.eq.s32.totalorder %s44, 0
      %p265 = por %p263, %p264
      %s267 = sadd.s32 %s266, 1
      %p270 = scmp.eq.s32.totalorder %s38, 1
      %p271 = scmp.ne.s32.totalorder %s266, %s268
      %p272 = scmp.eq.s32.totalorder %s38, 0
      %p273 = por %p271, %p272
      %p274 = scmp.ne.s32.totalorder %s266, %s268
      %p275 = scmp.eq.s32.totalorder %s43, 1
      %p276 = por %p274, %p275
      %p277 = scmp.ne.s32.totalorder %s268, %s269
      %p278 = scmp.eq.s32.totalorder %s43, 0
      %p279 = por %p277, %p278
      %p280 = scmp.ne.s32.totalorder %s268, %s269
      %p281 = scmp.eq.s32.totalorder %s44, 1
      %p282 = por %p280, %p281
      %p284 = scmp.ne.s32.totalorder %s269, %s283
      %p285 = scmp.eq.s32.totalorder %s44, 0
      %p286 = por %p284, %p285
      %s288 = sadd.s32 %s287, 1
      %p291 = scmp.eq.s32.totalorder %s38, 1
      %p292 = scmp.ne.s32.totalorder %s287, %s289
      %p293 = scmp.eq.s32.totalorder %s38, 0
      %p294 = por %p292, %p293
      %p295 = scmp.ne.s32.totalorder %s287, %s289
      %p296 = scmp.eq.s32.totalorder %s43, 1
      %p297 = por %p295, %p296
      %p298 = scmp.ne.s32.totalorder %s289, %s290
      %p299 = scmp.eq.s32.totalorder %s43, 0
      %p300 = por %p298, %p299
      %p301 = scmp.ne.s32.totalorder %s289, %s290
      %p302 = scmp.eq.s32.totalorder %s44, 1
      %p303 = por %p301, %p302
      %p305 = scmp.ne.s32.totalorder %s290, %s304
      %p306 = scmp.eq.s32.totalorder %s44, 0
      %p307 = por %p305, %p306
      %s309 = sadd.s32 %s308, 1
      %p312 = scmp.eq.s32.totalorder %s38, 1
      %p313 = scmp.ne.s32.totalorder %s308, %s310
      %p314 = scmp.eq.s32.totalorder %s38, 0
      %p315 = por %p313, %p314
      %p316 = scmp.ne.s32.totalorder %s308, %s310
      %p317 = scmp.eq.s32.totalorder %s43, 1
      %p318 = por %p316, %p317
      %p319 = scmp.ne.s32.totalorder %s310, %s311
      %p320 = scmp.eq.s32.totalorder %s43, 0
      %p321 = por %p319, %p320
      %p322 = scmp.ne.s32.totalorder %s310, %s311
      %p323 = scmp.eq.s32.totalorder %s44, 1
      %p324 = por %p322, %p323
      %p326 = scmp.ne.s32.totalorder %s311, %s325
      %p327 = scmp.eq.s32.totalorder %s44, 0
      %p328 = por %p326, %p327
      %s330 = sadd.s32 %s329, 1
      %p333 = scmp.eq.s32.totalorder %s38, 1
      %p334 = scmp.ne.s32.totalorder %s329, %s331
      %p335 = scmp.eq.s32.totalorder %s38, 0
      %p336 = por %p334, %p335
      %p337 = scmp.ne.s32.totalorder %s329, %s331
      %p338 = scmp.eq.s32.totalorder %s43, 1
      %p339 = por %p337, %p338
      %p340 = scmp.ne.s32.totalorder %s331, %s332
      %p341 = scmp.eq.s32.totalorder %s43, 0
      %p342 = por %p340, %p341
      %p343 = scmp.ne.s32.totalorder %s331, %s332
      %p344 = scmp.eq.s32.totalorder %s44, 1
      %p345 = por %p343, %p344
      %p347 = scmp.ne.s32.totalorder %s332, %s346
      %p348 = scmp.eq.s32.totalorder %s44, 0
      %p349 = por %p347, %p348
      %s351 = sadd.s32 %s350, 1
      %p354 = scmp.eq.s32.totalorder %s38, 1
      %p355 = scmp.ne.s32.totalorder %s350, %s352
      %p356 = scmp.eq.s32.totalorder %s38, 0
      %p357 = por %p355, %p356
      %p358 = scmp.ne.s32.totalorder %s350, %s352
      %p359 = scmp.eq.s32.totalorder %s43, 1
      %p360 = por %p358, %p359
      %p361 = scmp.ne.s32.totalorder %s352, %s353
      %p362 = scmp.eq.s32.totalorder %s43, 0
      %p363 = por %p361, %p362
      %p364 = scmp.ne.s32.totalorder %s352, %s353
      %p365 = scmp.eq.s32.totalorder %s44, 1
      %p366 = por %p364, %p365
      %p368 = scmp.ne.s32.totalorder %s353, %s367
      %p369 = scmp.eq.s32.totalorder %s44, 0
      %p370 = por %p368, %p369
      %s372 = sadd.s32 %s371, 1
      %p375 = scmp.eq.s32.totalorder %s38, 1
      %p376 = scmp.ne.s32.totalorder %s371, %s373
      %p377 = scmp.eq.s32.totalorder %s38, 0
      %p378 = por %p376, %p377
      %p379 = scmp.ne.s32.totalorder %s371, %s373
      %p380 = scmp.eq.s32.totalorder %s43, 1
      %p381 = por %p379, %p380
      %p382 = scmp.ne.s32.totalorder %s373, %s374
      %p383 = scmp.eq.s32.totalorder %s43, 0
      %p384 = por %p382, %p383
      %p385 = scmp.ne.s32.totalorder %s373, %s374
      %p386 = scmp.eq.s32.totalorder %s44, 1
      %p387 = por %p385, %p386
      %p389 = scmp.ne.s32.totalorder %s374, %s388
      %p390 = scmp.eq.s32.totalorder %s44, 0
      %p391 = por %p389, %p390
      %s393 = sadd.s32 %s392, 1
      %p396 = scmp.eq.s32.totalorder %s38, 1
      %p397 = scmp.ne.s32.totalorder %s392, %s394
      %p398 = scmp.eq.s32.totalorder %s38, 0
      %p399 = por %p397, %p398
      %p400 = scmp.ne.s32.totalorder %s392, %s394
      %p401 = scmp.eq.s32.totalorder %s43, 1
      %p402 = por %p400, %p401
      %p403 = scmp.ne.s32.totalorder %s394, %s395
      %p404 = scmp.eq.s32.totalorder %s43, 0
      %p405 = por %p403, %p404
      %p406 = scmp.ne.s32.totalorder %s394, %s395
      %p407 = scmp.eq.s32.totalorder %s44, 1
      %p408 = por %p406, %p407
      %p410 = scmp.ne.s32.totalorder %s395, %s409
      %p411 = scmp.eq.s32.totalorder %s44, 0
      %p412 = por %p410, %p411
      %s414 = sadd.s32 %s413, 1
      %p417 = scmp.eq.s32.totalorder %s38, 1
      %p418 = scmp.ne.s32.totalorder %s413, %s415
      %p419 = scmp.eq.s32.totalorder %s38, 0
      %p420 = por %p418, %p419
      %p421 = scmp.ne.s32.totalorder %s413, %s415
      %p422 = scmp.eq.s32.totalorder %s43, 1
      %p423 = por %p421, %p422
      %p424 = scmp.ne.s32.totalorder %s415, %s416
      %p425 = scmp.eq.s32.totalorder %s43, 0
      %p426 = por %p424, %p425
      %p427 = scmp.ne.s32.totalorder %s415, %s416
      %p428 = scmp.eq.s32.totalorder %s44, 1
      %p429 = por %p427, %p428
      %p431 = scmp.ne.s32.totalorder %s416, %s430
      %p432 = scmp.eq.s32.totalorder %s44, 0
      %p433 = por %p431, %p432
      %s435 = sadd.s32 %s434, 1
      %p438 = scmp.eq.s32.totalorder %s38, 1
      %p439 = scmp.ne.s32.totalorder %s434, %s436
      %p440 = scmp.eq.s32.totalorder %s38, 0
      %p441 = por %p439, %p440
      %p442 = scmp.ne.s32.totalorder %s434, %s436
      %p443 = scmp.eq.s32.totalorder %s43, 1
      %p444 = por %p442, %p443
      %p445 = scmp.ne.s32.totalorder %s436, %s437
      %p446 = scmp.eq.s32.totalorder %s43, 0
      %p447 = por %p445, %p446
      %p448 = scmp.ne.s32.totalorder %s436, %s437
      %p449 = scmp.eq.s32.totalorder %s44, 1
      %p450 = por %p448, %p449
      %p452 = scmp.ne.s32.totalorder %s437, %s451
      %p453 = scmp.eq.s32.totalorder %s44, 0
      %p454 = por %p452, %p453
      %s456 = sadd.s32 %s455, 1
      %p459 = scmp.eq.s32.totalorder %s38, 1
      %p460 = scmp.ne.s32.totalorder %s455, %s457
      %p461 = scmp.eq.s32.totalorder %s38, 0
      %p462 = por %p460, %p461
      %p463 = scmp.ne.s32.totalorder %s455, %s457
      %p464 = scmp.eq.s32.totalorder %s43, 1
      %p465 = por %p463, %p464
      %p466 = scmp.ne.s32.totalorder %s457, %s458
      %p467 = scmp.eq.s32.totalorder %s43, 0
      %p468 = por %p466, %p467
      %p469 = scmp.ne.s32.totalorder %s457, %s458
      %p470 = scmp.eq.s32.totalorder %s44, 1
      %p471 = por %p469, %p470
      %p473 = scmp.ne.s32.totalorder %s458, %s472
      %p474 = scmp.eq.s32.totalorder %s44, 0
      %p475 = por %p473, %p474
      %s476 = ssub.s32 %s38, %s45
      %p477 = scmp.eq.s32.totalorder %s476, 0
      %s479 = sadd.s32 %s478, 1
      %s480 = scalar_select %p477, %s478, %s479
      %p483 = pneg %p477
      %p484 = scmp.eq.s32.totalorder %s38, 1
      %p485 = por %p483, %p484
      %p486 = scmp.ne.s32.totalorder %s478, %s481
      %p487 = scmp.eq.s32.totalorder %s38, 0
      %p488 = por %p486, %p487
      %p489 = scmp.ne.s32.totalorder %s478, %s481
      %p490 = scmp.eq.s32.totalorder %s43, 1
      %p491 = por %p489, %p490
      %p492 = scmp.ne.s32.totalorder %s481, %s482
      %p493 = scmp.eq.s32.totalorder %s43, 0
      %p494 = por %p492, %p493
      %p495 = scmp.ne.s32.totalorder %s481, %s482
      %p496 = scmp.eq.s32.totalorder %s44, 1
      %p497 = por %p495, %p496
      %p499 = scmp.ne.s32.totalorder %s482, %s498
      %p500 = scmp.eq.s32.totalorder %s44, 0
      %p501 = por %p499, %p500
      %p502 = scmp.le.s32.totalorder 1, %s38
      %p503 = scmp.lt.s32.totalorder %s38, 3
      %p504 = pnand %p502, %p503
      %p505 = pneg %p504
      // Predicated region
      $region9: #{tpu_custom_call.1} parent=5 // pred_check
        _
      $region10: #{tpu_custom_call.1} parent=5 // pred_check_branch
        %507 = sbr.rel (%p504) target = $region12
      $region11: #{tpu_custom_call.1} parent=5 // pred_region
        %s508 = ssub.s32 %s38, 1
        // Predicated region
        $region13: #{tpu_custom_call.1} parent=11 // pred_check
          %p509 = pneg %p111
        $region14: #{tpu_custom_call.1} parent=11 // pred_check_branch
          %511 = sbr.rel (%p509) target = $region16
        $region15: #{tpu_custom_call.1} parent=11 // pred_region
          _
        $region16: #{tpu_custom_call.1} parent=11 // pred_fallthru
          _
        // Predicated region
        $region17: #{tpu_custom_call.1} parent=11 // pred_check
          %p512 = pneg %p132
        $region18: #{tpu_custom_call.1} parent=11 // pred_check_branch
          %514 = sbr.rel (%p512) target = $region20
        $region19: #{tpu_custom_call.1} parent=11 // pred_region
          _
        $region20: #{tpu_custom_call.1} parent=11 // pred_fallthru
          _
        // Predicated region
        $region21: #{tpu_custom_call.1} parent=11 // pred_check
          %p515 = pneg %p153
        $region22: #{tpu_custom_call.1} parent=11 // pred_check_branch
          %517 = sbr.rel (%p515) target = $region24
        $region23: #{tpu_custom_call.1} parent=11 // pred_region
          _
        $region24: #{tpu_custom_call.1} parent=11 // pred_fallthru
          _
        // Predicated region
        $region25: #{tpu_custom_call.1} parent=11 // pred_check
          %p518 = pneg %p174
        $region26: #{tpu_custom_call.1} parent=11 // pred_check_branch
          %520 = sbr.rel (%p518) target = $region28
        $region27: #{tpu_custom_call.1} parent=11 // pred_region
          _
        $region28: #{tpu_custom_call.1} parent=11 // pred_fallthru
          _
        // Predicated region
        $region29: #{tpu_custom_call.1} parent=11 // pred_check
          %p521 = pneg %p195
        $region30: #{tpu_custom_call.1} parent=11 // pred_check_branch
          %523 = sbr.rel (%p521) target = $region32
        $region31: #{tpu_custom_call.1} parent=11 // pred_region
          _
        $region32: #{tpu_custom_call.1} parent=11 // pred_fallthru
          _
        // Predicated region
        $region33: #{tpu_custom_call.1} parent=11 // pred_check
          %p524 = pneg %p216
        $region34: #{tpu_custom_call.1} parent=11 // pred_check_branch
          %526 = sbr.rel (%p524) target = $region36
        $region35: #{tpu_custom_call.1} parent=11 // pred_region
          _
        $region36: #{tpu_custom_call.1} parent=11 // pred_fallthru
          _
        // Predicated region
        $region37: #{tpu_custom_call.1} parent=11 // pred_check
          %p527 = pneg %p237
        $region38: #{tpu_custom_call.1} parent=11 // pred_check_branch
          %529 = sbr.rel (%p527) target = $region40
        $region39: #{tpu_custom_call.1} parent=11 // pred_region
          %s531 = ssub.s32 1024, 1024
          %532 = vsyncadd [#allocation8], %s531
          %s533 = sshll.u32 [#allocation9], 4
          %s534 = int_to_ptr.vmem [resolvable:$true] %s533
          %539 = dma.hbm_to_vmem [thread:$0]  %s8, 1024, %s534, [#allocation8], 128, 128, 8
        $region40: #{tpu_custom_call.1} parent=11 // pred_fallthru
          _
        // Predicated region
        $region41: #{tpu_custom_call.1} parent=11 // pred_check
          %p540 = pneg %p258
        $region42: #{tpu_custom_call.1} parent=11 // pred_check_branch
          %542 = sbr.rel (%p540) target = $region44
        $region43: #{tpu_custom_call.1} parent=11 // pred_region
          _
        $region44: #{tpu_custom_call.1} parent=11 // pred_fallthru
          _
        // Predicated region
        $region45: #{tpu_custom_call.1} parent=11 // pred_check
          %p543 = pneg %p279
        $region46: #{tpu_custom_call.1} parent=11 // pred_check_branch
          %545 = sbr.rel (%p543) target = $region48
        $region47: #{tpu_custom_call.1} parent=11 // pred_region
          _
        $region48: #{tpu_custom_call.1} parent=11 // pred_fallthru
          _
        // Predicated region
        $region49: #{tpu_custom_call.1} parent=11 // pred_check
          %p546 = pneg %p300
        $region50: #{tpu_custom_call.1} parent=11 // pred_check_branch
          %548 = sbr.rel (%p546) target = $region52
        $region51: #{tpu_custom_call.1} parent=11 // pred_region
          _
        $region52: #{tpu_custom_call.1} parent=11 // pred_fallthru
          _
        // Predicated region
        $region53: #{tpu_custom_call.1} parent=11 // pred_check
          %p549 = pneg %p321
        $region54: #{tpu_custom_call.1} parent=11 // pred_check_branch
          %551 = sbr.rel (%p549) target = $region56
        $region55: #{tpu_custom_call.1} parent=11 // pred_region
          %s553 = ssub.s32 1024, 1024
          %554 = vsyncadd [#allocation11], %s553
          %s555 = sshll.u32 [#allocation10], 4
          %s556 = int_to_ptr.vmem [resolvable:$true] %s555
          %561 = dma.hbm_to_vmem [thread:$0]  %s12, 1024, %s556, [#allocation11], 128, 128, 8
        $region56: #{tpu_custom_call.1} parent=11 // pred_fallthru
          _
        // Predicated region
        $region57: #{tpu_custom_call.1} parent=11 // pred_check
          %p562 = pneg %p342
        $region58: #{tpu_custom_call.1} parent=11 // pred_check_branch
          %564 = sbr.rel (%p562) target = $region60
        $region59: #{tpu_custom_call.1} parent=11 // pred_region
          _
        $region60: #{tpu_custom_call.1} parent=11 // pred_fallthru
          _
        // Predicated region
        $region61: #{tpu_custom_call.1} parent=11 // pred_check
          %p565 = pneg %p363
        $region62: #{tpu_custom_call.1} parent=11 // pred_check_branch
          %567 = sbr.rel (%p565) target = $region64
        $region63: #{tpu_custom_call.1} parent=11 // pred_region
          _
        $region64: #{tpu_custom_call.1} parent=11 // pred_fallthru
          _
        // Predicated region
        $region65: #{tpu_custom_call.1} parent=11 // pred_check
          %p568 = pneg %p384
        $region66: #{tpu_custom_call.1} parent=11 // pred_check_branch
          %570 = sbr.rel (%p568) target = $region68
        $region67: #{tpu_custom_call.1} parent=11 // pred_region
          _
        $region68: #{tpu_custom_call.1} parent=11 // pred_fallthru
          _
        // Predicated region
        $region69: #{tpu_custom_call.1} parent=11 // pred_check
          %p571 = pneg %p405
        $region70: #{tpu_custom_call.1} parent=11 // pred_check_branch
          %573 = sbr.rel (%p571) target = $region72
        $region71: #{tpu_custom_call.1} parent=11 // pred_region
          _
        $region72: #{tpu_custom_call.1} parent=11 // pred_fallthru
          _
        // Predicated region
        $region73: #{tpu_custom_call.1} parent=11 // pred_check
          %p574 = pneg %p426
        $region74: #{tpu_custom_call.1} parent=11 // pred_check_branch
          %576 = sbr.rel (%p574) target = $region76
        $region75: #{tpu_custom_call.1} parent=11 // pred_region
          _
        $region76: #{tpu_custom_call.1} parent=11 // pred_fallthru
          _
        // Predicated region
        $region77: #{tpu_custom_call.1} parent=11 // pred_check
          %p577 = pneg %p447
        $region78: #{tpu_custom_call.1} parent=11 // pred_check_branch
          %579 = sbr.rel (%p577) target = $region80
        $region79: #{tpu_custom_call.1} parent=11 // pred_region
          %s581 = ssub.s32 16, 16
          %582 = vsyncadd [#allocation6], %s581
          %s584 = sshll.u32 %s18, 4
          %s585 = int_to_ptr.vmem [resolvable:$true] %s584
          %587 = dma.vmem_to_smem %s585, 16, [#allocation12], [#allocation6]
        $region80: #{tpu_custom_call.1} parent=11 // pred_fallthru
          _
        // Predicated region
        $region81: #{tpu_custom_call.1} parent=11 // pred_check
          %p588 = pneg %p468
        $region82: #{tpu_custom_call.1} parent=11 // pred_check_branch
          %590 = sbr.rel (%p588) target = $region84
        $region83: #{tpu_custom_call.1} parent=11 // pred_region
          %s592 = ssub.s32 16, 16
          %593 = vsyncadd [#allocation14], %s592
          %s595 = sshll.u32 %s19, 4
          %s596 = int_to_ptr.vmem [resolvable:$true] %s595
          %598 = dma.vmem_to_smem %s596, 16, [#allocation13], [#allocation14]
        $region84: #{tpu_custom_call.1} parent=11 // pred_fallthru
          _
      $region12: #{tpu_custom_call.1} parent=5 // pred_fallthru
        _
      %p599 = scmp.lt.s32.totalorder %s38, 2
      // Predicated region
      $region85: #{tpu_custom_call.1} parent=5 // pred_check
        %p600 = pneg %p599
      $region86: #{tpu_custom_call.1} parent=5 // pred_check_branch
        %602 = sbr.rel (%p600) target = $region88
      $region87: #{tpu_custom_call.1} parent=5 // pred_region
        // Predicated region
        $region89: #{tpu_custom_call.1} parent=87 // pred_check
          %p603 = pneg %p58
        $region90: #{tpu_custom_call.1} parent=87 // pred_check_branch
          %605 = sbr.rel (%p603) target = $region92
        $region91: #{tpu_custom_call.1} parent=87 // pred_region
          %s606 = sand.u32 %s48, 1
          %s607 = scalar_lea.sflag [#allocation4], %s606
          %s608 = sand.u32 %s48, 1
          %s609 = smul.addr %s608, 8
          %s610 = scalar_lea.vmem [#allocation3], %s609
          %s612 = ssub.s32 128, 128
          %613 = vsyncadd %s607, %s612
          %s614 = smul.addr %s38, 128
          %s615 = scalar_lea.hbm %s0, %s614
          %s617 = sshll.u32 %s610, 4
          %s618 = int_to_ptr.vmem [resolvable:$true] %s617
          %620 = dma.hbm_to_vmem [thread:$0]  %s615, 128, %s618, %s607
        $region92: #{tpu_custom_call.1} parent=87 // pred_fallthru
          _
        // Predicated region
        $region93: #{tpu_custom_call.1} parent=87 // pred_check
          %p621 = pneg %p84
        $region94: #{tpu_custom_call.1} parent=87 // pred_check_branch
          %623 = sbr.rel (%p621) target = $region96
        $region95: #{tpu_custom_call.1} parent=87 // pred_region
          %s624 = sand.u32 %s38, 1
          %s625 = scalar_lea.sflag [#allocation8], %s624
          %s626 = sand.u32 %s74, 1
          %s627 = smul.addr %s626, 8
          %s628 = scalar_lea.vmem [#allocation7], %s627
          %s630 = ssub.s32 128, 128
          %631 = vsyncadd %s625, %s630
          %s632 = smul.addr %s38, 128
          %s633 = scalar_lea.hbm %s1, %s632
          %s635 = sshll.u32 %s628, 4
          %s636 = int_to_ptr.vmem [resolvable:$true] %s635
          %638 = dma.hbm_to_vmem [thread:$0]  %s633, 128, %s636, %s625
        $region96: #{tpu_custom_call.1} parent=87 // pred_fallthru
          _
      $region88: #{tpu_custom_call.1} parent=5 // pred_fallthru
        _
      %p639 = scmp.le.s32.totalorder 1, %s38
      %p640 = scmp.lt.s32.totalorder %s38, 3
      %p641 = pnand %p639, %p640
      %p642 = pneg %p641
      // Predicated region
      $region97: #{tpu_custom_call.1} parent=5 // pred_check
        _
      $region98: #{tpu_custom_call.1} parent=5 // pred_check_branch
        %644 = sbr.rel (%p641) target = $region100
      $region99: #{tpu_custom_call.1} parent=5 // pred_region
        %s645 = ssub.s32 %s38, 1
        %s646 = sand.u32 %s51, 1
        %s647 = scalar_lea.sflag [#allocation4], %s646
        %s648 = sand.u32 %s51, 1
        %s649 = smul.addr %s648, 8
        %s650 = scalar_lea.vmem [#allocation3], %s649
        // Predicated region
        $region101: #{tpu_custom_call.1} parent=99 // pred_check
          %p651 = pneg %p64
        $region102: #{tpu_custom_call.1} parent=99 // pred_check_branch
          %653 = sbr.rel (%p651) target = $region104
        $region103: #{tpu_custom_call.1} parent=99 // pred_region
          %654 = dma.done %s647, 128
        $region104: #{tpu_custom_call.1} parent=99 // pred_fallthru
          _
        %s655 = sand.u32 %s43, 1
        %s656 = scalar_lea.sflag [#allocation8], %s655
        %s657 = sand.u32 %s77, 1
        %s658 = smul.addr %s657, 8
        %s659 = scalar_lea.vmem [#allocation7], %s658
        // Predicated region
        $region105: #{tpu_custom_call.1} parent=99 // pred_check
          %p660 = pneg %p90
        $region106: #{tpu_custom_call.1} parent=99 // pred_check_branch
          %662 = sbr.rel (%p660) target = $region108
        $region107: #{tpu_custom_call.1} parent=99 // pred_region
          %663 = dma.done %s656, 128
        $region108: #{tpu_custom_call.1} parent=99 // pred_fallthru
          _
        // Predicated region
        $region109: #{tpu_custom_call.1} parent=99 // pred_check
          %p664 = pneg %p237
        $region110: #{tpu_custom_call.1} parent=99 // pred_check_branch
          %666 = sbr.rel (%p664) target = $region112
        $region111: #{tpu_custom_call.1} parent=99 // pred_region
          %667 = dma.done [#allocation8], 1024
        $region112: #{tpu_custom_call.1} parent=99 // pred_fallthru
          _
        // Predicated region
        $region113: #{tpu_custom_call.1} parent=99 // pred_check
          %p668 = pneg %p321
        $region114: #{tpu_custom_call.1} parent=99 // pred_check_branch
          %670 = sbr.rel (%p668) target = $region116
        $region115: #{tpu_custom_call.1} parent=99 // pred_region
          %671 = dma.done [#allocation11], 1024
        $region116: #{tpu_custom_call.1} parent=99 // pred_fallthru
          _
        // Predicated region
        $region117: #{tpu_custom_call.1} parent=99 // pred_check
          %p672 = pneg %p447
        $region118: #{tpu_custom_call.1} parent=99 // pred_check_branch
          %674 = sbr.rel (%p672) target = $region120
        $region119: #{tpu_custom_call.1} parent=99 // pred_region
          %675 = dma.done [#allocation6], 16
        $region120: #{tpu_custom_call.1} parent=99 // pred_fallthru
          _
        // Predicated region
        $region121: #{tpu_custom_call.1} parent=99 // pred_check
          %p676 = pneg %p468
        $region122: #{tpu_custom_call.1} parent=99 // pred_check_branch
          %678 = sbr.rel (%p676) target = $region124
        $region123: #{tpu_custom_call.1} parent=99 // pred_region
          %679 = dma.done [#allocation14], 16
        $region124: #{tpu_custom_call.1} parent=99 // pred_fallthru
          _
        %680 = sfence
        %s681 = sand.u32 %s51, 1
        %s682 = scalar_lea.sflag [#allocation4], %s681
        %s683 = sand.u32 %s51, 1
        %s684 = smul.addr %s683, 8
        %s685 = scalar_lea.vmem [#allocation3], %s684
        %p686 = pneg %p64
        %p687 = pneg %p61
        %s688 = sand.u32 %s43, 1
        %s689 = scalar_lea.sflag [#allocation8], %s688
        %s690 = sand.u32 %s77, 1
        %s691 = smul.addr %s690, 8
        %s692 = scalar_lea.vmem [#allocation7], %s691
        %p693 = pneg %p90
        %p694 = pneg %p87
        %p695 = pneg %p111
        %p696 = pneg %p108
        %p697 = pneg %p132
        %p698 = pneg %p129
        %p699 = pneg %p153
        %p700 = pneg %p150
        %p701 = pneg %p174
        %p702 = pneg %p171
        %p703 = pneg %p195
        %p704 = pneg %p192
        %p705 = pneg %p216
        %p706 = pneg %p213
        %p707 = pneg %p237
        %p708 = pneg %p234
        %p709 = pneg %p258
        %p710 = pneg %p255
        %p711 = pneg %p279
        %p712 = pneg %p276
        %p713 = pneg %p300
        %p714 = pneg %p297
        %p715 = pneg %p321
        %p716 = pneg %p318
        %p717 = pneg %p342
        %p718 = pneg %p339
        %p719 = pneg %p363
        %p720 = pneg %p360
        %p721 = pneg %p384
        %p722 = pneg %p381
        %p723 = pneg %p405
        %p724 = pneg %p402
        %p725 = pneg %p426
        %p726 = pneg %p423
        %p727 = pneg %p447
        %p728 = pneg %p444
        %p729 = pneg %p468
        %p730 = pneg %p465
        %p731 = pneg %p494
        %p732 = pneg %p491
        %s733 = sand.u32 %s481, 1
        %s734 = scalar_lea.sflag [#allocation5], %s733
        %s735 = sand.u32 %s481, 1
        %s736 = smul.addr %s735, 8
        %s737 = scalar_lea.vmem [#allocation15], %s736
        %v738 = vld [vmem:[%s659] sm:$0xff]
        %vm739 = vcmask 261120
        %740 = vst.msk [vmem:[#allocation2] sm:$0xff] %vm739, %v738
        %v741 = vld [vmem:[%s650] sm:$0xff]
        %742 = vst.msk [vmem:[#allocation2 + $0x8] sm:$0xff] %vm739, %v741
        %v743 = vld [vmem:[#allocation2] sm:$0xff]
        %v744 = vld [vmem:[#allocation2 + $0x8] sm:$0xff]
        %v745 = vld [vmem:[%s2] sm:$0xff]
        %v746 = vld [vmem:[%s2 + $0x8] sm:$0xff]
        %v747 = vld [vmem:[%s2 + $0x10] sm:$0xff]
        %v748 = vld [vmem:[%s2 + $0x18] sm:$0xff]
        %v749 = vld [vmem:[%s3] sm:$0x1]
        %v751 = vlaneseq
        %v752 = vshrl.u32 %v751, 7
        %v753 = vsub.s32 0, %v752
        %v754 = vrot.slane %v749, %v753
        %v757 = vsel %vm739, %v741, 0
        %759 = vmatprep.subr.mxu0 0.0
        %760 = vmatpush1.msra.mxu0 %v745
        %761 = vmatprep.subr.mxu0 0.0
        %762 = vmatpush1.msra.mxu0 %v746
        %763 = vmatprep.subr.mxu0 0.0
        %764 = vmatpush1.msra.mxu0 %v747
        %765 = vmatprep.subr.mxu0 0.0
        %766 = vmatpush1.msra.mxu0 %v748
        %767 = vmatprep.subr.mxu0 0.0
        %768 = vmatpush1.msra.mxu0 0.0
        %769 = vmatprep.subr.mxu0 0.0
        %770 = vmatpush1.msra.mxu0 0.0
        %771 = vmatprep.subr.mxu0 0.0
        %772 = vmatpush1.msra.mxu0 0.0
        %773 = vmatprep.subr.mxu0 0.0
        %774 = vmatpush1.msra.mxu0 0.0
        %775 = vmatprep.subr.mxu0 0.0
        %776 = vmatpush1.msra.mxu0 0.0
        %777 = vmatprep.subr.mxu0 0.0
        %778 = vmatpush1.msra.mxu0 0.0
        %779 = vmatprep.subr.mxu0 0.0
        %780 = vmatpush1.msra.mxu0 0.0
        %781 = vmatprep.subr.mxu0 0.0
        %782 = vmatpush1.msra.mxu0 0.0
        %783 = vmatprep.subr.mxu0 0.0
        %784 = vmatpush1.msra.mxu0 0.0
        %785 = vmatprep.subr.mxu0 0.0
        %786 = vmatpush1.msra.mxu0 0.0
        %787 = vmatprep.subr.mxu0 0.0
        %788 = vmatpush1.msra.mxu0 0.0
        %789 = vmatprep.subr.mxu0 0.0
        %790 = vmatpush1.msra.mxu0 0.0
        %791 = vmatprep.subr.mxu0 0.0
        %792 = vmatpush1.msra.mxu0 0.0
        %793 = vmatprep.subr.mxu0 0.0
        %794 = vmatpush1.msra.mxu0 0.0
        %795 = vmatprep.subr.mxu0 0.0
        %796 = vmatpush1.msra.mxu0 0.0
        %797 = vmatprep.subr.mxu0 0.0
        %798 = vmatpush1.msra.mxu0 0.0
        %799 = vmatprep.subr.mxu0 0.0
        %800 = vmatpush1.msra.mxu0 0.0
        %801 = vmatprep.subr.mxu0 0.0
        %802 = vmatpush1.msra.mxu0 0.0
        %803 = vmatprep.subr.mxu0 0.0
        %804 = vmatpush1.msra.mxu0 0.0
        %805 = vmatprep.subr.mxu0 0.0
        %806 = vmatpush1.msra.mxu0 0.0
        %807 = vmatprep.subr.mxu0 0.0
        %808 = vmatpush1.msra.mxu0 0.0
        %809 = vmatprep.subr.mxu0 0.0
        %810 = vmatpush1.msra.mxu0 0.0
        %811 = vmatprep.subr.mxu0 0.0
        %812 = vmatpush1.msra.mxu0 0.0
        %813 = vmatprep.subr.mxu0 0.0
        %814 = vmatpush1.msra.mxu0 0.0
        %815 = vmatprep.subr.mxu0 0.0
        %816 = vmatpush1.msra.mxu0 0.0
        %817 = vmatprep.subr.mxu0 0.0
        %818 = vmatpush1.msra.mxu0 0.0
        %819 = vmatprep.subr.mxu0 0.0
        %820 = vmatpush1.msra.mxu0 0.0
        %821 = vmatprep.subr.mxu0 0.0
        %822 = vmatpush1.msra.mxu0 0.0
        %823 = vmatprep.mubr.f32.mxu0 0.0
        %824 = vmatmul.mubr.f32.gmra.mrb[0].mxu0 %v757
        %v825 = vpop.f32.mrb[0].mxu0
        %v826 = vadd.f32 %v754, %v825
        %v827 = vpop.f32.mrb[0].mxu0
        %828 = vdwg.mxu0
        %v829 = vld [vmem:[%s4] sm:$0xff]
        %v830 = vld [vmem:[%s4 + $0x8] sm:$0xff]
        %v831 = vld [vmem:[%s4 + $0x10] sm:$0xff]
        %v832 = vld [vmem:[%s4 + $0x18] sm:$0xff]
        %v833 = vld [vmem:[%s5] sm:$0x1]
        %v835 = vlaneseq
        %v836 = vshrl.u32 %v835, 7
        %v837 = vsub.s32 0, %v836
        %v838 = vrot.slane %v833, %v837
        %v841 = vsel %vm739, %v743, 0
        %v844 = vsel %vm739, %v744, 0
        %846 = vmatprep.subr.mxu0 0.0
        %847 = vmatpush1.msra.mxu0 %v829
        %848 = vmatprep.subr.mxu0 0.0
        %849 = vmatpush1.msra.mxu0 %v830
        %850 = vmatprep.subr.mxu0 0.0
        %851 = vmatpush1.msra.mxu0 %v831
        %852 = vmatprep.subr.mxu0 0.0
        %853 = vmatpush1.msra.mxu0 %v832
        %854 = vmatprep.subr.mxu0 0.0
        %855 = vmatpush1.msra.mxu0 0.0
        %856 = vmatprep.subr.mxu0 0.0
        %857 = vmatpush1.msra.mxu0 0.0
        %858 = vmatprep.subr.mxu0 0.0
        %859 = vmatpush1.msra.mxu0 0.0
        %860 = vmatprep.subr.mxu0 0.0
        %861 = vmatpush1.msra.mxu0 0.0
        %862 = vmatprep.subr.mxu0 0.0
        %863 = vmatpush1.msra.mxu0 0.0
        %864 = vmatprep.subr.mxu0 0.0
        %865 = vmatpush1.msra.mxu0 0.0
        %866 = vmatprep.subr.mxu0 0.0
        %867 = vmatpush1.msra.mxu0 0.0
        %868 = vmatprep.subr.mxu0 0.0
        %869 = vmatpush1.msra.mxu0 0.0
        %870 = vmatprep.subr.mxu0 0.0
        %871 = vmatpush1.msra.mxu0 0.0
        %872 = vmatprep.subr.mxu0 0.0
        %873 = vmatpush1.msra.mxu0 0.0
        %874 = vmatprep.subr.mxu0 0.0
        %875 = vmatpush1.msra.mxu0 0.0
        %876 = vmatprep.subr.mxu0 0.0
        %877 = vmatpush1.msra.mxu0 0.0
        %878 = vmatprep.subr.mxu0 0.0
        %879 = vmatpush1.msra.mxu0 0.0
        %880 = vmatprep.subr.mxu0 0.0
        %881 = vmatpush1.msra.mxu0 0.0
        %882 = vmatprep.subr.mxu0 0.0
        %883 = vmatpush1.msra.mxu0 0.0
        %884 = vmatprep.subr.mxu0 0.0
        %885 = vmatpush1.msra.mxu0 0.0
        %886 = vmatprep.subr.mxu0 0.0
        %887 = vmatpush1.msra.mxu0 0.0
        %888 = vmatprep.subr.mxu0 0.0
        %889 = vmatpush1.msra.mxu0 0.0
        %890 = vmatprep.subr.mxu0 0.0
        %891 = vmatpush1.msra.mxu0 0.0
        %892 = vmatprep.subr.mxu0 0.0
        %893 = vmatpush1.msra.mxu0 0.0
        %894 = vmatprep.subr.mxu0 0.0
        %895 = vmatpush1.msra.mxu0 0.0
        %896 = vmatprep.subr.mxu0 0.0
        %897 = vmatpush1.msra.mxu0 0.0
        %898 = vmatprep.subr.mxu0 0.0
        %899 = vmatpush1.msra.mxu0 0.0
        %900 = vmatprep.subr.mxu0 0.0
        %901 = vmatpush1.msra.mxu0 0.0
        %902 = vmatprep.subr.mxu0 0.0
        %903 = vmatpush1.msra.mxu0 0.0
        %904 = vmatprep.subr.mxu0 0.0
        %905 = vmatpush1.msra.mxu0 0.0
        %906 = vmatprep.subr.mxu0 0.0
        %907 = vmatpush1.msra.mxu0 0.0
        %908 = vmatprep.subr.mxu0 0.0
        %909 = vmatpush1.msra.mxu0 0.0
        %910 = vmatprep.mubr.f32.mxu0 0.0
        %911 = vmatmul.mubr.f32.gmra.mrb[0].mxu0 %v841
        %v912 = vpop.f32.mrb[0].mxu0
        %v913 = vadd.f32 %v838, %v912
        %v914 = vpop.f32.mrb[0].mxu0
        %915 = vmatprep.mubr.f32.mxu0 0.0
        %916 = vmatmul.mubr.f32.gmra.mrb[0].mxu0 %v844
        %v917 = vpop.f32.mrb[0].mxu0
        %v918 = vadd.f32 %v838, %v917
        %v919 = vpop.f32.mrb[0].mxu0
        %920 = vdwg.mxu0
        %v921 = vld [vmem:[%s6] sm:$0xff]
        %v922 = vld [vmem:[%s6 + $0x8] sm:$0xff]
        %v923 = vld [vmem:[%s6 + $0x10] sm:$0xff]
        %v924 = vld [vmem:[%s6 + $0x18] sm:$0xff]
        %v925 = vld [vmem:[%s7] sm:$0x1]
        %v927 = vlaneseq
        %v928 = vshrl.u32 %v927, 7
        %v929 = vsub.s32 0, %v928
        %v930 = vrot.slane %v925, %v929
        %932 = vmatprep.subr.mxu0 0.0
        %933 = vmatpush1.msra.mxu0 %v921
        %934 = vmatprep.subr.mxu0 0.0
        %935 = vmatpush1.msra.mxu0 %v922
        %936 = vmatprep.subr.mxu0 0.0
        %937 = vmatpush1.msra.mxu0 %v923
        %938 = vmatprep.subr.mxu0 0.0
        %939 = vmatpush1.msra.mxu0 %v924
        %940 = vmatprep.subr.mxu0 0.0
        %941 = vmatpush1.msra.mxu0 0.0
        %942 = vmatprep.subr.mxu0 0.0
        %943 = vmatpush1.msra.mxu0 0.0
        %944 = vmatprep.subr.mxu0 0.0
        %945 = vmatpush1.msra.mxu0 0.0
        %946 = vmatprep.subr.mxu0 0.0
        %947 = vmatpush1.msra.mxu0 0.0
        %948 = vmatprep.subr.mxu0 0.0
        %949 = vmatpush1.msra.mxu0 0.0
        %950 = vmatprep.subr.mxu0 0.0
        %951 = vmatpush1.msra.mxu0 0.0
        %952 = vmatprep.subr.mxu0 0.0
        %953 = vmatpush1.msra.mxu0 0.0
        %954 = vmatprep.subr.mxu0 0.0
        %955 = vmatpush1.msra.mxu0 0.0
        %956 = vmatprep.subr.mxu0 0.0
        %957 = vmatpush1.msra.mxu0 0.0
        %958 = vmatprep.subr.mxu0 0.0
        %959 = vmatpush1.msra.mxu0 0.0
        %960 = vmatprep.subr.mxu0 0.0
        %961 = vmatpush1.msra.mxu0 0.0
        %962 = vmatprep.subr.mxu0 0.0
        %963 = vmatpush1.msra.mxu0 0.0
        %964 = vmatprep.subr.mxu0 0.0
        %965 = vmatpush1.msra.mxu0 0.0
        %966 = vmatprep.subr.mxu0 0.0
        %967 = vmatpush1.msra.mxu0 0.0
        %968 = vmatprep.subr.mxu0 0.0
        %969 = vmatpush1.msra.mxu0 0.0
        %970 = vmatprep.subr.mxu0 0.0
        %971 = vmatpush1.msra.mxu0 0.0
        %972 = vmatprep.subr.mxu0 0.0
        %973 = vmatpush1.msra.mxu0 0.0
        %974 = vmatprep.subr.mxu0 0.0
        %975 = vmatpush1.msra.mxu0 0.0
        %976 = vmatprep.subr.mxu0 0.0
        %977 = vmatpush1.msra.mxu0 0.0
        %978 = vmatprep.subr.mxu0 0.0
        %979 = vmatpush1.msra.mxu0 0.0
        %980 = vmatprep.subr.mxu0 0.0
        %981 = vmatpush1.msra.mxu0 0.0
        %982 = vmatprep.subr.mxu0 0.0
        %983 = vmatpush1.msra.mxu0 0.0
        %984 = vmatprep.subr.mxu0 0.0
        %985 = vmatpush1.msra.mxu0 0.0
        %986 = vmatprep.subr.mxu0 0.0
        %987 = vmatpush1.msra.mxu0 0.0
        %988 = vmatprep.subr.mxu0 0.0
        %989 = vmatpush1.msra.mxu0 0.0
        %990 = vmatprep.subr.mxu0 0.0
        %991 = vmatpush1.msra.mxu0 0.0
        %992 = vmatprep.subr.mxu0 0.0
        %993 = vmatpush1.msra.mxu0 0.0
        %994 = vmatprep.subr.mxu0 0.0
        %995 = vmatpush1.msra.mxu0 0.0
        %996 = vmatprep.mubr.f32.mxu0 0.0
        %997 = vmatmul.mubr.f32.gmra.mrb[0].mxu0 %v841
        %v998 = vpop.f32.mrb[0].mxu0
        %v999 = vadd.f32 %v930, %v998
        %v1000 = vpop.f32.mrb[0].mxu0
        %1001 = vmatprep.mubr.f32.mxu0 0.0
        %1002 = vmatmul.mubr.f32.gmra.mrb[0].mxu0 %v844
        %v1003 = vpop.f32.mrb[0].mxu0
        %v1004 = vadd.f32 %v930, %v1003
        %v1005 = vpop.f32.mrb[0].mxu0
        %1006 = vdwg.mxu0
        %v1007 = vld [vmem:[#allocation9] sm:$0xff]
        %v1008 = vld [vmem:[#allocation9 + $0x8] sm:$0xff]
        %v1009 = vld [vmem:[#allocation9 + $0x10] sm:$0xff]
        %v1010 = vld [vmem:[#allocation9 + $0x18] sm:$0xff]
        %v1011 = vld [vmem:[%s9] sm:$0x1]
        %v1013 = vlaneseq
        %v1014 = vshrl.u32 %v1013, 7
        %v1015 = vsub.s32 0, %v1014
        %v1016 = vrot.slane %v1011, %v1015
        %v1018 = vadd.f32 %v1016, 0.0
        %vm1019 = vcmask 64512
        %v1021 = vsel %vm1019, %v826, 0
        %v1024 = vsel %vm1019, %v913, 0
        %v1027 = vsel %vm1019, %v918, 0
        %1029 = vmatprep.subr.mxu0 0.0
        %1030 = vmatpush1.xpose.msra.mxu0 %v1024
        %1031 = vmatprep.subr.mxu0 0.0
        %1032 = vmatpush1.xpose.msra.mxu0 %v1027
        %1033 = vmatprep.subr.mxu0 0.0
        %1034 = vmatpush1.xpose.msra.mxu0 0.0
        %1035 = vmatprep.subr.mxu0 0.0
        %1036 = vmatpush1.xpose.msra.mxu0 0.0
        %1037 = vmatprep.subr.mxu0 0.0
        %1038 = vmatpush1.xpose.msra.mxu0 0.0
        %1039 = vmatprep.subr.mxu0 0.0
        %1040 = vmatpush1.xpose.msra.mxu0 0.0
        %1041 = vmatprep.subr.mxu0 0.0
        %1042 = vmatpush1.xpose.msra.mxu0 0.0
        %1043 = vmatprep.subr.mxu0 0.0
        %1044 = vmatpush1.xpose.msra.mxu0 0.0
        %1045 = vmatprep.subr.mxu0 0.0
        %1046 = vmatpush1.xpose.msra.mxu0 0.0
        %1047 = vmatprep.subr.mxu0 0.0
        %1048 = vmatpush1.xpose.msra.mxu0 0.0
        %1049 = vmatprep.subr.mxu0 0.0
        %1050 = vmatpush1.xpose.msra.mxu0 0.0
        %1051 = vmatprep.subr.mxu0 0.0
        %1052 = vmatpush1.xpose.msra.mxu0 0.0
        %1053 = vmatprep.subr.mxu0 0.0
        %1054 = vmatpush1.xpose.msra.mxu0 0.0
        %1055 = vmatprep.subr.mxu0 0.0
        %1056 = vmatpush1.xpose.msra.mxu0 0.0
        %1057 = vmatprep.subr.mxu0 0.0
        %1058 = vmatpush1.xpose.msra.mxu0 0.0
        %1059 = vmatprep.subr.mxu0 0.0
        %1060 = vmatpush1.xpose.msra.mxu0 0.0
        %1061 = vmatprep.subr.mxu0 0.0
        %1062 = vmatpush1.xpose.msra.mxu0 0.0
        %1063 = vmatprep.subr.mxu0 0.0
        %1064 = vmatpush1.xpose.msra.mxu0 0.0
        %1065 = vmatprep.subr.mxu0 0.0
        %1066 = vmatpush1.xpose.msra.mxu0 0.0
        %1067 = vmatprep.subr.mxu0 0.0
        %1068 = vmatpush1.xpose.msra.mxu0 0.0
        %1069 = vmatprep.subr.mxu0 0.0
        %1070 = vmatpush1.xpose.msra.mxu0 0.0
        %1071 = vmatprep.subr.mxu0 0.0
        %1072 = vmatpush1.xpose.msra.mxu0 0.0
        %1073 = vmatprep.subr.mxu0 0.0
        %1074 = vmatpush1.xpose.msra.mxu0 0.0
        %1075 = vmatprep.subr.mxu0 0.0
        %1076 = vmatpush1.xpose.msra.mxu0 0.0
        %1077 = vmatprep.subr.mxu0 0.0
        %1078 = vmatpush1.xpose.msra.mxu0 0.0
        %1079 = vmatprep.subr.mxu0 0.0
        %1080 = vmatpush1.xpose.msra.mxu0 0.0
        %1081 = vmatprep.subr.mxu0 0.0
        %1082 = vmatpush1.xpose.msra.mxu0 0.0
        %1083 = vmatprep.subr.mxu0 0.0
        %1084 = vmatpush1.xpose.msra.mxu0 0.0
        %1085 = vmatprep.subr.mxu0 0.0
        %1086 = vmatpush1.xpose.msra.mxu0 0.0
        %1087 = vmatprep.subr.mxu0 0.0
        %1088 = vmatpush1.xpose.msra.mxu0 0.0
        %1089 = vmatprep.subr.mxu0 0.0
        %1090 = vmatpush1.xpose.msra.mxu0 0.0
        %1091 = vmatprep.subr.mxu0 0.0
        %1092 = vmatpush1.xpose.msra.mxu0 0.0
        %1093 = vmatprep.mubr.f32.mxu0 0.0
        %1094 = vmatmul.mubr.f32.gmra.mrb[0].mxu0 %v1021
        %v1095 = vpop.f32.mrb[0].mxu0
        %v1096 = vadd.f32 0.0, %v1095
        %v1097 = vpop.f32.mrb[0].mxu0
        %1098 = vdwg.mxu0
        %vm1099 = vcmask 130048
        %v1100 = vsel %vm1099, %v1096, -inf
        %1101 = vmax.xlane.f32.xlu0 %v1100
        %v1102 = vpop.xlane.xlu0 %1101
        %v1103 = vsub.f32 %v1096, %v1102
        %v1104 = vmul.f32 %v1103, 1.442695
        %v1105 = vpow.pop %v1104
        %v1106 = vsel %vm1099, %v1105, 0.0
        %1107 = vadd.xlane.f32.xlu0 %v1106
        %v1108 = vpop.xlane.xlu0 %1107
        %v1109 = vrcp.pop %v1108
        %v1111 = vsel %vm1099, %v1105, 0
        %1113 = vmatprep.subr.mxu0 0.0
        %1114 = vmatpush1.msra.mxu0 %v999
        %1115 = vmatprep.subr.mxu0 0.0
        %1116 = vmatpush1.msra.mxu0 %v1004
        %1117 = vmatprep.subr.mxu0 0.0
        %1118 = vmatpush1.msra.mxu0 0.0
        %1119 = vmatprep.subr.mxu0 0.0
        %1120 = vmatpush1.msra.mxu0 0.0
        %1121 = vmatprep.subr.mxu0 0.0
        %1122 = vmatpush1.msra.mxu0 0.0
        %1123 = vmatprep.subr.mxu0 0.0
        %1124 = vmatpush1.msra.mxu0 0.0
        %1125 = vmatprep.subr.mxu0 0.0
        %1126 = vmatpush1.msra.mxu0 0.0
        %1127 = vmatprep.subr.mxu0 0.0
        %1128 = vmatpush1.msra.mxu0 0.0
        %1129 = vmatprep.subr.mxu0 0.0
        %1130 = vmatpush1.msra.mxu0 0.0
        %1131 = vmatprep.subr.mxu0 0.0
        %1132 = vmatpush1.msra.mxu0 0.0
        %1133 = vmatprep.subr.mxu0 0.0
        %1134 = vmatpush1.msra.mxu0 0.0
        %1135 = vmatprep.subr.mxu0 0.0
        %1136 = vmatpush1.msra.mxu0 0.0
        %1137 = vmatprep.subr.mxu0 0.0
        %1138 = vmatpush1.msra.mxu0 0.0
        %1139 = vmatprep.subr.mxu0 0.0
        %1140 = vmatpush1.msra.mxu0 0.0
        %1141 = vmatprep.subr.mxu0 0.0
        %1142 = vmatpush1.msra.mxu0 0.0
        %1143 = vmatprep.subr.mxu0 0.0
        %1144 = vmatpush1.msra.mxu0 0.0
        %1145 = vmatprep.subr.mxu0 0.0
        %1146 = vmatpush1.msra.mxu0 0.0
        %1147 = vmatprep.subr.mxu0 0.0
        %1148 = vmatpush1.msra.mxu0 0.0
        %1149 = vmatprep.subr.mxu0 0.0
        %1150 = vmatpush1.msra.mxu0 0.0
        %1151 = vmatprep.subr.mxu0 0.0
        %1152 = vmatpush1.msra.mxu0 0.0
        %1153 = vmatprep.subr.mxu0 0.0
        %1154 = vmatpush1.msra.mxu0 0.0
        %1155 = vmatprep.subr.mxu0 0.0
        %1156 = vmatpush1.msra.mxu0 0.0
        %1157 = vmatprep.subr.mxu0 0.0
        %1158 = vmatpush1.msra.mxu0 0.0
        %1159 = vmatprep.subr.mxu0 0.0
        %1160 = vmatpush1.msra.mxu0 0.0
        %1161 = vmatprep.subr.mxu0 0.0
        %1162 = vmatpush1.msra.mxu0 0.0
        %1163 = vmatprep.subr.mxu0 0.0
        %1164 = vmatpush1.msra.mxu0 0.0
        %1165 = vmatprep.subr.mxu0 0.0
        %1166 = vmatpush1.msra.mxu0 0.0
        %1167 = vmatprep.subr.mxu0 0.0
        %1168 = vmatpush1.msra.mxu0 0.0
        %1169 = vmatprep.subr.mxu0 0.0
        %1170 = vmatpush1.msra.mxu0 0.0
        %1171 = vmatprep.subr.mxu0 0.0
        %1172 = vmatpush1.msra.mxu0 0.0
        %1173 = vmatprep.subr.mxu0 0.0
        %1174 = vmatpush1.msra.mxu0 0.0
        %1175 = vmatprep.subr.mxu0 0.0
        %1176 = vmatpush1.msra.mxu0 0.0
        %1177 = vmatprep.mubr.f32.mxu0 0.0
        %1178 = vmatmul.mubr.f32.gmra.mrb[0].mxu0 %v1111
        %v1179 = vpop.f32.mrb[0].mxu0
        %v1180 = vadd.f32 0.0, %v1179
        %v1181 = vpop.f32.mrb[0].mxu0
        %1182 = vdwg.mxu0
        %v1183 = vmul.f32 %v1180, %v1109
        %v1185 = vsel %vm1019, %v1183, 0
        %1187 = vmatprep.subr.mxu0 0.0
        %1188 = vmatpush1.msra.mxu0 %v1007
        %1189 = vmatprep.subr.mxu0 0.0
        %1190 = vmatpush1.msra.mxu0 0.0
        %1191 = vmatprep.subr.mxu0 0.0
        %1192 = vmatpush1.msra.mxu0 0.0
        %1193 = vmatprep.subr.mxu0 0.0
        %1194 = vmatpush1.msra.mxu0 0.0
        %1195 = vmatprep.subr.mxu0 0.0
        %1196 = vmatpush1.msra.mxu0 0.0
        %1197 = vmatprep.subr.mxu0 0.0
        %1198 = vmatpush1.msra.mxu0 0.0
        %1199 = vmatprep.subr.mxu0 0.0
        %1200 = vmatpush1.msra.mxu0 0.0
        %1201 = vmatprep.subr.mxu0 0.0
        %1202 = vmatpush1.msra.mxu0 0.0
        %1203 = vmatprep.subr.mxu0 0.0
        %1204 = vmatpush1.msra.mxu0 0.0
        %1205 = vmatprep.subr.mxu0 0.0
        %1206 = vmatpush1.msra.mxu0 0.0
        %1207 = vmatprep.subr.mxu0 0.0
        %1208 = vmatpush1.msra.mxu0 0.0
        %1209 = vmatprep.subr.mxu0 0.0
        %1210 = vmatpush1.msra.mxu0 0.0
        %1211 = vmatprep.subr.mxu0 0.0
        %1212 = vmatpush1.msra.mxu0 0.0
        %1213 = vmatprep.subr.mxu0 0.0
        %1214 = vmatpush1.msra.mxu0 0.0
        %1215 = vmatprep.subr.mxu0 0.0
        %1216 = vmatpush1.msra.mxu0 0.0
        %1217 = vmatprep.subr.mxu0 0.0
        %1218 = vmatpush1.msra.mxu0 0.0
        %1219 = vmatprep.subr.mxu0 0.0
        %1220 = vmatpush1.msra.mxu0 0.0
        %1221 = vmatprep.subr.mxu0 0.0
        %1222 = vmatpush1.msra.mxu0 0.0
        %1223 = vmatprep.subr.mxu0 0.0
        %1224 = vmatpush1.msra.mxu0 0.0
        %1225 = vmatprep.subr.mxu0 0.0
        %1226 = vmatpush1.msra.mxu0 0.0
        %1227 = vmatprep.subr.mxu0 0.0
        %1228 = vmatpush1.msra.mxu0 0.0
        %1229 = vmatprep.subr.mxu0 0.0
        %1230 = vmatpush1.msra.mxu0 0.0
        %1231 = vmatprep.subr.mxu0 0.0
        %1232 = vmatpush1.msra.mxu0 0.0
        %1233 = vmatprep.subr.mxu0 0.0
        %1234 = vmatpush1.msra.mxu0 0.0
        %1235 = vmatprep.subr.mxu0 0.0
        %1236 = vmatpush1.msra.mxu0 0.0
        %1237 = vmatprep.subr.mxu0 0.0
        %1238 = vmatpush1.msra.mxu0 0.0
        %1239 = vmatprep.subr.mxu0 0.0
        %1240 = vmatpush1.msra.mxu0 0.0
        %1241 = vmatprep.subr.mxu0 0.0
        %1242 = vmatpush1.msra.mxu0 0.0
        %1243 = vmatprep.subr.mxu0 0.0
        %1244 = vmatpush1.msra.mxu0 0.0
        %1245 = vmatprep.subr.mxu0 0.0
        %1246 = vmatpush1.msra.mxu0 0.0
        %1247 = vmatprep.subr.mxu0 0.0
        %1248 = vmatpush1.msra.mxu0 0.0
        %1249 = vmatprep.subr.mxu0 0.0
        %1250 = vmatpush1.msra.mxu0 0.0
        %1251 = vmatprep.mubr.f32.mxu0 0.0
        %1252 = vmatmul.mubr.f32.gmra.mrb[0].mxu0 %v1185
        %v1253 = vpop.f32.mrb[0].mxu0
        %v1254 = vadd.f32 0.0, %v1253
        %v1255 = vpop.f32.mrb[0].mxu0
        %1256 = vdwg.mxu0
        %v1257 = vadd.f32 %v1018, %v1254
        %1258 = vrot.lane.b32.xlu0 %v826, 120
        %v1259 = vpop.permute.xlu0 %1258
        %1260 = vrot.lane.b32.xlu0 %v913, 120
        %v1261 = vpop.permute.xlu0 %1260
        %1262 = vrot.lane.b32.xlu0 %v918, 120
        %v1263 = vpop.permute.xlu0 %1262
        %v1264 = vsel %vm1019, %v1259, 0
        %v1266 = vsel %vm1019, %v1261, 0
        %v1268 = vsel %vm1019, %v1263, 0
        %1270 = vmatprep.subr.mxu0 0.0
        %1271 = vmatpush1.xpose.msra.mxu0 %v1266
        %1272 = vmatprep.subr.mxu0 0.0
        %1273 = vmatpush1.xpose.msra.mxu0 %v1268
        %1274 = vmatprep.subr.mxu0 0.0
        %1275 = vmatpush1.xpose.msra.mxu0 0.0
        %1276 = vmatprep.subr.mxu0 0.0
        %1277 = vmatpush1.xpose.msra.mxu0 0.0
        %1278 = vmatprep.subr.mxu0 0.0
        %1279 = vmatpush1.xpose.msra.mxu0 0.0
        %1280 = vmatprep.subr.mxu0 0.0
        %1281 = vmatpush1.xpose.msra.mxu0 0.0
        %1282 = vmatprep.subr.mxu0 0.0
        %1283 = vmatpush1.xpose.msra.mxu0 0.0
        %1284 = vmatprep.subr.mxu0 0.0
        %1285 = vmatpush1.xpose.msra.mxu0 0.0
        %1286 = vmatprep.subr.mxu0 0.0
        %1287 = vmatpush1.xpose.msra.mxu0 0.0
        %1288 = vmatprep.subr.mxu0 0.0
        %1289 = vmatpush1.xpose.msra.mxu0 0.0
        %1290 = vmatprep.subr.mxu0 0.0
        %1291 = vmatpush1.xpose.msra.mxu0 0.0
        %1292 = vmatprep.subr.mxu0 0.0
        %1293 = vmatpush1.xpose.msra.mxu0 0.0
        %1294 = vmatprep.subr.mxu0 0.0
        %1295 = vmatpush1.xpose.msra.mxu0 0.0
        %1296 = vmatprep.subr.mxu0 0.0
        %1297 = vmatpush1.xpose.msra.mxu0 0.0
        %1298 = vmatprep.subr.mxu0 0.0
        %1299 = vmatpush1.xpose.msra.mxu0 0.0
        %1300 = vmatprep.subr.mxu0 0.0
        %1301 = vmatpush1.xpose.msra.mxu0 0.0
        %1302 = vmatprep.subr.mxu0 0.0
        %1303 = vmatpush1.xpose.msra.mxu0 0.0
        %1304 = vmatprep.subr.mxu0 0.0
        %1305 = vmatpush1.xpose.msra.mxu0 0.0
        %1306 = vmatprep.subr.mxu0 0.0
        %1307 = vmatpush1.xpose.msra.mxu0 0.0
        %1308 = vmatprep.subr.mxu0 0.0
        %1309 = vmatpush1.xpose.msra.mxu0 0.0
        %1310 = vmatprep.subr.mxu0 0.0
        %1311 = vmatpush1.xpose.msra.mxu0 0.0
        %1312 = vmatprep.subr.mxu0 0.0
        %1313 = vmatpush1.xpose.msra.mxu0 0.0
        %1314 = vmatprep.subr.mxu0 0.0
        %1315 = vmatpush1.xpose.msra.mxu0 0.0
        %1316 = vmatprep.subr.mxu0 0.0
        %1317 = vmatpush1.xpose.msra.mxu0 0.0
        %1318 = vmatprep.subr.mxu0 0.0
        %1319 = vmatpush1.xpose.msra.mxu0 0.0
        %1320 = vmatprep.subr.mxu0 0.0
        %1321 = vmatpush1.xpose.msra.mxu0 0.0
        %1322 = vmatprep.subr.mxu0 0.0
        %1323 = vmatpush1.xpose.msra.mxu0 0.0
        %1324 = vmatprep.subr.mxu0 0.0
        %1325 = vmatpush1.xpose.msra.mxu0 0.0
        %1326 = vmatprep.subr.mxu0 0.0
        %1327 = vmatpush1.xpose.msra.mxu0 0.0
        %1328 = vmatprep.subr.mxu0 0.0
        %1329 = vmatpush1.xpose.msra.mxu0 0.0
        %1330 = vmatprep.subr.mxu0 0.0
        %1331 = vmatpush1.xpose.msra.mxu0 0.0
        %1332 = vmatprep.subr.mxu0 0.0
        %1333 = vmatpush1.xpose.msra.mxu0 0.0
        %1334 = vmatprep.mubr.f32.mxu0 0.0
        %1335 = vmatmul.mubr.f32.gmra.mrb[0].mxu0 %v1264
        %v1336 = vpop.f32.mrb[0].mxu0
        %v1337 = vadd.f32 0.0, %v1336
        %v1338 = vpop.f32.mrb[0].mxu0
        %1339 = vdwg.mxu0
        %v1340 = vsel %vm1099, %v1337, -inf
        %1341 = vmax.xlane.f32.xlu0 %v1340
        %v1342 = vpop.xlane.xlu0 %1341
        %v1343 = vsub.f32 %v1337, %v1342
        %v1344 = vmul.f32 %v1343, 1.442695
        %v1345 = vpow.pop %v1344
        %v1346 = vsel %vm1099, %v1345, 0.0
        %1347 = vadd.xlane.f32.xlu0 %v1346
        %v1348 = vpop.xlane.xlu0 %1347
        %v1349 = vrcp.pop %v1348
        %1352 = vrot.lane.b32.xlu0 %v999, 120
        %v1353 = vpop.permute.xlu0 %1352
        %1354 = vrot.lane.b32.xlu0 %v1004, 120
        %v1355 = vpop.permute.xlu0 %1354
        %v1359 = vsel %vm1099, %v1345, 0
        %1361 = vmatprep.subr.mxu0 0.0
        %1362 = vmatpush1.msra.mxu0 %v1353
        %1363 = vmatprep.subr.mxu0 0.0
        %1364 = vmatpush1.msra.mxu0 %v1355
        %1365 = vmatprep.subr.mxu0 0.0
        %1366 = vmatpush1.msra.mxu0 0.0
        %1367 = vmatprep.subr.mxu0 0.0
        %1368 = vmatpush1.msra.mxu0 0.0
        %1369 = vmatprep.subr.mxu0 0.0
        %1370 = vmatpush1.msra.mxu0 0.0
        %1371 = vmatprep.subr.mxu0 0.0
        %1372 = vmatpush1.msra.mxu0 0.0
        %1373 = vmatprep.subr.mxu0 0.0
        %1374 = vmatpush1.msra.mxu0 0.0
        %1375 = vmatprep.subr.mxu0 0.0
        %1376 = vmatpush1.msra.mxu0 0.0
        %1377 = vmatprep.subr.mxu0 0.0
        %1378 = vmatpush1.msra.mxu0 0.0
        %1379 = vmatprep.subr.mxu0 0.0
        %1380 = vmatpush1.msra.mxu0 0.0
        %1381 = vmatprep.subr.mxu0 0.0
        %1382 = vmatpush1.msra.mxu0 0.0
        %1383 = vmatprep.subr.mxu0 0.0
        %1384 = vmatpush1.msra.mxu0 0.0
        %1385 = vmatprep.subr.mxu0 0.0
        %1386 = vmatpush1.msra.mxu0 0.0
        %1387 = vmatprep.subr.mxu0 0.0
        %1388 = vmatpush1.msra.mxu0 0.0
        %1389 = vmatprep.subr.mxu0 0.0
        %1390 = vmatpush1.msra.mxu0 0.0
        %1391 = vmatprep.subr.mxu0 0.0
        %1392 = vmatpush1.msra.mxu0 0.0
        %1393 = vmatprep.subr.mxu0 0.0
        %1394 = vmatpush1.msra.mxu0 0.0
        %1395 = vmatprep.subr.mxu0 0.0
        %1396 = vmatpush1.msra.mxu0 0.0
        %1397 = vmatprep.subr.mxu0 0.0
        %1398 = vmatpush1.msra.mxu0 0.0
        %1399 = vmatprep.subr.mxu0 0.0
        %1400 = vmatpush1.msra.mxu0 0.0
        %1401 = vmatprep.subr.mxu0 0.0
        %1402 = vmatpush1.msra.mxu0 0.0
        %1403 = vmatprep.subr.mxu0 0.0
        %1404 = vmatpush1.msra.mxu0 0.0
        %1405 = vmatprep.subr.mxu0 0.0
        %1406 = vmatpush1.msra.mxu0 0.0
        %1407 = vmatprep.subr.mxu0 0.0
        %1408 = vmatpush1.msra.mxu0 0.0
        %1409 = vmatprep.subr.mxu0 0.0
        %1410 = vmatpush1.msra.mxu0 0.0
        %1411 = vmatprep.subr.mxu0 0.0
        %1412 = vmatpush1.msra.mxu0 0.0
        %1413 = vmatprep.subr.mxu0 0.0
        %1414 = vmatpush1.msra.mxu0 0.0
        %1415 = vmatprep.subr.mxu0 0.0
        %1416 = vmatpush1.msra.mxu0 0.0
        %1417 = vmatprep.subr.mxu0 0.0
        %1418 = vmatpush1.msra.mxu0 0.0
        %1419 = vmatprep.subr.mxu0 0.0
        %1420 = vmatpush1.msra.mxu0 0.0
        %1421 = vmatprep.subr.mxu0 0.0
        %1422 = vmatpush1.msra.mxu0 0.0
        %1423 = vmatprep.subr.mxu0 0.0
        %1424 = vmatpush1.msra.mxu0 0.0
        %1425 = vmatprep.mubr.f32.mxu0 0.0
        %1426 = vmatmul.mubr.f32.gmra.mrb[0].mxu0 %v1359
        %v1427 = vpop.f32.mrb[0].mxu0
        %v1428 = vadd.f32 0.0, %v1427
        %v1429 = vpop.f32.mrb[0].mxu0
        %1430 = vdwg.mxu0
        %v1431 = vmul.f32 %v1428, %v1349
        %v1433 = vsel %vm1019, %v1431, 0
        %1435 = vmatprep.subr.mxu0 0.0
        %1436 = vmatpush1.msra.mxu0 %v1008
        %1437 = vmatprep.subr.mxu0 0.0
        %1438 = vmatpush1.msra.mxu0 0.0
        %1439 = vmatprep.subr.mxu0 0.0
        %1440 = vmatpush1.msra.mxu0 0.0
        %1441 = vmatprep.subr.mxu0 0.0
        %1442 = vmatpush1.msra.mxu0 0.0
        %1443 = vmatprep.subr.mxu0 0.0
        %1444 = vmatpush1.msra.mxu0 0.0
        %1445 = vmatprep.subr.mxu0 0.0
        %1446 = vmatpush1.msra.mxu0 0.0
        %1447 = vmatprep.subr.mxu0 0.0
        %1448 = vmatpush1.msra.mxu0 0.0
        %1449 = vmatprep.subr.mxu0 0.0
        %1450 = vmatpush1.msra.mxu0 0.0
        %1451 = vmatprep.subr.mxu0 0.0
        %1452 = vmatpush1.msra.mxu0 0.0
        %1453 = vmatprep.subr.mxu0 0.0
        %1454 = vmatpush1.msra.mxu0 0.0
        %1455 = vmatprep.subr.mxu0 0.0
        %1456 = vmatpush1.msra.mxu0 0.0
        %1457 = vmatprep.subr.mxu0 0.0
        %1458 = vmatpush1.msra.mxu0 0.0
        %1459 = vmatprep.subr.mxu0 0.0
        %1460 = vmatpush1.msra.mxu0 0.0
        %1461 = vmatprep.subr.mxu0 0.0
        %1462 = vmatpush1.msra.mxu0 0.0
        %1463 = vmatprep.subr.mxu0 0.0
        %1464 = vmatpush1.msra.mxu0 0.0
        %1465 = vmatprep.subr.mxu0 0.0
        %1466 = vmatpush1.msra.mxu0 0.0
        %1467 = vmatprep.subr.mxu0 0.0
        %1468 = vmatpush1.msra.mxu0 0.0
        %1469 = vmatprep.subr.mxu0 0.0
        %1470 = vmatpush1.msra.mxu0 0.0
        %1471 = vmatprep.subr.mxu0 0.0
        %1472 = vmatpush1.msra.mxu0 0.0
        %1473 = vmatprep.subr.mxu0 0.0
        %1474 = vmatpush1.msra.mxu0 0.0
        %1475 = vmatprep.subr.mxu0 0.0
        %1476 = vmatpush1.msra.mxu0 0.0
        %1477 = vmatprep.subr.mxu0 0.0
        %1478 = vmatpush1.msra.mxu0 0.0
        %1479 = vmatprep.subr.mxu0 0.0
        %1480 = vmatpush1.msra.mxu0 0.0
        %1481 = vmatprep.subr.mxu0 0.0
        %1482 = vmatpush1.msra.mxu0 0.0
        %1483 = vmatprep.subr.mxu0 0.0
        %1484 = vmatpush1.msra.mxu0 0.0
        %1485 = vmatprep.subr.mxu0 0.0
        %1486 = vmatpush1.msra.mxu0 0.0
        %1487 = vmatprep.subr.mxu0 0.0
        %1488 = vmatpush1.msra.mxu0 0.0
        %1489 = vmatprep.subr.mxu0 0.0
        %1490 = vmatpush1.msra.mxu0 0.0
        %1491 = vmatprep.subr.mxu0 0.0
        %1492 = vmatpush1.msra.mxu0 0.0
        %1493 = vmatprep.subr.mxu0 0.0
        %1494 = vmatpush1.msra.mxu0 0.0
        %1495 = vmatprep.subr.mxu0 0.0
        %1496 = vmatpush1.msra.mxu0 0.0
        %1497 = vmatprep.subr.mxu0 0.0
        %1498 = vmatpush1.msra.mxu0 0.0
        %1499 = vmatprep.mubr.f32.mxu0 0.0
        %1500 = vmatmul.mubr.f32.gmra.mrb[0].mxu0 %v1433
        %v1501 = vpop.f32.mrb[0].mxu0
        %v1502 = vadd.f32 0.0, %v1501
        %v1503 = vpop.f32.mrb[0].mxu0
        %1504 = vdwg.mxu0
        %v1505 = vadd.f32 %v1257, %v1502
        %1506 = vrot.lane.b32.xlu0 %v826, 112
        %v1507 = vpop.permute.xlu0 %1506
        %1508 = vrot.lane.b32.xlu0 %v913, 112
        %v1509 = vpop.permute.xlu0 %1508
        %1510 = vrot.lane.b32.xlu0 %v918, 112
        %v1511 = vpop.permute.xlu0 %1510
        %v1512 = vsel %vm1019, %v1507, 0
        %v1514 = vsel %vm1019, %v1509, 0
        %v1516 = vsel %vm1019, %v1511, 0
        %1518 = vmatprep.subr.mxu0 0.0
        %1519 = vmatpush1.xpose.msra.mxu0 %v1514
        %1520 = vmatprep.subr.mxu0 0.0
        %1521 = vmatpush1.xpose.msra.mxu0 %v1516
        %1522 = vmatprep.subr.mxu0 0.0
        %1523 = vmatpush1.xpose.msra.mxu0 0.0
        %1524 = vmatprep.subr.mxu0 0.0
        %1525 = vmatpush1.xpose.msra.mxu0 0.0
        %1526 = vmatprep.subr.mxu0 0.0
        %1527 = vmatpush1.xpose.msra.mxu0 0.0
        %1528 = vmatprep.subr.mxu0 0.0
        %1529 = vmatpush1.xpose.msra.mxu0 0.0
        %1530 = vmatprep.subr.mxu0 0.0
        %1531 = vmatpush1.xpose.msra.mxu0 0.0
        %1532 = vmatprep.subr.mxu0 0.0
        %1533 = vmatpush1.xpose.msra.mxu0 0.0
        %1534 = vmatprep.subr.mxu0 0.0
        %1535 = vmatpush1.xpose.msra.mxu0 0.0
        %1536 = vmatprep.subr.mxu0 0.0
        %1537 = vmatpush1.xpose.msra.mxu0 0.0
        %1538 = vmatprep.subr.mxu0 0.0
        %1539 = vmatpush1.xpose.msra.mxu0 0.0
        %1540 = vmatprep.subr.mxu0 0.0
        %1541 = vmatpush1.xpose.msra.mxu0 0.0
        %1542 = vmatprep.subr.mxu0 0.0
        %1543 = vmatpush1.xpose.msra.mxu0 0.0
        %1544 = vmatprep.subr.mxu0 0.0
        %1545 = vmatpush1.xpose.msra.mxu0 0.0
        %1546 = vmatprep.subr.mxu0 0.0
        %1547 = vmatpush1.xpose.msra.mxu0 0.0
        %1548 = vmatprep.subr.mxu0 0.0
        %1549 = vmatpush1.xpose.msra.mxu0 0.0
        %1550 = vmatprep.subr.mxu0 0.0
        %1551 = vmatpush1.xpose.msra.mxu0 0.0
        %1552 = vmatprep.subr.mxu0 0.0
        %1553 = vmatpush1.xpose.msra.mxu0 0.0
        %1554 = vmatprep.subr.mxu0 0.0
        %1555 = vmatpush1.xpose.msra.mxu0 0.0
        %1556 = vmatprep.subr.mxu0 0.0
        %1557 = vmatpush1.xpose.msra.mxu0 0.0
        %1558 = vmatprep.subr.mxu0 0.0
        %1559 = vmatpush1.xpose.msra.mxu0 0.0
        %1560 = vmatprep.subr.mxu0 0.0
        %1561 = vmatpush1.xpose.msra.mxu0 0.0
        %1562 = vmatprep.subr.mxu0 0.0
        %1563 = vmatpush1.xpose.msra.mxu0 0.0
        %1564 = vmatprep.subr.mxu0 0.0
        %1565 = vmatpush1.xpose.msra.mxu0 0.0
        %1566 = vmatprep.subr.mxu0 0.0
        %1567 = vmatpush1.xpose.msra.mxu0 0.0
        %1568 = vmatprep.subr.mxu0 0.0
        %1569 = vmatpush1.xpose.msra.mxu0 0.0
        %1570 = vmatprep.subr.mxu0 0.0
        %1571 = vmatpush1.xpose.msra.mxu0 0.0
        %1572 = vmatprep.subr.mxu0 0.0
        %1573 = vmatpush1.xpose.msra.mxu0 0.0
        %1574 = vmatprep.subr.mxu0 0.0
        %1575 = vmatpush1.xpose.msra.mxu0 0.0
        %1576 = vmatprep.subr.mxu0 0.0
        %1577 = vmatpush1.xpose.msra.mxu0 0.0
        %1578 = vmatprep.subr.mxu0 0.0
        %1579 = vmatpush1.xpose.msra.mxu0 0.0
        %1580 = vmatprep.subr.mxu0 0.0
        %1581 = vmatpush1.xpose.msra.mxu0 0.0
        %1582 = vmatprep.mubr.f32.mxu0 0.0
        %1583 = vmatmul.mubr.f32.gmra.mrb[0].mxu0 %v1512
        %v1584 = vpop.f32.mrb[0].mxu0
        %v1585 = vadd.f32 0.0, %v1584
        %v1586 = vpop.f32.mrb[0].mxu0
        %1587 = vdwg.mxu0
        %v1588 = vsel %vm1099, %v1585, -inf
        %1589 = vmax.xlane.f32.xlu0 %v1588
        %v1590 = vpop.xlane.xlu0 %1589
        %v1591 = vsub.f32 %v1585, %v1590
        %v1592 = vmul.f32 %v1591, 1.442695
        %v1593 = vpow.pop %v1592
        %v1594 = vsel %vm1099, %v1593, 0.0
        %1595 = vadd.xlane.f32.xlu0 %v1594
        %v1596 = vpop.xlane.xlu0 %1595
        %v1597 = vrcp.pop %v1596
        %1598 = vrot.lane.b32.xlu0 %v999, 112
        %v1599 = vpop.permute.xlu0 %1598
        %1600 = vrot.lane.b32.xlu0 %v1004, 112
        %v1601 = vpop.permute.xlu0 %1600
        %v1605 = vsel %vm1099, %v1593, 0
        %1607 = vmatprep.subr.mxu0 0.0
        %1608 = vmatpush1.msra.mxu0 %v1599
        %1609 = vmatprep.subr.mxu0 0.0
        %1610 = vmatpush1.msra.mxu0 %v1601
        %1611 = vmatprep.subr.mxu0 0.0
        %1612 = vmatpush1.msra.mxu0 0.0
        %1613 = vmatprep.subr.mxu0 0.0
        %1614 = vmatpush1.msra.mxu0 0.0
        %1615 = vmatprep.subr.mxu0 0.0
        %1616 = vmatpush1.msra.mxu0 0.0
        %1617 = vmatprep.subr.mxu0 0.0
        %1618 = vmatpush1.msra.mxu0 0.0
        %1619 = vmatprep.subr.mxu0 0.0
        %1620 = vmatpush1.msra.mxu0 0.0
        %1621 = vmatprep.subr.mxu0 0.0
        %1622 = vmatpush1.msra.mxu0 0.0
        %1623 = vmatprep.subr.mxu0 0.0
        %1624 = vmatpush1.msra.mxu0 0.0
        %1625 = vmatprep.subr.mxu0 0.0
        %1626 = vmatpush1.msra.mxu0 0.0
        %1627 = vmatprep.subr.mxu0 0.0
        %1628 = vmatpush1.msra.mxu0 0.0
        %1629 = vmatprep.subr.mxu0 0.0
        %1630 = vmatpush1.msra.mxu0 0.0
        %1631 = vmatprep.subr.mxu0 0.0
        %1632 = vmatpush1.msra.mxu0 0.0
        %1633 = vmatprep.subr.mxu0 0.0
        %1634 = vmatpush1.msra.mxu0 0.0
        %1635 = vmatprep.subr.mxu0 0.0
        %1636 = vmatpush1.msra.mxu0 0.0
        %1637 = vmatprep.subr.mxu0 0.0
        %1638 = vmatpush1.msra.mxu0 0.0
        %1639 = vmatprep.subr.mxu0 0.0
        %1640 = vmatpush1.msra.mxu0 0.0
        %1641 = vmatprep.subr.mxu0 0.0
        %1642 = vmatpush1.msra.mxu0 0.0
        %1643 = vmatprep.subr.mxu0 0.0
        %1644 = vmatpush1.msra.mxu0 0.0
        %1645 = vmatprep.subr.mxu0 0.0
        %1646 = vmatpush1.msra.mxu0 0.0
        %1647 = vmatprep.subr.mxu0 0.0
        %1648 = vmatpush1.msra.mxu0 0.0
        %1649 = vmatprep.subr.mxu0 0.0
        %1650 = vmatpush1.msra.mxu0 0.0
        %1651 = vmatprep.subr.mxu0 0.0
        %1652 = vmatpush1.msra.mxu0 0.0
        %1653 = vmatprep.subr.mxu0 0.0
        %1654 = vmatpush1.msra.mxu0 0.0
        %1655 = vmatprep.subr.mxu0 0.0
        %1656 = vmatpush1.msra.mxu0 0.0
        %1657 = vmatprep.subr.mxu0 0.0
        %1658 = vmatpush1.msra.mxu0 0.0
        %1659 = vmatprep.subr.mxu0 0.0
        %1660 = vmatpush1.msra.mxu0 0.0
        %1661 = vmatprep.subr.mxu0 0.0
        %1662 = vmatpush1.msra.mxu0 0.0
        %1663 = vmatprep.subr.mxu0 0.0
        %1664 = vmatpush1.msra.mxu0 0.0
        %1665 = vmatprep.subr.mxu0 0.0
        %1666 = vmatpush1.msra.mxu0 0.0
        %1667 = vmatprep.subr.mxu0 0.0
        %1668 = vmatpush1.msra.mxu0 0.0
        %1669 = vmatprep.subr.mxu0 0.0
        %1670 = vmatpush1.msra.mxu0 0.0
        %1671 = vmatprep.mubr.f32.mxu0 0.0
        %1672 = vmatmul.mubr.f32.gmra.mrb[0].mxu0 %v1605
        %v1673 = vpop.f32.mrb[0].mxu0
        %v1674 = vadd.f32 0.0, %v1673
        %v1675 = vpop.f32.mrb[0].mxu0
        %1676 = vdwg.mxu0
        %v1677 = vmul.f32 %v1674, %v1597
        %v1679 = vsel %vm1019, %v1677, 0
        %1681 = vmatprep.subr.mxu0 0.0
        %1682 = vmatpush1.msra.mxu0 %v1009
        %1683 = vmatprep.subr.mxu0 0.0
        %1684 = vmatpush1.msra.mxu0 0.0
        %1685 = vmatprep.subr.mxu0 0.0
        %1686 = vmatpush1.msra.mxu0 0.0
        %1687 = vmatprep.subr.mxu0 0.0
        %1688 = vmatpush1.msra.mxu0 0.0
        %1689 = vmatprep.subr.mxu0 0.0
        %1690 = vmatpush1.msra.mxu0 0.0
        %1691 = vmatprep.subr.mxu0 0.0
        %1692 = vmatpush1.msra.mxu0 0.0
        %1693 = vmatprep.subr.mxu0 0.0
        %1694 = vmatpush1.msra.mxu0 0.0
        %1695 = vmatprep.subr.mxu0 0.0
        %1696 = vmatpush1.msra.mxu0 0.0
        %1697 = vmatprep.subr.mxu0 0.0
        %1698 = vmatpush1.msra.mxu0 0.0
        %1699 = vmatprep.subr.mxu0 0.0
        %1700 = vmatpush1.msra.mxu0 0.0
        %1701 = vmatprep.subr.mxu0 0.0
        %1702 = vmatpush1.msra.mxu0 0.0
        %1703 = vmatprep.subr.mxu0 0.0
        %1704 = vmatpush1.msra.mxu0 0.0
        %1705 = vmatprep.subr.mxu0 0.0
        %1706 = vmatpush1.msra.mxu0 0.0
        %1707 = vmatprep.subr.mxu0 0.0
        %1708 = vmatpush1.msra.mxu0 0.0
        %1709 = vmatprep.subr.mxu0 0.0
        %1710 = vmatpush1.msra.mxu0 0.0
        %1711 = vmatprep.subr.mxu0 0.0
        %1712 = vmatpush1.msra.mxu0 0.0
        %1713 = vmatprep.subr.mxu0 0.0
        %1714 = vmatpush1.msra.mxu0 0.0
        %1715 = vmatprep.subr.mxu0 0.0
        %1716 = vmatpush1.msra.mxu0 0.0
        %1717 = vmatprep.subr.mxu0 0.0
        %1718 = vmatpush1.msra.mxu0 0.0
        %1719 = vmatprep.subr.mxu0 0.0
        %1720 = vmatpush1.msra.mxu0 0.0
        %1721 = vmatprep.subr.mxu0 0.0
        %1722 = vmatpush1.msra.mxu0 0.0
        %1723 = vmatprep.subr.mxu0 0.0
        %1724 = vmatpush1.msra.mxu0 0.0
        %1725 = vmatprep.subr.mxu0 0.0
        %1726 = vmatpush1.msra.mxu0 0.0
        %1727 = vmatprep.subr.mxu0 0.0
        %1728 = vmatpush1.msra.mxu0 0.0
        %1729 = vmatprep.subr.mxu0 0.0
        %1730 = vmatpush1.msra.mxu0 0.0
        %1731 = vmatprep.subr.mxu0 0.0
        %1732 = vmatpush1.msra.mxu0 0.0
        %1733 = vmatprep.subr.mxu0 0.0
        %1734 = vmatpush1.msra.mxu0 0.0
        %1735 = vmatprep.subr.mxu0 0.0
        %1736 = vmatpush1.msra.mxu0 0.0
        %1737 = vmatprep.subr.mxu0 0.0
        %1738 = vmatpush1.msra.mxu0 0.0
        %1739 = vmatprep.subr.mxu0 0.0
        %1740 = vmatpush1.msra.mxu0 0.0
        %1741 = vmatprep.subr.mxu0 0.0
        %1742 = vmatpush1.msra.mxu0 0.0
        %1743 = vmatprep.subr.mxu0 0.0
        %1744 = vmatpush1.msra.mxu0 0.0
        %1745 = vmatprep.mubr.f32.mxu0 0.0
        %1746 = vmatmul.mubr.f32.gmra.mrb[0].mxu0 %v1679
        %v1747 = vpop.f32.mrb[0].mxu0
        %v1748 = vadd.f32 0.0, %v1747
        %v1749 = vpop.f32.mrb[0].mxu0
        %1750 = vdwg.mxu0
        %v1751 = vadd.f32 %v1505, %v1748
        %1752 = vrot.lane.b32.xlu0 %v826, 104
        %v1753 = vpop.permute.xlu0 %1752
        %1754 = vrot.lane.b32.xlu0 %v913, 104
        %v1755 = vpop.permute.xlu0 %1754
        %1756 = vrot.lane.b32.xlu0 %v918, 104
        %v1757 = vpop.permute.xlu0 %1756
        %v1758 = vsel %vm1019, %v1753, 0
        %v1760 = vsel %vm1019, %v1755, 0
        %v1762 = vsel %vm1019, %v1757, 0
        %1764 = vmatprep.subr.mxu0 0.0
        %1765 = vmatpush1.xpose.msra.mxu0 %v1760
        %1766 = vmatprep.subr.mxu0 0.0
        %1767 = vmatpush1.xpose.msra.mxu0 %v1762
        %1768 = vmatprep.subr.mxu0 0.0
        %1769 = vmatpush1.xpose.msra.mxu0 0.0
        %1770 = vmatprep.subr.mxu0 0.0
        %1771 = vmatpush1.xpose.msra.mxu0 0.0
        %1772 = vmatprep.subr.mxu0 0.0
        %1773 = vmatpush1.xpose.msra.mxu0 0.0
        %1774 = vmatprep.subr.mxu0 0.0
        %1775 = vmatpush1.xpose.msra.mxu0 0.0
        %1776 = vmatprep.subr.mxu0 0.0
        %1777 = vmatpush1.xpose.msra.mxu0 0.0
        %1778 = vmatprep.subr.mxu0 0.0
        %1779 = vmatpush1.xpose.msra.mxu0 0.0
        %1780 = vmatprep.subr.mxu0 0.0
        %1781 = vmatpush1.xpose.msra.mxu0 0.0
        %1782 = vmatprep.subr.mxu0 0.0
        %1783 = vmatpush1.xpose.msra.mxu0 0.0
        %1784 = vmatprep.subr.mxu0 0.0
        %1785 = vmatpush1.xpose.msra.mxu0 0.0
        %1786 = vmatprep.subr.mxu0 0.0
        %1787 = vmatpush1.xpose.msra.mxu0 0.0
        %1788 = vmatprep.subr.mxu0 0.0
        %1789 = vmatpush1.xpose.msra.mxu0 0.0
        %1790 = vmatprep.subr.mxu0 0.0
        %1791 = vmatpush1.xpose.msra.mxu0 0.0
        %1792 = vmatprep.subr.mxu0 0.0
        %1793 = vmatpush1.xpose.msra.mxu0 0.0
        %1794 = vmatprep.subr.mxu0 0.0
        %1795 = vmatpush1.xpose.msra.mxu0 0.0
        %1796 = vmatprep.subr.mxu0 0.0
        %1797 = vmatpush1.xpose.msra.mxu0 0.0
        %1798 = vmatprep.subr.mxu0 0.0
        %1799 = vmatpush1.xpose.msra.mxu0 0.0
        %1800 = vmatprep.subr.mxu0 0.0
        %1801 = vmatpush1.xpose.msra.mxu0 0.0
        %1802 = vmatprep.subr.mxu0 0.0
        %1803 = vmatpush1.xpose.msra.mxu0 0.0
        %1804 = vmatprep.subr.mxu0 0.0
        %1805 = vmatpush1.xpose.msra.mxu0 0.0
        %1806 = vmatprep.subr.mxu0 0.0
        %1807 = vmatpush1.xpose.msra.mxu0 0.0
        %1808 = vmatprep.subr.mxu0 0.0
        %1809 = vmatpush1.xpose.msra.mxu0 0.0
        %1810 = vmatprep.subr.mxu0 0.0
        %1811 = vmatpush1.xpose.msra.mxu0 0.0
        %1812 = vmatprep.subr.mxu0 0.0
        %1813 = vmatpush1.xpose.msra.mxu0 0.0
        %1814 = vmatprep.subr.mxu0 0.0
        %1815 = vmatpush1.xpose.msra.mxu0 0.0
        %1816 = vmatprep.subr.mxu0 0.0
        %1817 = vmatpush1.xpose.msra.mxu0 0.0
        %1818 = vmatprep.subr.mxu0 0.0
        %1819 = vmatpush1.xpose.msra.mxu0 0.0
        %1820 = vmatprep.subr.mxu0 0.0
        %1821 = vmatpush1.xpose.msra.mxu0 0.0
        %1822 = vmatprep.subr.mxu0 0.0
        %1823 = vmatpush1.xpose.msra.mxu0 0.0
        %1824 = vmatprep.subr.mxu0 0.0
        %1825 = vmatpush1.xpose.msra.mxu0 0.0
        %1826 = vmatprep.subr.mxu0 0.0
        %1827 = vmatpush1.xpose.msra.mxu0 0.0
        %1828 = vmatprep.mubr.f32.mxu0 0.0
        %1829 = vmatmul.mubr.f32.gmra.mrb[0].mxu0 %v1758
        %v1830 = vpop.f32.mrb[0].mxu0
        %v1831 = vadd.f32 0.0, %v1830
        %v1832 = vpop.f32.mrb[0].mxu0
        %1833 = vdwg.mxu0
        %v1834 = vsel %vm1099, %v1831, -inf
        %1835 = vmax.xlane.f32.xlu0 %v1834
        %v1836 = vpop.xlane.xlu0 %1835
        %v1837 = vsub.f32 %v1831, %v1836
        %v1838 = vmul.f32 %v1837, 1.442695
        %v1839 = vpow.pop %v1838
        %v1840 = vsel %vm1099, %v1839, 0.0
        %1841 = vadd.xlane.f32.xlu0 %v1840
        %v1842 = vpop.xlane.xlu0 %1841
        %v1843 = vrcp.pop %v1842
        %1844 = vrot.lane.b32.xlu0 %v999, 104
        %v1845 = vpop.permute.xlu0 %1844
        %1846 = vrot.lane.b32.xlu0 %v1004, 104
        %v1847 = vpop.permute.xlu0 %1846
        %v1851 = vsel %vm1099, %v1839, 0
        %1853 = vmatprep.subr.mxu0 0.0
        %1854 = vmatpush1.msra.mxu0 %v1845
        %1855 = vmatprep.subr.mxu0 0.0
        %1856 = vmatpush1.msra.mxu0 %v1847
        %1857 = vmatprep.subr.mxu0 0.0
        %1858 = vmatpush1.msra.mxu0 0.0
        %1859 = vmatprep.subr.mxu0 0.0
        %1860 = vmatpush1.msra.mxu0 0.0
        %1861 = vmatprep.subr.mxu0 0.0
        %1862 = vmatpush1.msra.mxu0 0.0
        %1863 = vmatprep.subr.mxu0 0.0
        %1864 = vmatpush1.msra.mxu0 0.0
        %1865 = vmatprep.subr.mxu0 0.0
        %1866 = vmatpush1.msra.mxu0 0.0
        %1867 = vmatprep.subr.mxu0 0.0
        %1868 = vmatpush1.msra.mxu0 0.0
        %1869 = vmatprep.subr.mxu0 0.0
        %1870 = vmatpush1.msra.mxu0 0.0
        %1871 = vmatprep.subr.mxu0 0.0
        %1872 = vmatpush1.msra.mxu0 0.0
        %1873 = vmatprep.subr.mxu0 0.0
        %1874 = vmatpush1.msra.mxu0 0.0
        %1875 = vmatprep.subr.mxu0 0.0
        %1876 = vmatpush1.msra.mxu0 0.0
        %1877 = vmatprep.subr.mxu0 0.0
        %1878 = vmatpush1.msra.mxu0 0.0
        %1879 = vmatprep.subr.mxu0 0.0
        %1880 = vmatpush1.msra.mxu0 0.0
        %1881 = vmatprep.subr.mxu0 0.0
        %1882 = vmatpush1.msra.mxu0 0.0
        %1883 = vmatprep.subr.mxu0 0.0
        %1884 = vmatpush1.msra.mxu0 0.0
        %1885 = vmatprep.subr.mxu0 0.0
        %1886 = vmatpush1.msra.mxu0 0.0
        %1887 = vmatprep.subr.mxu0 0.0
        %1888 = vmatpush1.msra.mxu0 0.0
        %1889 = vmatprep.subr.mxu0 0.0
        %1890 = vmatpush1.msra.mxu0 0.0
        %1891 = vmatprep.subr.mxu0 0.0
        %1892 = vmatpush1.msra.mxu0 0.0
        %1893 = vmatprep.subr.mxu0 0.0
        %1894 = vmatpush1.msra.mxu0 0.0
        %1895 = vmatprep.subr.mxu0 0.0
        %1896 = vmatpush1.msra.mxu0 0.0
        %1897 = vmatprep.subr.mxu0 0.0
        %1898 = vmatpush1.msra.mxu0 0.0
        %1899 = vmatprep.subr.mxu0 0.0
        %1900 = vmatpush1.msra.mxu0 0.0
        %1901 = vmatprep.subr.mxu0 0.0
        %1902 = vmatpush1.msra.mxu0 0.0
        %1903 = vmatprep.subr.mxu0 0.0
        %1904 = vmatpush1.msra.mxu0 0.0
        %1905 = vmatprep.subr.mxu0 0.0
        %1906 = vmatpush1.msra.mxu0 0.0
        %1907 = vmatprep.subr.mxu0 0.0
        %1908 = vmatpush1.msra.mxu0 0.0
        %1909 = vmatprep.subr.mxu0 0.0
        %1910 = vmatpush1.msra.mxu0 0.0
        %1911 = vmatprep.subr.mxu0 0.0
        %1912 = vmatpush1.msra.mxu0 0.0
        %1913 = vmatprep.subr.mxu0 0.0
        %1914 = vmatpush1.msra.mxu0 0.0
        %1915 = vmatprep.subr.mxu0 0.0
        %1916 = vmatpush1.msra.mxu0 0.0
        %1917 = vmatprep.mubr.f32.mxu0 0.0
        %1918 = vmatmul.mubr.f32.gmra.mrb[0].mxu0 %v1851
        %v1919 = vpop.f32.mrb[0].mxu0
        %v1920 = vadd.f32 0.0, %v1919
        %v1921 = vpop.f32.mrb[0].mxu0
        %1922 = vdwg.mxu0
        %v1923 = vmul.f32 %v1920, %v1843
        %v1925 = vsel %vm1019, %v1923, 0
        %1927 = vmatprep.subr.mxu0 0.0
        %1928 = vmatpush1.msra.mxu0 %v1010
        %1929 = vmatprep.subr.mxu0 0.0
        %1930 = vmatpush1.msra.mxu0 0.0
        %1931 = vmatprep.subr.mxu0 0.0
        %1932 = vmatpush1.msra.mxu0 0.0
        %1933 = vmatprep.subr.mxu0 0.0
        %1934 = vmatpush1.msra.mxu0 0.0
        %1935 = vmatprep.subr.mxu0 0.0
        %1936 = vmatpush1.msra.mxu0 0.0
        %1937 = vmatprep.subr.mxu0 0.0
        %1938 = vmatpush1.msra.mxu0 0.0
        %1939 = vmatprep.subr.mxu0 0.0
        %1940 = vmatpush1.msra.mxu0 0.0
        %1941 = vmatprep.subr.mxu0 0.0
        %1942 = vmatpush1.msra.mxu0 0.0
        %1943 = vmatprep.subr.mxu0 0.0
        %1944 = vmatpush1.msra.mxu0 0.0
        %1945 = vmatprep.subr.mxu0 0.0
        %1946 = vmatpush1.msra.mxu0 0.0
        %1947 = vmatprep.subr.mxu0 0.0
        %1948 = vmatpush1.msra.mxu0 0.0
        %1949 = vmatprep.subr.mxu0 0.0
        %1950 = vmatpush1.msra.mxu0 0.0
        %1951 = vmatprep.subr.mxu0 0.0
        %1952 = vmatpush1.msra.mxu0 0.0
        %1953 = vmatprep.subr.mxu0 0.0
        %1954 = vmatpush1.msra.mxu0 0.0
        %1955 = vmatprep.subr.mxu0 0.0
        %1956 = vmatpush1.msra.mxu0 0.0
        %1957 = vmatprep.subr.mxu0 0.0
        %1958 = vmatpush1.msra.mxu0 0.0
        %1959 = vmatprep.subr.mxu0 0.0
        %1960 = vmatpush1.msra.mxu0 0.0
        %1961 = vmatprep.subr.mxu0 0.0
        %1962 = vmatpush1.msra.mxu0 0.0
        %1963 = vmatprep.subr.mxu0 0.0
        %1964 = vmatpush1.msra.mxu0 0.0
        %1965 = vmatprep.subr.mxu0 0.0
        %1966 = vmatpush1.msra.mxu0 0.0
        %1967 = vmatprep.subr.mxu0 0.0
        %1968 = vmatpush1.msra.mxu0 0.0
        %1969 = vmatprep.subr.mxu0 0.0
        %1970 = vmatpush1.msra.mxu0 0.0
        %1971 = vmatprep.subr.mxu0 0.0
        %1972 = vmatpush1.msra.mxu0 0.0
        %1973 = vmatprep.subr.mxu0 0.0
        %1974 = vmatpush1.msra.mxu0 0.0
        %1975 = vmatprep.subr.mxu0 0.0
        %1976 = vmatpush1.msra.mxu0 0.0
        %1977 = vmatprep.subr.mxu0 0.0
        %1978 = vmatpush1.msra.mxu0 0.0
        %1979 = vmatprep.subr.mxu0 0.0
        %1980 = vmatpush1.msra.mxu0 0.0
        %1981 = vmatprep.subr.mxu0 0.0
        %1982 = vmatpush1.msra.mxu0 0.0
        %1983 = vmatprep.subr.mxu0 0.0
        %1984 = vmatpush1.msra.mxu0 0.0
        %1985 = vmatprep.subr.mxu0 0.0
        %1986 = vmatpush1.msra.mxu0 0.0
        %1987 = vmatprep.subr.mxu0 0.0
        %1988 = vmatpush1.msra.mxu0 0.0
        %1989 = vmatprep.subr.mxu0 0.0
        %1990 = vmatpush1.msra.mxu0 0.0
        %1991 = vmatprep.mubr.f32.mxu0 0.0
        %1992 = vmatmul.mubr.f32.gmra.mrb[0].mxu0 %v1925
        %v1993 = vpop.f32.mrb[0].mxu0
        %v1994 = vadd.f32 0.0, %v1993
        %v1995 = vpop.f32.mrb[0].mxu0
        %1996 = vdwg.mxu0
        %v1997 = vadd.f32 %v1751, %v1994
        %s1998 = sld [smem:[#allocation12]]
        %v1999 = vstv %s1998
        %v2000 = vmul.f32 %v1999, %v1997
        %v2001 = vadd.f32 %v741, %v2000
        %v2002 = vld [vmem:[%s10] sm:$0x1]
        %v2003 = vld [vmem:[%s11] sm:$0x1]
        %v2004 = vsel %vm739, %v2001, 0.0
        %2005 = vadd.xlane.f32.xlu0 %v2004
        %v2006 = vpop.xlane.xlu0 %2005
        %v2007 = vrcp.pop 32.0
        %v2008 = vmul.f32 %v2006, %v2007
        %v2009 = vsub.f32 %v2001, %v2008
        %v2010 = vmul.f32 %v2009, %v2009
        %v2011 = vsel %vm739, %v2010, 0.0
        %2012 = vadd.xlane.f32.xlu0 %v2011
        %v2013 = vpop.xlane.xlu0 %2012
        %v2014 = vmul.f32 %v2013, %v2007
        %v2015 = vadd.f32 %v2014, 1e-05
        %v2016 = vrsqrt.pop %v2015
        %v2017 = vmul.f32 %v2009, %v2016
        %v2019 = vlaneseq
        %v2020 = vshrl.u32 %v2019, 7
        %v2021 = vsub.s32 0, %v2020
        %v2022 = vrot.slane %v2002, %v2021
        %v2024 = vmul.f32 %v2017, %v2022
        %v2026 = vlaneseq
        %v2027 = vshrl.u32 %v2026, 7
        %v2028 = vsub.s32 0, %v2027
        %v2029 = vrot.slane %v2003, %v2028
        %v2031 = vadd.f32 %v2024, %v2029
        %v2032 = vld [vmem:[#allocation10] sm:$0xff]
        %v2033 = vld [vmem:[#allocation10 + $0x8] sm:$0xff]
        %v2034 = vld [vmem:[#allocation10 + $0x10] sm:$0xff]
        %v2035 = vld [vmem:[#allocation10 + $0x18] sm:$0xff]
        %v2036 = vld [vmem:[%s13] sm:$0x1]
        %v2038 = vlaneseq
        %v2039 = vshrl.u32 %v2038, 7
        %v2040 = vsub.s32 0, %v2039
        %v2041 = vrot.slane %v2036, %v2040
        %v2044 = vsel %vm739, %v2031, 0
        %2046 = vmatprep.subr.mxu0 0.0
        %2047 = vmatpush1.msra.mxu0 %v2032
        %2048 = vmatprep.subr.mxu0 0.0
        %2049 = vmatpush1.msra.mxu0 %v2033
        %2050 = vmatprep.subr.mxu0 0.0
        %2051 = vmatpush1.msra.mxu0 %v2034
        %2052 = vmatprep.subr.mxu0 0.0
        %2053 = vmatpush1.msra.mxu0 %v2035
        %2054 = vmatprep.subr.mxu0 0.0
        %2055 = vmatpush1.msra.mxu0 0.0
        %2056 = vmatprep.subr.mxu0 0.0
        %2057 = vmatpush1.msra.mxu0 0.0
        %2058 = vmatprep.subr.mxu0 0.0
        %2059 = vmatpush1.msra.mxu0 0.0
        %2060 = vmatprep.subr.mxu0 0.0
        %2061 = vmatpush1.msra.mxu0 0.0
        %2062 = vmatprep.subr.mxu0 0.0
        %2063 = vmatpush1.msra.mxu0 0.0
        %2064 = vmatprep.subr.mxu0 0.0
        %2065 = vmatpush1.msra.mxu0 0.0
        %2066 = vmatprep.subr.mxu0 0.0
        %2067 = vmatpush1.msra.mxu0 0.0
        %2068 = vmatprep.subr.mxu0 0.0
        %2069 = vmatpush1.msra.mxu0 0.0
        %2070 = vmatprep.subr.mxu0 0.0
        %2071 = vmatpush1.msra.mxu0 0.0
        %2072 = vmatprep.subr.mxu0 0.0
        %2073 = vmatpush1.msra.mxu0 0.0
        %2074 = vmatprep.subr.mxu0 0.0
        %2075 = vmatpush1.msra.mxu0 0.0
        %2076 = vmatprep.subr.mxu0 0.0
        %2077 = vmatpush1.msra.mxu0 0.0
        %2078 = vmatprep.subr.mxu0 0.0
        %2079 = vmatpush1.msra.mxu0 0.0
        %2080 = vmatprep.subr.mxu0 0.0
        %2081 = vmatpush1.msra.mxu0 0.0
        %2082 = vmatprep.subr.mxu0 0.0
        %2083 = vmatpush1.msra.mxu0 0.0
        %2084 = vmatprep.subr.mxu0 0.0
        %2085 = vmatpush1.msra.mxu0 0.0
        %2086 = vmatprep.subr.mxu0 0.0
        %2087 = vmatpush1.msra.mxu0 0.0
        %2088 = vmatprep.subr.mxu0 0.0
        %2089 = vmatpush1.msra.mxu0 0.0
        %2090 = vmatprep.subr.mxu0 0.0
        %2091 = vmatpush1.msra.mxu0 0.0
        %2092 = vmatprep.subr.mxu0 0.0
        %2093 = vmatpush1.msra.mxu0 0.0
        %2094 = vmatprep.subr.mxu0 0.0
        %2095 = vmatpush1.msra.mxu0 0.0
        %2096 = vmatprep.subr.mxu0 0.0
        %2097 = vmatpush1.msra.mxu0 0.0
        %2098 = vmatprep.subr.mxu0 0.0
        %2099 = vmatpush1.msra.mxu0 0.0
        %2100 = vmatprep.subr.mxu0 0.0
        %2101 = vmatpush1.msra.mxu0 0.0
        %2102 = vmatprep.subr.mxu0 0.0
        %2103 = vmatpush1.msra.mxu0 0.0
        %2104 = vmatprep.subr.mxu0 0.0
        %2105 = vmatpush1.msra.mxu0 0.0
        %2106 = vmatprep.subr.mxu0 0.0
        %2107 = vmatpush1.msra.mxu0 0.0
        %2108 = vmatprep.subr.mxu0 0.0
        %2109 = vmatpush1.msra.mxu0 0.0
        %2110 = vmatprep.mubr.f32.mxu0 0.0
        %2111 = vmatmul.mubr.f32.gmra.mrb[0].mxu0 %v2044
        %v2112 = vpop.f32.mrb[0].mxu0
        %v2113 = vadd.f32 %v2041, %v2112
        %v2114 = vpop.f32.mrb[0].mxu0
        %2115 = vdwg.mxu0
        %v2116 = vmul.f32 %v2113, 0.5
        %v2117 = vmul.f32 %v2113, 0.044715
        %v2118 = vmul.f32 %v2117, %v2113
        %v2119 = vmul.f32 %v2118, %v2113
        %v2120 = vadd.f32 %v2113, %v2119
        %v2121 = vmul.f32 %v2120, 0.7978846
        %v2122 = vtanh.pop %v2121
        %v2123 = vadd.f32 %v2122, 1.0
        %v2124 = vmul.f32 %v2116, %v2123
        %v2125 = vld [vmem:[%s14] sm:$0xff]
        %v2126 = vld [vmem:[%s14 + $0x8] sm:$0xff]
        %v2127 = vld [vmem:[%s14 + $0x10] sm:$0xff]
        %v2128 = vld [vmem:[%s14 + $0x18] sm:$0xff]
        %v2129 = vld [vmem:[%s14 + $0x20] sm:$0xff]
        %v2130 = vld [vmem:[%s14 + $0x28] sm:$0xff]
        %v2131 = vld [vmem:[%s14 + $0x30] sm:$0xff]
        %v2132 = vld [vmem:[%s14 + $0x38] sm:$0xff]
        %v2133 = vld [vmem:[%s15] sm:$0x1]
        %v2135 = vlaneseq
        %v2136 = vshrl.u32 %v2135, 7
        %v2137 = vsub.s32 0, %v2136
        %v2138 = vrot.slane %v2133, %v2137
        %vm2140 = vcmask 523264
        %v2142 = vsel %vm2140, %v2124, 0
        %2144 = vmatprep.subr.mxu0 0.0
        %2145 = vmatpush1.msra.mxu0 %v2125
        %2146 = vmatprep.subr.mxu0 0.0
        %2147 = vmatpush1.msra.mxu0 %v2126
        %2148 = vmatprep.subr.mxu0 0.0
        %2149 = vmatpush1.msra.mxu0 %v2127
        %2150 = vmatprep.subr.mxu0 0.0
        %2151 = vmatpush1.msra.mxu0 %v2128
        %2152 = vmatprep.subr.mxu0 0.0
        %2153 = vmatpush1.msra.mxu0 %v2129
        %2154 = vmatprep.subr.mxu0 0.0
        %2155 = vmatpush1.msra.mxu0 %v2130
        %2156 = vmatprep.subr.mxu0 0.0
        %2157 = vmatpush1.msra.mxu0 %v2131
        %2158 = vmatprep.subr.mxu0 0.0
        %2159 = vmatpush1.msra.mxu0 %v2132
        %2160 = vmatprep.subr.mxu0 0.0
        %2161 = vmatpush1.msra.mxu0 0.0
        %2162 = vmatprep.subr.mxu0 0.0
        %2163 = vmatpush1.msra.mxu0 0.0
        %2164 = vmatprep.subr.mxu0 0.0
        %2165 = vmatpush1.msra.mxu0 0.0
        %2166 = vmatprep.subr.mxu0 0.0
        %2167 = vmatpush1.msra.mxu0 0.0
        %2168 = vmatprep.subr.mxu0 0.0
        %2169 = vmatpush1.msra.mxu0 0.0
        %2170 = vmatprep.subr.mxu0 0.0
        %2171 = vmatpush1.msra.mxu0 0.0
        %2172 = vmatprep.subr.mxu0 0.0
        %2173 = vmatpush1.msra.mxu0 0.0
        %2174 = vmatprep.subr.mxu0 0.0
        %2175 = vmatpush1.msra.mxu0 0.0
        %2176 = vmatprep.subr.mxu0 0.0
        %2177 = vmatpush1.msra.mxu0 0.0
        %2178 = vmatprep.subr.mxu0 0.0
        %2179 = vmatpush1.msra.mxu0 0.0
        %2180 = vmatprep.subr.mxu0 0.0
        %2181 = vmatpush1.msra.mxu0 0.0
        %2182 = vmatprep.subr.mxu0 0.0
        %2183 = vmatpush1.msra.mxu0 0.0
        %2184 = vmatprep.subr.mxu0 0.0
        %2185 = vmatpush1.msra.mxu0 0.0
        %2186 = vmatprep.subr.mxu0 0.0
        %2187 = vmatpush1.msra.mxu0 0.0
        %2188 = vmatprep.subr.mxu0 0.0
        %2189 = vmatpush1.msra.mxu0 0.0
        %2190 = vmatprep.subr.mxu0 0.0
        %2191 = vmatpush1.msra.mxu0 0.0
        %2192 = vmatprep.subr.mxu0 0.0
        %2193 = vmatpush1.msra.mxu0 0.0
        %2194 = vmatprep.subr.mxu0 0.0
        %2195 = vmatpush1.msra.mxu0 0.0
        %2196 = vmatprep.subr.mxu0 0.0
        %2197 = vmatpush1.msra.mxu0 0.0
        %2198 = vmatprep.subr.mxu0 0.0
        %2199 = vmatpush1.msra.mxu0 0.0
        %2200 = vmatprep.subr.mxu0 0.0
        %2201 = vmatpush1.msra.mxu0 0.0
        %2202 = vmatprep.subr.mxu0 0.0
        %2203 = vmatpush1.msra.mxu0 0.0
        %2204 = vmatprep.subr.mxu0 0.0
        %2205 = vmatpush1.msra.mxu0 0.0
        %2206 = vmatprep.subr.mxu0 0.0
        %2207 = vmatpush1.msra.mxu0 0.0
        %2208 = vmatprep.mubr.f32.mxu0 0.0
        %2209 = vmatmul.mubr.f32.gmra.mrb[0].mxu0 %v2142
        %v2210 = vpop.f32.mrb[0].mxu0
        %v2211 = vadd.f32 %v2138, %v2210
        %v2212 = vpop.f32.mrb[0].mxu0
        %2213 = vdwg.mxu0
        %s2214 = sld [smem:[#allocation13]]
        %v2215 = vstv %s2214
        %v2216 = vmul.f32 %v2215, %v2211
        %v2217 = vadd.f32 %v2031, %v2216
        %v2218 = vld [vmem:[%s16] sm:$0x1]
        %v2219 = vld [vmem:[%s17] sm:$0x1]
        %v2220 = vsel %vm739, %v2217, 0.0
        %2221 = vadd.xlane.f32.xlu0 %v2220
        %v2222 = vpop.xlane.xlu0 %2221
        %v2223 = vmul.f32 %v2222, %v2007
        %v2224 = vsub.f32 %v2217, %v2223
        %v2225 = vmul.f32 %v2224, %v2224
        %v2226 = vsel %vm739, %v2225, 0.0
        %2227 = vadd.xlane.f32.xlu0 %v2226
        %v2228 = vpop.xlane.xlu0 %2227
        %v2229 = vmul.f32 %v2228, %v2007
        %v2230 = vadd.f32 %v2229, 1e-05
        %v2231 = vrsqrt.pop %v2230
        %v2232 = vmul.f32 %v2224, %v2231
        %v2234 = vlaneseq
        %v2235 = vshrl.u32 %v2234, 7
        %v2236 = vsub.s32 0, %v2235
        %v2237 = vrot.slane %v2218, %v2236
        %v2239 = vmul.f32 %v2232, %v2237
        %v2241 = vlaneseq
        %v2242 = vshrl.u32 %v2241, 7
        %v2243 = vsub.s32 0, %v2242
        %v2244 = vrot.slane %v2219, %v2243
        %v2246 = vadd.f32 %v2239, %v2244
        %2247 = vst.msk [vmem:[#allocation2 + $0x8] sm:$0xff] %vm739, %v2246
        %v2248 = vld [vmem:[#allocation2] sm:$0xff]
        %v2249 = vld [vmem:[#allocation2 + $0x8] sm:$0xff]
        %s2250 = scalar_lea.vmem %s2, 32
        %v2251 = vld [vmem:[%s2250] sm:$0xff]
        %v2252 = vld [vmem:[%s2250 + $0x8] sm:$0xff]
        %v2253 = vld [vmem:[%s2250 + $0x10] sm:$0xff]
        %v2254 = vld [vmem:[%s2250 + $0x18] sm:$0xff]
        %s2255 = scalar_lea.vmem %s3, 1
        %v2256 = vld [vmem:[%s2255] sm:$0x1]
        %v2258 = vlaneseq
        %v2259 = vshrl.u32 %v2258, 7
        %v2260 = vsub.s32 0, %v2259
        %v2261 = vrot.slane %v2256, %v2260
        %v2264 = vsel %vm739, %v2246, 0
        %2266 = vmatprep.subr.mxu0 0.0
        %2267 = vmatpush1.msra.mxu0 %v2251
        %2268 = vmatprep.subr.mxu0 0.0
        %2269 = vmatpush1.msra.mxu0 %v2252
        %2270 = vmatprep.subr.mxu0 0.0
        %2271 = vmatpush1.msra.mxu0 %v2253
        %2272 = vmatprep.subr.mxu0 0.0
        %2273 = vmatpush1.msra.mxu0 %v2254
        %2274 = vmatprep.subr.mxu0 0.0
        %2275 = vmatpush1.msra.mxu0 0.0
        %2276 = vmatprep.subr.mxu0 0.0
        %2277 = vmatpush1.msra.mxu0 0.0
        %2278 = vmatprep.subr.mxu0 0.0
        %2279 = vmatpush1.msra.mxu0 0.0
        %2280 = vmatprep.subr.mxu0 0.0
        %2281 = vmatpush1.msra.mxu0 0.0
        %2282 = vmatprep.subr.mxu0 0.0
        %2283 = vmatpush1.msra.mxu0 0.0
        %2284 = vmatprep.subr.mxu0 0.0
        %2285 = vmatpush1.msra.mxu0 0.0
        %2286 = vmatprep.subr.mxu0 0.0
        %2287 = vmatpush1.msra.mxu0 0.0
        %2288 = vmatprep.subr.mxu0 0.0
        %2289 = vmatpush1.msra.mxu0 0.0
        %2290 = vmatprep.subr.mxu0 0.0
        %2291 = vmatpush1.msra.mxu0 0.0
        %2292 = vmatprep.subr.mxu0 0.0
        %2293 = vmatpush1.msra.mxu0 0.0
        %2294 = vmatprep.subr.mxu0 0.0
        %2295 = vmatpush1.msra.mxu0 0.0
        %2296 = vmatprep.subr.mxu0 0.0
        %2297 = vmatpush1.msra.mxu0 0.0
        %2298 = vmatprep.subr.mxu0 0.0
        %2299 = vmatpush1.msra.mxu0 0.0
        %2300 = vmatprep.subr.mxu0 0.0
        %2301 = vmatpush1.msra.mxu0 0.0
        %2302 = vmatprep.subr.mxu0 0.0
        %2303 = vmatpush1.msra.mxu0 0.0
        %2304 = vmatprep.subr.mxu0 0.0
        %2305 = vmatpush1.msra.mxu0 0.0
        %2306 = vmatprep.subr.mxu0 0.0
        %2307 = vmatpush1.msra.mxu0 0.0
        %2308 = vmatprep.subr.mxu0 0.0
        %2309 = vmatpush1.msra.mxu0 0.0
        %2310 = vmatprep.subr.mxu0 0.0
        %2311 = vmatpush1.msra.mxu0 0.0
        %2312 = vmatprep.subr.mxu0 0.0
        %2313 = vmatpush1.msra.mxu0 0.0
        %2314 = vmatprep.subr.mxu0 0.0
        %2315 = vmatpush1.msra.mxu0 0.0
        %2316 = vmatprep.subr.mxu0 0.0
        %2317 = vmatpush1.msra.mxu0 0.0
        %2318 = vmatprep.subr.mxu0 0.0
        %2319 = vmatpush1.msra.mxu0 0.0
        %2320 = vmatprep.subr.mxu0 0.0
        %2321 = vmatpush1.msra.mxu0 0.0
        %2322 = vmatprep.subr.mxu0 0.0
        %2323 = vmatpush1.msra.mxu0 0.0
        %2324 = vmatprep.subr.mxu0 0.0
        %2325 = vmatpush1.msra.mxu0 0.0
        %2326 = vmatprep.subr.mxu0 0.0
        %2327 = vmatpush1.msra.mxu0 0.0
        %2328 = vmatprep.subr.mxu0 0.0
        %2329 = vmatpush1.msra.mxu0 0.0
        %2330 = vmatprep.mubr.f32.mxu0 0.0
        %2331 = vmatmul.mubr.f32.gmra.mrb[0].mxu0 %v2264
        %v2332 = vpop.f32.mrb[0].mxu0
        %v2333 = vadd.f32 %v2261, %v2332
        %v2334 = vpop.f32.mrb[0].mxu0
        %2335 = vdwg.mxu0
        %s2336 = scalar_lea.vmem %s4, 32
        %v2337 = vld [vmem:[%s2336] sm:$0xff]
        %v2338 = vld [vmem:[%s2336 + $0x8] sm:$0xff]
        %v2339 = vld [vmem:[%s2336 + $0x10] sm:$0xff]
        %v2340 = vld [vmem:[%s2336 + $0x18] sm:$0xff]
        %s2341 = scalar_lea.vmem %s5, 1
        %v2342 = vld [vmem:[%s2341] sm:$0x1]
        %v2344 = vlaneseq
        %v2345 = vshrl.u32 %v2344, 7
        %v2346 = vsub.s32 0, %v2345
        %v2347 = vrot.slane %v2342, %v2346
        %v2350 = vsel %vm739, %v2248, 0
        %v2353 = vsel %vm739, %v2249, 0
        %2355 = vmatprep.subr.mxu0 0.0
        %2356 = vmatpush1.msra.mxu0 %v2337
        %2357 = vmatprep.subr.mxu0 0.0
        %2358 = vmatpush1.msra.mxu0 %v2338
        %2359 = vmatprep.subr.mxu0 0.0
        %2360 = vmatpush1.msra.mxu0 %v2339
        %2361 = vmatprep.subr.mxu0 0.0
        %2362 = vmatpush1.msra.mxu0 %v2340
        %2363 = vmatprep.subr.mxu0 0.0
        %2364 = vmatpush1.msra.mxu0 0.0
        %2365 = vmatprep.subr.mxu0 0.0
        %2366 = vmatpush1.msra.mxu0 0.0
        %2367 = vmatprep.subr.mxu0 0.0
        %2368 = vmatpush1.msra.mxu0 0.0
        %2369 = vmatprep.subr.mxu0 0.0
        %2370 = vmatpush1.msra.mxu0 0.0
        %2371 = vmatprep.subr.mxu0 0.0
        %2372 = vmatpush1.msra.mxu0 0.0
        %2373 = vmatprep.subr.mxu0 0.0
        %2374 = vmatpush1.msra.mxu0 0.0
        %2375 = vmatprep.subr.mxu0 0.0
        %2376 = vmatpush1.msra.mxu0 0.0
        %2377 = vmatprep.subr.mxu0 0.0
        %2378 = vmatpush1.msra.mxu0 0.0
        %2379 = vmatprep.subr.mxu0 0.0
        %2380 = vmatpush1.msra.mxu0 0.0
        %2381 = vmatprep.subr.mxu0 0.0
        %2382 = vmatpush1.msra.mxu0 0.0
        %2383 = vmatprep.subr.mxu0 0.0
        %2384 = vmatpush1.msra.mxu0 0.0
        %2385 = vmatprep.subr.mxu0 0.0
        %2386 = vmatpush1.msra.mxu0 0.0
        %2387 = vmatprep.subr.mxu0 0.0
        %2388 = vmatpush1.msra.mxu0 0.0
        %2389 = vmatprep.subr.mxu0 0.0
        %2390 = vmatpush1.msra.mxu0 0.0
        %2391 = vmatprep.subr.mxu0 0.0
        %2392 = vmatpush1.msra.mxu0 0.0
        %2393 = vmatprep.subr.mxu0 0.0
        %2394 = vmatpush1.msra.mxu0 0.0
        %2395 = vmatprep.subr.mxu0 0.0
        %2396 = vmatpush1.msra.mxu0 0.0
        %2397 = vmatprep.subr.mxu0 0.0
        %2398 = vmatpush1.msra.mxu0 0.0
        %2399 = vmatprep.subr.mxu0 0.0
        %2400 = vmatpush1.msra.mxu0 0.0
        %2401 = vmatprep.subr.mxu0 0.0
        %2402 = vmatpush1.msra.mxu0 0.0
        %2403 = vmatprep.subr.mxu0 0.0
        %2404 = vmatpush1.msra.mxu0 0.0
        %2405 = vmatprep.subr.mxu0 0.0
        %2406 = vmatpush1.msra.mxu0 0.0
        %2407 = vmatprep.subr.mxu0 0.0
        %2408 = vmatpush1.msra.mxu0 0.0
        %2409 = vmatprep.subr.mxu0 0.0
        %2410 = vmatpush1.msra.mxu0 0.0
        %2411 = vmatprep.subr.mxu0 0.0
        %2412 = vmatpush1.msra.mxu0 0.0
        %2413 = vmatprep.subr.mxu0 0.0
        %2414 = vmatpush1.msra.mxu0 0.0
        %2415 = vmatprep.subr.mxu0 0.0
        %2416 = vmatpush1.msra.mxu0 0.0
        %2417 = vmatprep.subr.mxu0 0.0
        %2418 = vmatpush1.msra.mxu0 0.0
        %2419 = vmatprep.mubr.f32.mxu0 0.0
        %2420 = vmatmul.mubr.f32.gmra.mrb[0].mxu0 %v2350
        %v2421 = vpop.f32.mrb[0].mxu0
        %v2422 = vadd.f32 %v2347, %v2421
        %v2423 = vpop.f32.mrb[0].mxu0
        %2424 = vmatprep.mubr.f32.mxu0 0.0
        %2425 = vmatmul.mubr.f32.gmra.mrb[0].mxu0 %v2353
        %v2426 = vpop.f32.mrb[0].mxu0
        %v2427 = vadd.f32 %v2347, %v2426
        %v2428 = vpop.f32.mrb[0].mxu0
        %2429 = vdwg.mxu0
        %s2430 = scalar_lea.vmem %s6, 32
        %v2431 = vld [vmem:[%s2430] sm:$0xff]
        %v2432 = vld [vmem:[%s2430 + $0x8] sm:$0xff]
        %v2433 = vld [vmem:[%s2430 + $0x10] sm:$0xff]
        %v2434 = vld [vmem:[%s2430 + $0x18] sm:$0xff]
        %s2435 = scalar_lea.vmem %s7, 1
        %v2436 = vld [vmem:[%s2435] sm:$0x1]
        %v2438 = vlaneseq
        %v2439 = vshrl.u32 %v2438, 7
        %v2440 = vsub.s32 0, %v2439
        %v2441 = vrot.slane %v2436, %v2440
        %2443 = vmatprep.subr.mxu0 0.0
        %2444 = vmatpush1.msra.mxu0 %v2431
        %2445 = vmatprep.subr.mxu0 0.0
        %2446 = vmatpush1.msra.mxu0 %v2432
        %2447 = vmatprep.subr.mxu0 0.0
        %2448 = vmatpush1.msra.mxu0 %v2433
        %2449 = vmatprep.subr.mxu0 0.0
        %2450 = vmatpush1.msra.mxu0 %v2434
        %2451 = vmatprep.subr.mxu0 0.0
        %2452 = vmatpush1.msra.mxu0 0.0
        %2453 = vmatprep.subr.mxu0 0.0
        %2454 = vmatpush1.msra.mxu0 0.0
        %2455 = vmatprep.subr.mxu0 0.0
        %2456 = vmatpush1.msra.mxu0 0.0
        %2457 = vmatprep.subr.mxu0 0.0
        %2458 = vmatpush1.msra.mxu0 0.0
        %2459 = vmatprep.subr.mxu0 0.0
        %2460 = vmatpush1.msra.mxu0 0.0
        %2461 = vmatprep.subr.mxu0 0.0
        %2462 = vmatpush1.msra.mxu0 0.0
        %2463 = vmatprep.subr.mxu0 0.0
        %2464 = vmatpush1.msra.mxu0 0.0
        %2465 = vmatprep.subr.mxu0 0.0
        %2466 = vmatpush1.msra.mxu0 0.0
        %2467 = vmatprep.subr.mxu0 0.0
        %2468 = vmatpush1.msra.mxu0 0.0
        %2469 = vmatprep.subr.mxu0 0.0
        %2470 = vmatpush1.msra.mxu0 0.0
        %2471 = vmatprep.subr.mxu0 0.0
        %2472 = vmatpush1.msra.mxu0 0.0
        %2473 = vmatprep.subr.mxu0 0.0
        %2474 = vmatpush1.msra.mxu0 0.0
        %2475 = vmatprep.subr.mxu0 0.0
        %2476 = vmatpush1.msra.mxu0 0.0
        %2477 = vmatprep.subr.mxu0 0.0
        %2478 = vmatpush1.msra.mxu0 0.0
        %2479 = vmatprep.subr.mxu0 0.0
        %2480 = vmatpush1.msra.mxu0 0.0
        %2481 = vmatprep.subr.mxu0 0.0
        %2482 = vmatpush1.msra.mxu0 0.0
        %2483 = vmatprep.subr.mxu0 0.0
        %2484 = vmatpush1.msra.mxu0 0.0
        %2485 = vmatprep.subr.mxu0 0.0
        %2486 = vmatpush1.msra.mxu0 0.0
        %2487 = vmatprep.subr.mxu0 0.0
        %2488 = vmatpush1.msra.mxu0 0.0
        %2489 = vmatprep.subr.mxu0 0.0
        %2490 = vmatpush1.msra.mxu0 0.0
        %2491 = vmatprep.subr.mxu0 0.0
        %2492 = vmatpush1.msra.mxu0 0.0
        %2493 = vmatprep.subr.mxu0 0.0
        %2494 = vmatpush1.msra.mxu0 0.0
        %2495 = vmatprep.subr.mxu0 0.0
        %2496 = vmatpush1.msra.mxu0 0.0
        %2497 = vmatprep.subr.mxu0 0.0
        %2498 = vmatpush1.msra.mxu0 0.0
        %2499 = vmatprep.subr.mxu0 0.0
        %2500 = vmatpush1.msra.mxu0 0.0
        %2501 = vmatprep.subr.mxu0 0.0
        %2502 = vmatpush1.msra.mxu0 0.0
        %2503 = vmatprep.subr.mxu0 0.0
        %2504 = vmatpush1.msra.mxu0 0.0
        %2505 = vmatprep.subr.mxu0 0.0
        %2506 = vmatpush1.msra.mxu0 0.0
        %2507 = vmatprep.mubr.f32.mxu0 0.0
        %2508 = vmatmul.mubr.f32.gmra.mrb[0].mxu0 %v2350
        %v2509 = vpop.f32.mrb[0].mxu0
        %v2510 = vadd.f32 %v2441, %v2509
        %v2511 = vpop.f32.mrb[0].mxu0
        %2512 = vmatprep.mubr.f32.mxu0 0.0
        %2513 = vmatmul.mubr.f32.gmra.mrb[0].mxu0 %v2353
        %v2514 = vpop.f32.mrb[0].mxu0
        %v2515 = vadd.f32 %v2441, %v2514
        %v2516 = vpop.f32.mrb[0].mxu0
        %2517 = vdwg.mxu0
        %s2518 = scalar_lea.vmem [#allocation9], 32
        %v2519 = vld [vmem:[%s2518] sm:$0xff]
        %v2520 = vld [vmem:[%s2518 + $0x8] sm:$0xff]
        %v2521 = vld [vmem:[%s2518 + $0x10] sm:$0xff]
        %v2522 = vld [vmem:[%s2518 + $0x18] sm:$0xff]
        %s2523 = scalar_lea.vmem %s9, 1
        %v2524 = vld [vmem:[%s2523] sm:$0x1]
        %v2526 = vlaneseq
        %v2527 = vshrl.u32 %v2526, 7
        %v2528 = vsub.s32 0, %v2527
        %v2529 = vrot.slane %v2524, %v2528
        %v2531 = vadd.f32 %v2529, 0.0
        %v2533 = vsel %vm1019, %v2333, 0
        %v2536 = vsel %vm1019, %v2422, 0
        %v2539 = vsel %vm1019, %v2427, 0
        %2541 = vmatprep.subr.mxu0 0.0
        %2542 = vmatpush1.xpose.msra.mxu0 %v2536
        %2543 = vmatprep.subr.mxu0 0.0
        %2544 = vmatpush1.xpose.msra.mxu0 %v2539
        %2545 = vmatprep.subr.mxu0 0.0
        %2546 = vmatpush1.xpose.msra.mxu0 0.0
        %2547 = vmatprep.subr.mxu0 0.0
        %2548 = vmatpush1.xpose.msra.mxu0 0.0
        %2549 = vmatprep.subr.mxu0 0.0
        %2550 = vmatpush1.xpose.msra.mxu0 0.0
        %2551 = vmatprep.subr.mxu0 0.0
        %2552 = vmatpush1.xpose.msra.mxu0 0.0
        %2553 = vmatprep.subr.mxu0 0.0
        %2554 = vmatpush1.xpose.msra.mxu0 0.0
        %2555 = vmatprep.subr.mxu0 0.0
        %2556 = vmatpush1.xpose.msra.mxu0 0.0
        %2557 = vmatprep.subr.mxu0 0.0
        %2558 = vmatpush1.xpose.msra.mxu0 0.0
        %2559 = vmatprep.subr.mxu0 0.0
        %2560 = vmatpush1.xpose.msra.mxu0 0.0
        %2561 = vmatprep.subr.mxu0 0.0
        %2562 = vmatpush1.xpose.msra.mxu0 0.0
        %2563 = vmatprep.subr.mxu0 0.0
        %2564 = vmatpush1.xpose.msra.mxu0 0.0
        %2565 = vmatprep.subr.mxu0 0.0
        %2566 = vmatpush1.xpose.msra.mxu0 0.0
        %2567 = vmatprep.subr.mxu0 0.0
        %2568 = vmatpush1.xpose.msra.mxu0 0.0
        %2569 = vmatprep.subr.mxu0 0.0
        %2570 = vmatpush1.xpose.msra.mxu0 0.0
        %2571 = vmatprep.subr.mxu0 0.0
        %2572 = vmatpush1.xpose.msra.mxu0 0.0
        %2573 = vmatprep.subr.mxu0 0.0
        %2574 = vmatpush1.xpose.msra.mxu0 0.0
        %2575 = vmatprep.subr.mxu0 0.0
        %2576 = vmatpush1.xpose.msra.mxu0 0.0
        %2577 = vmatprep.subr.mxu0 0.0
        %2578 = vmatpush1.xpose.msra.mxu0 0.0
        %2579 = vmatprep.subr.mxu0 0.0
        %2580 = vmatpush1.xpose.msra.mxu0 0.0
        %2581 = vmatprep.subr.mxu0 0.0
        %2582 = vmatpush1.xpose.msra.mxu0 0.0
        %2583 = vmatprep.subr.mxu0 0.0
        %2584 = vmatpush1.xpose.msra.mxu0 0.0
        %2585 = vmatprep.subr.mxu0 0.0
        %2586 = vmatpush1.xpose.msra.mxu0 0.0
        %2587 = vmatprep.subr.mxu0 0.0
        %2588 = vmatpush1.xpose.msra.mxu0 0.0
        %2589 = vmatprep.subr.mxu0 0.0
        %2590 = vmatpush1.xpose.msra.mxu0 0.0
        %2591 = vmatprep.subr.mxu0 0.0
        %2592 = vmatpush1.xpose.msra.mxu0 0.0
        %2593 = vmatprep.subr.mxu0 0.0
        %2594 = vmatpush1.xpose.msra.mxu0 0.0
        %2595 = vmatprep.subr.mxu0 0.0
        %2596 = vmatpush1.xpose.msra.mxu0 0.0
        %2597 = vmatprep.subr.mxu0 0.0
        %2598 = vmatpush1.xpose.msra.mxu0 0.0
        %2599 = vmatprep.subr.mxu0 0.0
        %2600 = vmatpush1.xpose.msra.mxu0 0.0
        %2601 = vmatprep.subr.mxu0 0.0
        %2602 = vmatpush1.xpose.msra.mxu0 0.0
        %2603 = vmatprep.subr.mxu0 0.0
        %2604 = vmatpush1.xpose.msra.mxu0 0.0
        %2605 = vmatprep.mubr.f32.mxu0 0.0
        %2606 = vmatmul.mubr.f32.gmra.mrb[0].mxu0 %v2533
        %v2607 = vpop.f32.mrb[0].mxu0
        %v2608 = vadd.f32 0.0, %v2607
        %v2609 = vpop.f32.mrb[0].mxu0
        %2610 = vdwg.mxu0
        %v2611 = vsel %vm1099, %v2608, -inf
        %2612 = vmax.xlane.f32.xlu0 %v2611
        %v2613 = vpop.xlane.xlu0 %2612
        %v2614 = vsub.f32 %v2608, %v2613
        %v2615 = vmul.f32 %v2614, 1.442695
        %v2616 = vpow.pop %v2615
        %v2617 = vsel %vm1099, %v2616, 0.0
        %2618 = vadd.xlane.f32.xlu0 %v2617
        %v2619 = vpop.xlane.xlu0 %2618
        %v2620 = vrcp.pop %v2619
        %v2622 = vsel %vm1099, %v2616, 0
        %2624 = vmatprep.subr.mxu0 0.0
        %2625 = vmatpush1.msra.mxu0 %v2510
        %2626 = vmatprep.subr.mxu0 0.0
        %2627 = vmatpush1.msra.mxu0 %v2515
        %2628 = vmatprep.subr.mxu0 0.0
        %2629 = vmatpush1.msra.mxu0 0.0
        %2630 = vmatprep.subr.mxu0 0.0
        %2631 = vmatpush1.msra.mxu0 0.0
        %2632 = vmatprep.subr.mxu0 0.0
        %2633 = vmatpush1.msra.mxu0 0.0
        %2634 = vmatprep.subr.mxu0 0.0
        %2635 = vmatpush1.msra.mxu0 0.0
        %2636 = vmatprep.subr.mxu0 0.0
        %2637 = vmatpush1.msra.mxu0 0.0
        %2638 = vmatprep.subr.mxu0 0.0
        %2639 = vmatpush1.msra.mxu0 0.0
        %2640 = vmatprep.subr.mxu0 0.0
        %2641 = vmatpush1.msra.mxu0 0.0
        %2642 = vmatprep.subr.mxu0 0.0
        %2643 = vmatpush1.msra.mxu0 0.0
        %2644 = vmatprep.subr.mxu0 0.0
        %2645 = vmatpush1.msra.mxu0 0.0
        %2646 = vmatprep.subr.mxu0 0.0
        %2647 = vmatpush1.msra.mxu0 0.0
        %2648 = vmatprep.subr.mxu0 0.0
        %2649 = vmatpush1.msra.mxu0 0.0
        %2650 = vmatprep.subr.mxu0 0.0
        %2651 = vmatpush1.msra.mxu0 0.0
        %2652 = vmatprep.subr.mxu0 0.0
        %2653 = vmatpush1.msra.mxu0 0.0
        %2654 = vmatprep.subr.mxu0 0.0
        %2655 = vmatpush1.msra.mxu0 0.0
        %2656 = vmatprep.subr.mxu0 0.0
        %2657 = vmatpush1.msra.mxu0 0.0
        %2658 = vmatprep.subr.mxu0 0.0
        %2659 = vmatpush1.msra.mxu0 0.0
        %2660 = vmatprep.subr.mxu0 0.0
        %2661 = vmatpush1.msra.mxu0 0.0
        %2662 = vmatprep.subr.mxu0 0.0
        %2663 = vmatpush1.msra.mxu0 0.0
        %2664 = vmatprep.subr.mxu0 0.0
        %2665 = vmatpush1.msra.mxu0 0.0
        %2666 = vmatprep.subr.mxu0 0.0
        %2667 = vmatpush1.msra.mxu0 0.0
        %2668 = vmatprep.subr.mxu0 0.0
        %2669 = vmatpush1.msra.mxu0 0.0
        %2670 = vmatprep.subr.mxu0 0.0
        %2671 = vmatpush1.msra.mxu0 0.0
        %2672 = vmatprep.subr.mxu0 0.0
        %2673 = vmatpush1.msra.mxu0 0.0
        %2674 = vmatprep.subr.mxu0 0.0
        %2675 = vmatpush1.msra.mxu0 0.0
        %2676 = vmatprep.subr.mxu0 0.0
        %2677 = vmatpush1.msra.mxu0 0.0
        %2678 = vmatprep.subr.mxu0 0.0
        %2679 = vmatpush1.msra.mxu0 0.0
        %2680 = vmatprep.subr.mxu0 0.0
        %2681 = vmatpush1.msra.mxu0 0.0
        %2682 = vmatprep.subr.mxu0 0.0
        %2683 = vmatpush1.msra.mxu0 0.0
        %2684 = vmatprep.subr.mxu0 0.0
        %2685 = vmatpush1.msra.mxu0 0.0
        %2686 = vmatprep.subr.mxu0 0.0
        %2687 = vmatpush1.msra.mxu0 0.0
        %2688 = vmatprep.mubr.f32.mxu0 0.0
        %2689 = vmatmul.mubr.f32.gmra.mrb[0].mxu0 %v2622
        %v2690 = vpop.f32.mrb[0].mxu0
        %v2691 = vadd.f32 0.0, %v2690
        %v2692 = vpop.f32.mrb[0].mxu0
        %2693 = vdwg.mxu0
        %v2694 = vmul.f32 %v2691, %v2620
        %v2696 = vsel %vm1019, %v2694, 0
        %2698 = vmatprep.subr.mxu0 0.0
        %2699 = vmatpush1.msra.mxu0 %v2519
        %2700 = vmatprep.subr.mxu0 0.0
        %2701 = vmatpush1.msra.mxu0 0.0
        %2702 = vmatprep.subr.mxu0 0.0
        %2703 = vmatpush1.msra.mxu0 0.0
        %2704 = vmatprep.subr.mxu0 0.0
        %2705 = vmatpush1.msra.mxu0 0.0
        %2706 = vmatprep.subr.mxu0 0.0
        %2707 = vmatpush1.msra.mxu0 0.0
        %2708 = vmatprep.subr.mxu0 0.0
        %2709 = vmatpush1.msra.mxu0 0.0
        %2710 = vmatprep.subr.mxu0 0.0
        %2711 = vmatpush1.msra.mxu0 0.0
        %2712 = vmatprep.subr.mxu0 0.0
        %2713 = vmatpush1.msra.mxu0 0.0
        %2714 = vmatprep.subr.mxu0 0.0
        %2715 = vmatpush1.msra.mxu0 0.0
        %2716 = vmatprep.subr.mxu0 0.0
        %2717 = vmatpush1.msra.mxu0 0.0
        %2718 = vmatprep.subr.mxu0 0.0
        %2719 = vmatpush1.msra.mxu0 0.0
        %2720 = vmatprep.subr.mxu0 0.0
        %2721 = vmatpush1.msra.mxu0 0.0
        %2722 = vmatprep.subr.mxu0 0.0
        %2723 = vmatpush1.msra.mxu0 0.0
        %2724 = vmatprep.subr.mxu0 0.0
        %2725 = vmatpush1.msra.mxu0 0.0
        %2726 = vmatprep.subr.mxu0 0.0
        %2727 = vmatpush1.msra.mxu0 0.0
        %2728 = vmatprep.subr.mxu0 0.0
        %2729 = vmatpush1.msra.mxu0 0.0
        %2730 = vmatprep.subr.mxu0 0.0
        %2731 = vmatpush1.msra.mxu0 0.0
        %2732 = vmatprep.subr.mxu0 0.0
        %2733 = vmatpush1.msra.mxu0 0.0
        %2734 = vmatprep.subr.mxu0 0.0
        %2735 = vmatpush1.msra.mxu0 0.0
        %2736 = vmatprep.subr.mxu0 0.0
        %2737 = vmatpush1.msra.mxu0 0.0
        %2738 = vmatprep.subr.mxu0 0.0
        %2739 = vmatpush1.msra.mxu0 0.0
        %2740 = vmatprep.subr.mxu0 0.0
        %2741 = vmatpush1.msra.mxu0 0.0
        %2742 = vmatprep.subr.mxu0 0.0
        %2743 = vmatpush1.msra.mxu0 0.0
        %2744 = vmatprep.subr.mxu0 0.0
        %2745 = vmatpush1.msra.mxu0 0.0
        %2746 = vmatprep.subr.mxu0 0.0
        %2747 = vmatpush1.msra.mxu0 0.0
        %2748 = vmatprep.subr.mxu0 0.0
        %2749 = vmatpush1.msra.mxu0 0.0
        %2750 = vmatprep.subr.mxu0 0.0
        %2751 = vmatpush1.msra.mxu0 0.0
        %2752 = vmatprep.subr.mxu0 0.0
        %2753 = vmatpush1.msra.mxu0 0.0
        %2754 = vmatprep.subr.mxu0 0.0
        %2755 = vmatpush1.msra.mxu0 0.0
        %2756 = vmatprep.subr.mxu0 0.0
        %2757 = vmatpush1.msra.mxu0 0.0
        %2758 = vmatprep.subr.mxu0 0.0
        %2759 = vmatpush1.msra.mxu0 0.0
        %2760 = vmatprep.subr.mxu0 0.0
        %2761 = vmatpush1.msra.mxu0 0.0
        %2762 = vmatprep.mubr.f32.mxu0 0.0
        %2763 = vmatmul.mubr.f32.gmra.mrb[0].mxu0 %v2696
        %v2764 = vpop.f32.mrb[0].mxu0
        %v2765 = vadd.f32 0.0, %v2764
        %v2766 = vpop.f32.mrb[0].mxu0
        %2767 = vdwg.mxu0
        %v2768 = vadd.f32 %v2531, %v2765
        %2769 = vrot.lane.b32.xlu0 %v2333, 120
        %v2770 = vpop.permute.xlu0 %2769
        %2771 = vrot.lane.b32.xlu0 %v2422, 120
        %v2772 = vpop.permute.xlu0 %2771
        %2773 = vrot.lane.b32.xlu0 %v2427, 120
        %v2774 = vpop.permute.xlu0 %2773
        %v2775 = vsel %vm1019, %v2770, 0
        %v2777 = vsel %vm1019, %v2772, 0
        %v2779 = vsel %vm1019, %v2774, 0
        %2781 = vmatprep.subr.mxu0 0.0
        %2782 = vmatpush1.xpose.msra.mxu0 %v2777
        %2783 = vmatprep.subr.mxu0 0.0
        %2784 = vmatpush1.xpose.msra.mxu0 %v2779
        %2785 = vmatprep.subr.mxu0 0.0
        %2786 = vmatpush1.xpose.msra.mxu0 0.0
        %2787 = vmatprep.subr.mxu0 0.0
        %2788 = vmatpush1.xpose.msra.mxu0 0.0
        %2789 = vmatprep.subr.mxu0 0.0
        %2790 = vmatpush1.xpose.msra.mxu0 0.0
        %2791 = vmatprep.subr.mxu0 0.0
        %2792 = vmatpush1.xpose.msra.mxu0 0.0
        %2793 = vmatprep.subr.mxu0 0.0
        %2794 = vmatpush1.xpose.msra.mxu0 0.0
        %2795 = vmatprep.subr.mxu0 0.0
        %2796 = vmatpush1.xpose.msra.mxu0 0.0
        %2797 = vmatprep.subr.mxu0 0.0
        %2798 = vmatpush1.xpose.msra.mxu0 0.0
        %2799 = vmatprep.subr.mxu0 0.0
        %2800 = vmatpush1.xpose.msra.mxu0 0.0
        %2801 = vmatprep.subr.mxu0 0.0
        %2802 = vmatpush1.xpose.msra.mxu0 0.0
        %2803 = vmatprep.subr.mxu0 0.0
        %2804 = vmatpush1.xpose.msra.mxu0 0.0
        %2805 = vmatprep.subr.mxu0 0.0
        %2806 = vmatpush1.xpose.msra.mxu0 0.0
        %2807 = vmatprep.subr.mxu0 0.0
        %2808 = vmatpush1.xpose.msra.mxu0 0.0
        %2809 = vmatprep.subr.mxu0 0.0
        %2810 = vmatpush1.xpose.msra.mxu0 0.0
        %2811 = vmatprep.subr.mxu0 0.0
        %2812 = vmatpush1.xpose.msra.mxu0 0.0
        %2813 = vmatprep.subr.mxu0 0.0
        %2814 = vmatpush1.xpose.msra.mxu0 0.0
        %2815 = vmatprep.subr.mxu0 0.0
        %2816 = vmatpush1.xpose.msra.mxu0 0.0
        %2817 = vmatprep.subr.mxu0 0.0
        %2818 = vmatpush1.xpose.msra.mxu0 0.0
        %2819 = vmatprep.subr.mxu0 0.0
        %2820 = vmatpush1.xpose.msra.mxu0 0.0
        %2821 = vmatprep.subr.mxu0 0.0
        %2822 = vmatpush1.xpose.msra.mxu0 0.0
        %2823 = vmatprep.subr.mxu0 0.0
        %2824 = vmatpush1.xpose.msra.mxu0 0.0
        %2825 = vmatprep.subr.mxu0 0.0
        %2826 = vmatpush1.xpose.msra.mxu0 0.0
        %2827 = vmatprep.subr.mxu0 0.0
        %2828 = vmatpush1.xpose.msra.mxu0 0.0
        %2829 = vmatprep.subr.mxu0 0.0
        %2830 = vmatpush1.xpose.msra.mxu0 0.0
        %2831 = vmatprep.subr.mxu0 0.0
        %2832 = vmatpush1.xpose.msra.mxu0 0.0
        %2833 = vmatprep.subr.mxu0 0.0
        %2834 = vmatpush1.xpose.msra.mxu0 0.0
        %2835 = vmatprep.subr.mxu0 0.0
        %2836 = vmatpush1.xpose.msra.mxu0 0.0
        %2837 = vmatprep.subr.mxu0 0.0
        %2838 = vmatpush1.xpose.msra.mxu0 0.0
        %2839 = vmatprep.subr.mxu0 0.0
        %2840 = vmatpush1.xpose.msra.mxu0 0.0
        %2841 = vmatprep.subr.mxu0 0.0
        %2842 = vmatpush1.xpose.msra.mxu0 0.0
        %2843 = vmatprep.subr.mxu0 0.0
        %2844 = vmatpush1.xpose.msra.mxu0 0.0
        %2845 = vmatprep.mubr.f32.mxu0 0.0
        %2846 = vmatmul.mubr.f32.gmra.mrb[0].mxu0 %v2775
        %v2847 = vpop.f32.mrb[0].mxu0
        %v2848 = vadd.f32 0.0, %v2847
        %v2849 = vpop.f32.mrb[0].mxu0
        %2850 = vdwg.mxu0
        %v2851 = vsel %vm1099, %v2848, -inf
        %2852 = vmax.xlane.f32.xlu0 %v2851
        %v2853 = vpop.xlane.xlu0 %2852
        %v2854 = vsub.f32 %v2848, %v2853
        %v2855 = vmul.f32 %v2854, 1.442695
        %v2856 = vpow.pop %v2855
        %v2857 = vsel %vm1099, %v2856, 0.0
        %2858 = vadd.xlane.f32.xlu0 %v2857
        %v2859 = vpop.xlane.xlu0 %2858
        %v2860 = vrcp.pop %v2859
        %2863 = vrot.lane.b32.xlu0 %v2510, 120
        %v2864 = vpop.permute.xlu0 %2863
        %2865 = vrot.lane.b32.xlu0 %v2515, 120
        %v2866 = vpop.permute.xlu0 %2865
        %v2870 = vsel %vm1099, %v2856, 0
        %2872 = vmatprep.subr.mxu0 0.0
        %2873 = vmatpush1.msra.mxu0 %v2864
        %2874 = vmatprep.subr.mxu0 0.0
        %2875 = vmatpush1.msra.mxu0 %v2866
        %2876 = vmatprep.subr.mxu0 0.0
        %2877 = vmatpush1.msra.mxu0 0.0
        %2878 = vmatprep.subr.mxu0 0.0
        %2879 = vmatpush1.msra.mxu0 0.0
        %2880 = vmatprep.subr.mxu0 0.0
        %2881 = vmatpush1.msra.mxu0 0.0
        %2882 = vmatprep.subr.mxu0 0.0
        %2883 = vmatpush1.msra.mxu0 0.0
        %2884 = vmatprep.subr.mxu0 0.0
        %2885 = vmatpush1.msra.mxu0 0.0
        %2886 = vmatprep.subr.mxu0 0.0
        %2887 = vmatpush1.msra.mxu0 0.0
        %2888 = vmatprep.subr.mxu0 0.0
        %2889 = vmatpush1.msra.mxu0 0.0
        %2890 = vmatprep.subr.mxu0 0.0
        %2891 = vmatpush1.msra.mxu0 0.0
        %2892 = vmatprep.subr.mxu0 0.0
        %2893 = vmatpush1.msra.mxu0 0.0
        %2894 = vmatprep.subr.mxu0 0.0
        %2895 = vmatpush1.msra.mxu0 0.0
        %2896 = vmatprep.subr.mxu0 0.0
        %2897 = vmatpush1.msra.mxu0 0.0
        %2898 = vmatprep.subr.mxu0 0.0
        %2899 = vmatpush1.msra.mxu0 0.0
        %2900 = vmatprep.subr.mxu0 0.0
        %2901 = vmatpush1.msra.mxu0 0.0
        %2902 = vmatprep.subr.mxu0 0.0
        %2903 = vmatpush1.msra.mxu0 0.0
        %2904 = vmatprep.subr.mxu0 0.0
        %2905 = vmatpush1.msra.mxu0 0.0
        %2906 = vmatprep.subr.mxu0 0.0
        %2907 = vmatpush1.msra.mxu0 0.0
        %2908 = vmatprep.subr.mxu0 0.0
        %2909 = vmatpush1.msra.mxu0 0.0
        %2910 = vmatprep.subr.mxu0 0.0
        %2911 = vmatpush1.msra.mxu0 0.0
        %2912 = vmatprep.subr.mxu0 0.0
        %2913 = vmatpush1.msra.mxu0 0.0
        %2914 = vmatprep.subr.mxu0 0.0
        %2915 = vmatpush1.msra.mxu0 0.0
        %2916 = vmatprep.subr.mxu0 0.0
        %2917 = vmatpush1.msra.mxu0 0.0
        %2918 = vmatprep.subr.mxu0 0.0
        %2919 = vmatpush1.msra.mxu0 0.0
        %2920 = vmatprep.subr.mxu0 0.0
        %2921 = vmatpush1.msra.mxu0 0.0
        %2922 = vmatprep.subr.mxu0 0.0
        %2923 = vmatpush1.msra.mxu0 0.0
        %2924 = vmatprep.subr.mxu0 0.0
        %2925 = vmatpush1.msra.mxu0 0.0
        %2926 = vmatprep.subr.mxu0 0.0
        %2927 = vmatpush1.msra.mxu0 0.0
        %2928 = vmatprep.subr.mxu0 0.0
        %2929 = vmatpush1.msra.mxu0 0.0
        %2930 = vmatprep.subr.mxu0 0.0
        %2931 = vmatpush1.msra.mxu0 0.0
        %2932 = vmatprep.subr.mxu0 0.0
        %2933 = vmatpush1.msra.mxu0 0.0
        %2934 = vmatprep.subr.mxu0 0.0
        %2935 = vmatpush1.msra.mxu0 0.0
        %2936 = vmatprep.mubr.f32.mxu0 0.0
        %2937 = vmatmul.mubr.f32.gmra.mrb[0].mxu0 %v2870
        %v2938 = vpop.f32.mrb[0].mxu0
        %v2939 = vadd.f32 0.0, %v2938
        %v2940 = vpop.f32.mrb[0].mxu0
        %2941 = vdwg.mxu0
        %v2942 = vmul.f32 %v2939, %v2860
        %v2944 = vsel %vm1019, %v2942, 0
        %2946 = vmatprep.subr.mxu0 0.0
        %2947 = vmatpush1.msra.mxu0 %v2520
        %2948 = vmatprep.subr.mxu0 0.0
        %2949 = vmatpush1.msra.mxu0 0.0
        %2950 = vmatprep.subr.mxu0 0.0
        %2951 = vmatpush1.msra.mxu0 0.0
        %2952 = vmatprep.subr.mxu0 0.0
        %2953 = vmatpush1.msra.mxu0 0.0
        %2954 = vmatprep.subr.mxu0 0.0
        %2955 = vmatpush1.msra.mxu0 0.0
        %2956 = vmatprep.subr.mxu0 0.0
        %2957 = vmatpush1.msra.mxu0 0.0
        %2958 = vmatprep.subr.mxu0 0.0
        %2959 = vmatpush1.msra.mxu0 0.0
        %2960 = vmatprep.subr.mxu0 0.0
        %2961 = vmatpush1.msra.mxu0 0.0
        %2962 = vmatprep.subr.mxu0 0.0
        %2963 = vmatpush1.msra.mxu0 0.0
        %2964 = vmatprep.subr.mxu0 0.0
        %2965 = vmatpush1.msra.mxu0 0.0
        %2966 = vmatprep.subr.mxu0 0.0
        %2967 = vmatpush1.msra.mxu0 0.0
        %2968 = vmatprep.subr.mxu0 0.0
        %2969 = vmatpush1.msra.mxu0 0.0
        %2970 = vmatprep.subr.mxu0 0.0
        %2971 = vmatpush1.msra.mxu0 0.0
        %2972 = vmatprep.subr.mxu0 0.0
        %2973 = vmatpush1.msra.mxu0 0.0
        %2974 = vmatprep.subr.mxu0 0.0
        %2975 = vmatpush1.msra.mxu0 0.0
        %2976 = vmatprep.subr.mxu0 0.0
        %2977 = vmatpush1.msra.mxu0 0.0
        %2978 = vmatprep.subr.mxu0 0.0
        %2979 = vmatpush1.msra.mxu0 0.0
        %2980 = vmatprep.subr.mxu0 0.0
        %2981 = vmatpush1.msra.mxu0 0.0
        %2982 = vmatprep.subr.mxu0 0.0
        %2983 = vmatpush1.msra.mxu0 0.0
        %2984 = vmatprep.subr.mxu0 0.0
        %2985 = vmatpush1.msra.mxu0 0.0
        %2986 = vmatprep.subr.mxu0 0.0
        %2987 = vmatpush1.msra.mxu0 0.0
        %2988 = vmatprep.subr.mxu0 0.0
        %2989 = vmatpush1.msra.mxu0 0.0
        %2990 = vmatprep.subr.mxu0 0.0
        %2991 = vmatpush1.msra.mxu0 0.0
        %2992 = vmatprep.subr.mxu0 0.0
        %2993 = vmatpush1.msra.mxu0 0.0
        %2994 = vmatprep.subr.mxu0 0.0
        %2995 = vmatpush1.msra.mxu0 0.0
        %2996 = vmatprep.subr.mxu0 0.0
        %2997 = vmatpush1.msra.mxu0 0.0
        %2998 = vmatprep.subr.mxu0 0.0
        %2999 = vmatpush1.msra.mxu0 0.0
        %3000 = vmatprep.subr.mxu0 0.0
        %3001 = vmatpush1.msra.mxu0 0.0
        %3002 = vmatprep.subr.mxu0 0.0
        %3003 = vmatpush1.msra.mxu0 0.0
        %3004 = vmatprep.subr.mxu0 0.0
        %3005 = vmatpush1.msra.mxu0 0.0
        %3006 = vmatprep.subr.mxu0 0.0
        %3007 = vmatpush1.msra.mxu0 0.0
        %3008 = vmatprep.subr.mxu0 0.0
        %3009 = vmatpush1.msra.mxu0 0.0
        %3010 = vmatprep.mubr.f32.mxu0 0.0
        %3011 = vmatmul.mubr.f32.gmra.mrb[0].mxu0 %v2944
        %v3012 = vpop.f32.mrb[0].mxu0
        %v3013 = vadd.f32 0.0, %v3012
        %v3014 = vpop.f32.mrb[0].mxu0
        %3015 = vdwg.mxu0
        %v3016 = vadd.f32 %v2768, %v3013
        %3017 = vrot.lane.b32.xlu0 %v2333, 112
        %v3018 = vpop.permute.xlu0 %3017
        %3019 = vrot.lane.b32.xlu0 %v2422, 112
        %v3020 = vpop.permute.xlu0 %3019
        %3021 = vrot.lane.b32.xlu0 %v2427, 112
        %v3022 = vpop.permute.xlu0 %3021
        %v3023 = vsel %vm1019, %v3018, 0
        %v3025 = vsel %vm1019, %v3020, 0
        %v3027 = vsel %vm1019, %v3022, 0
        %3029 = vmatprep.subr.mxu0 0.0
        %3030 = vmatpush1.xpose.msra.mxu0 %v3025
        %3031 = vmatprep.subr.mxu0 0.0
        %3032 = vmatpush1.xpose.msra.mxu0 %v3027
        %3033 = vmatprep.subr.mxu0 0.0
        %3034 = vmatpush1.xpose.msra.mxu0 0.0
        %3035 = vmatprep.subr.mxu0 0.0
        %3036 = vmatpush1.xpose.msra.mxu0 0.0
        %3037 = vmatprep.subr.mxu0 0.0
        %3038 = vmatpush1.xpose.msra.mxu0 0.0
        %3039 = vmatprep.subr.mxu0 0.0
        %3040 = vmatpush1.xpose.msra.mxu0 0.0
        %3041 = vmatprep.subr.mxu0 0.0
        %3042 = vmatpush1.xpose.msra.mxu0 0.0
        %3043 = vmatprep.subr.mxu0 0.0
        %3044 = vmatpush1.xpose.msra.mxu0 0.0
        %3045 = vmatprep.subr.mxu0 0.0
        %3046 = vmatpush1.xpose.msra.mxu0 0.0
        %3047 = vmatprep.subr.mxu0 0.0
        %3048 = vmatpush1.xpose.msra.mxu0 0.0
        %3049 = vmatprep.subr.mxu0 0.0
        %3050 = vmatpush1.xpose.msra.mxu0 0.0
        %3051 = vmatprep.subr.mxu0 0.0
        %3052 = vmatpush1.xpose.msra.mxu0 0.0
        %3053 = vmatprep.subr.mxu0 0.0
        %3054 = vmatpush1.xpose.msra.mxu0 0.0
        %3055 = vmatprep.subr.mxu0 0.0
        %3056 = vmatpush1.xpose.msra.mxu0 0.0
        %3057 = vmatprep.subr.mxu0 0.0
        %3058 = vmatpush1.xpose.msra.mxu0 0.0
        %3059 = vmatprep.subr.mxu0 0.0
        %3060 = vmatpush1.xpose.msra.mxu0 0.0
        %3061 = vmatprep.subr.mxu0 0.0
        %3062 = vmatpush1.xpose.msra.mxu0 0.0
        %3063 = vmatprep.subr.mxu0 0.0
        %3064 = vmatpush1.xpose.msra.mxu0 0.0
        %3065 = vmatprep.subr.mxu0 0.0
        %3066 = vmatpush1.xpose.msra.mxu0 0.0
        %3067 = vmatprep.subr.mxu0 0.0
        %3068 = vmatpush1.xpose.msra.mxu0 0.0
        %3069 = vmatprep.subr.mxu0 0.0
        %3070 = vmatpush1.xpose.msra.mxu0 0.0
        %3071 = vmatprep.subr.mxu0 0.0
        %3072 = vmatpush1.xpose.msra.mxu0 0.0
        %3073 = vmatprep.subr.mxu0 0.0
        %3074 = vmatpush1.xpose.msra.mxu0 0.0
        %3075 = vmatprep.subr.mxu0 0.0
        %3076 = vmatpush1.xpose.msra.mxu0 0.0
        %3077 = vmatprep.subr.mxu0 0.0
        %3078 = vmatpush1.xpose.msra.mxu0 0.0
        %3079 = vmatprep.subr.mxu0 0.0
        %3080 = vmatpush1.xpose.msra.mxu0 0.0
        %3081 = vmatprep.subr.mxu0 0.0
        %3082 = vmatpush1.xpose.msra.mxu0 0.0
        %3083 = vmatprep.subr.mxu0 0.0
        %3084 = vmatpush1.xpose.msra.mxu0 0.0
        %3085 = vmatprep.subr.mxu0 0.0
        %3086 = vmatpush1.xpose.msra.mxu0 0.0
        %3087 = vmatprep.subr.mxu0 0.0
        %3088 = vmatpush1.xpose.msra.mxu0 0.0
        %3089 = vmatprep.subr.mxu0 0.0
        %3090 = vmatpush1.xpose.msra.mxu0 0.0
        %3091 = vmatprep.subr.mxu0 0.0
        %3092 = vmatpush1.xpose.msra.mxu0 0.0
        %3093 = vmatprep.mubr.f32.mxu0 0.0
        %3094 = vmatmul.mubr.f32.gmra.mrb[0].mxu0 %v3023
        %v3095 = vpop.f32.mrb[0].mxu0
        %v3096 = vadd.f32 0.0, %v3095
        %v3097 = vpop.f32.mrb[0].mxu0
        %3098 = vdwg.mxu0
        %v3099 = vsel %vm1099, %v3096, -inf
        %3100 = vmax.xlane.f32.xlu0 %v3099
        %v3101 = vpop.xlane.xlu0 %3100
        %v3102 = vsub.f32 %v3096, %v3101
        %v3103 = vmul.f32 %v3102, 1.442695
        %v3104 = vpow.pop %v3103
        %v3105 = vsel %vm1099, %v3104, 0.0
        %3106 = vadd.xlane.f32.xlu0 %v3105
        %v3107 = vpop.xlane.xlu0 %3106
        %v3108 = vrcp.pop %v3107
        %3109 = vrot.lane.b32.xlu0 %v2510, 112
        %v3110 = vpop.permute.xlu0 %3109
        %3111 = vrot.lane.b32.xlu0 %v2515, 112
        %v3112 = vpop.permute.xlu0 %3111
        %v3116 = vsel %vm1099, %v3104, 0
        %3118 = vmatprep.subr.mxu0 0.0
        %3119 = vmatpush1.msra.mxu0 %v3110
        %3120 = vmatprep.subr.mxu0 0.0
        %3121 = vmatpush1.msra.mxu0 %v3112
        %3122 = vmatprep.subr.mxu0 0.0
        %3123 = vmatpush1.msra.mxu0 0.0
        %3124 = vmatprep.subr.mxu0 0.0
        %3125 = vmatpush1.msra.mxu0 0.0
        %3126 = vmatprep.subr.mxu0 0.0
        %3127 = vmatpush1.msra.mxu0 0.0
        %3128 = vmatprep.subr.mxu0 0.0
        %3129 = vmatpush1.msra.mxu0 0.0
        %3130 = vmatprep.subr.mxu0 0.0
        %3131 = vmatpush1.msra.mxu0 0.0
        %3132 = vmatprep.subr.mxu0 0.0
        %3133 = vmatpush1.msra.mxu0 0.0
        %3134 = vmatprep.subr.mxu0 0.0
        %3135 = vmatpush1.msra.mxu0 0.0
        %3136 = vmatprep.subr.mxu0 0.0
        %3137 = vmatpush1.msra.mxu0 0.0
        %3138 = vmatprep.subr.mxu0 0.0
        %3139 = vmatpush1.msra.mxu0 0.0
        %3140 = vmatprep.subr.mxu0 0.0
        %3141 = vmatpush1.msra.mxu0 0.0
        %3142 = vmatprep.subr.mxu0 0.0
        %3143 = vmatpush1.msra.mxu0 0.0
        %3144 = vmatprep.subr.mxu0 0.0
        %3145 = vmatpush1.msra.mxu0 0.0
        %3146 = vmatprep.subr.mxu0 0.0
        %3147 = vmatpush1.msra.mxu0 0.0
        %3148 = vmatprep.subr.mxu0 0.0
        %3149 = vmatpush1.msra.mxu0 0.0
        %3150 = vmatprep.subr.mxu0 0.0
        %3151 = vmatpush1.msra.mxu0 0.0
        %3152 = vmatprep.subr.mxu0 0.0
        %3153 = vmatpush1.msra.mxu0 0.0
        %3154 = vmatprep.subr.mxu0 0.0
        %3155 = vmatpush1.msra.mxu0 0.0
        %3156 = vmatprep.subr.mxu0 0.0
        %3157 = vmatpush1.msra.mxu0 0.0
        %3158 = vmatprep.subr.mxu0 0.0
        %3159 = vmatpush1.msra.mxu0 0.0
        %3160 = vmatprep.subr.mxu0 0.0
        %3161 = vmatpush1.msra.mxu0 0.0
        %3162 = vmatprep.subr.mxu0 0.0
        %3163 = vmatpush1.msra.mxu0 0.0
        %3164 = vmatprep.subr.mxu0 0.0
        %3165 = vmatpush1.msra.mxu0 0.0
        %3166 = vmatprep.subr.mxu0 0.0
        %3167 = vmatpush1.msra.mxu0 0.0
        %3168 = vmatprep.subr.mxu0 0.0
        %3169 = vmatpush1.msra.mxu0 0.0
        %3170 = vmatprep.subr.mxu0 0.0
        %3171 = vmatpush1.msra.mxu0 0.0
        %3172 = vmatprep.subr.mxu0 0.0
        %3173 = vmatpush1.msra.mxu0 0.0
        %3174 = vmatprep.subr.mxu0 0.0
        %3175 = vmatpush1.msra.mxu0 0.0
        %3176 = vmatprep.subr.mxu0 0.0
        %3177 = vmatpush1.msra.mxu0 0.0
        %3178 = vmatprep.subr.mxu0 0.0
        %3179 = vmatpush1.msra.mxu0 0.0
        %3180 = vmatprep.subr.mxu0 0.0
        %3181 = vmatpush1.msra.mxu0 0.0
        %3182 = vmatprep.mubr.f32.mxu0 0.0
        %3183 = vmatmul.mubr.f32.gmra.mrb[0].mxu0 %v3116
        %v3184 = vpop.f32.mrb[0].mxu0
        %v3185 = vadd.f32 0.0, %v3184
        %v3186 = vpop.f32.mrb[0].mxu0
        %3187 = vdwg.mxu0
        %v3188 = vmul.f32 %v3185, %v3108
        %v3190 = vsel %vm1019, %v3188, 0
        %3192 = vmatprep.subr.mxu0 0.0
        %3193 = vmatpush1.msra.mxu0 %v2521
        %3194 = vmatprep.subr.mxu0 0.0
        %3195 = vmatpush1.msra.mxu0 0.0
        %3196 = vmatprep.subr.mxu0 0.0
        %3197 = vmatpush1.msra.mxu0 0.0
        %3198 = vmatprep.subr.mxu0 0.0
        %3199 = vmatpush1.msra.mxu0 0.0
        %3200 = vmatprep.subr.mxu0 0.0
        %3201 = vmatpush1.msra.mxu0 0.0
        %3202 = vmatprep.subr.mxu0 0.0
        %3203 = vmatpush1.msra.mxu0 0.0
        %3204 = vmatprep.subr.mxu0 0.0
        %3205 = vmatpush1.msra.mxu0 0.0
        %3206 = vmatprep.subr.mxu0 0.0
        %3207 = vmatpush1.msra.mxu0 0.0
        %3208 = vmatprep.subr.mxu0 0.0
        %3209 = vmatpush1.msra.mxu0 0.0
        %3210 = vmatprep.subr.mxu0 0.0
        %3211 = vmatpush1.msra.mxu0 0.0
        %3212 = vmatprep.subr.mxu0 0.0
        %3213 = vmatpush1.msra.mxu0 0.0
        %3214 = vmatprep.subr.mxu0 0.0
        %3215 = vmatpush1.msra.mxu0 0.0
        %3216 = vmatprep.subr.mxu0 0.0
        %3217 = vmatpush1.msra.mxu0 0.0
        %3218 = vmatprep.subr.mxu0 0.0
        %3219 = vmatpush1.msra.mxu0 0.0
        %3220 = vmatprep.subr.mxu0 0.0
        %3221 = vmatpush1.msra.mxu0 0.0
        %3222 = vmatprep.subr.mxu0 0.0
        %3223 = vmatpush1.msra.mxu0 0.0
        %3224 = vmatprep.subr.mxu0 0.0
        %3225 = vmatpush1.msra.mxu0 0.0
        %3226 = vmatprep.subr.mxu0 0.0
        %3227 = vmatpush1.msra.mxu0 0.0
        %3228 = vmatprep.subr.mxu0 0.0
        %3229 = vmatpush1.msra.mxu0 0.0
        %3230 = vmatprep.subr.mxu0 0.0
        %3231 = vmatpush1.msra.mxu0 0.0
        %3232 = vmatprep.subr.mxu0 0.0
        %3233 = vmatpush1.msra.mxu0 0.0
        %3234 = vmatprep.subr.mxu0 0.0
        %3235 = vmatpush1.msra.mxu0 0.0
        %3236 = vmatprep.subr.mxu0 0.0
        %3237 = vmatpush1.msra.mxu0 0.0
        %3238 = vmatprep.subr.mxu0 0.0
        %3239 = vmatpush1.msra.mxu0 0.0
        %3240 = vmatprep.subr.mxu0 0.0
        %3241 = vmatpush1.msra.mxu0 0.0
        %3242 = vmatprep.subr.mxu0 0.0
        %3243 = vmatpush1.msra.mxu0 0.0
        %3244 = vmatprep.subr.mxu0 0.0
        %3245 = vmatpush1.msra.mxu0 0.0
        %3246 = vmatprep.subr.mxu0 0.0
        %3247 = vmatpush1.msra.mxu0 0.0
        %3248 = vmatprep.subr.mxu0 0.0
        %3249 = vmatpush1.msra.mxu0 0.0
        %3250 = vmatprep.subr.mxu0 0.0
        %3251 = vmatpush1.msra.mxu0 0.0
        %3252 = vmatprep.subr.mxu0 0.0
        %3253 = vmatpush1.msra.mxu0 0.0
        %3254 = vmatprep.subr.mxu0 0.0
        %3255 = vmatpush1.msra.mxu0 0.0
        %3256 = vmatprep.mubr.f32.mxu0 0.0
        %3257 = vmatmul.mubr.f32.gmra.mrb[0].mxu0 %v3190
        %v3258 = vpop.f32.mrb[0].mxu0
        %v3259 = vadd.f32 0.0, %v3258
        %v3260 = vpop.f32.mrb[0].mxu0
        %3261 = vdwg.mxu0
        %v3262 = vadd.f32 %v3016, %v3259
        %3263 = vrot.lane.b32.xlu0 %v2333, 104
        %v3264 = vpop.permute.xlu0 %3263
        %3265 = vrot.lane.b32.xlu0 %v2422, 104
        %v3266 = vpop.permute.xlu0 %3265
        %3267 = vrot.lane.b32.xlu0 %v2427, 104
        %v3268 = vpop.permute.xlu0 %3267
        %v3269 = vsel %vm1019, %v3264, 0
        %v3271 = vsel %vm1019, %v3266, 0
        %v3273 = vsel %vm1019, %v3268, 0
        %3275 = vmatprep.subr.mxu0 0.0
        %3276 = vmatpush1.xpose.msra.mxu0 %v3271
        %3277 = vmatprep.subr.mxu0 0.0
        %3278 = vmatpush1.xpose.msra.mxu0 %v3273
        %3279 = vmatprep.subr.mxu0 0.0
        %3280 = vmatpush1.xpose.msra.mxu0 0.0
        %3281 = vmatprep.subr.mxu0 0.0
        %3282 = vmatpush1.xpose.msra.mxu0 0.0
        %3283 = vmatprep.subr.mxu0 0.0
        %3284 = vmatpush1.xpose.msra.mxu0 0.0
        %3285 = vmatprep.subr.mxu0 0.0
        %3286 = vmatpush1.xpose.msra.mxu0 0.0
        %3287 = vmatprep.subr.mxu0 0.0
        %3288 = vmatpush1.xpose.msra.mxu0 0.0
        %3289 = vmatprep.subr.mxu0 0.0
        %3290 = vmatpush1.xpose.msra.mxu0 0.0
        %3291 = vmatprep.subr.mxu0 0.0
        %3292 = vmatpush1.xpose.msra.mxu0 0.0
        %3293 = vmatprep.subr.mxu0 0.0
        %3294 = vmatpush1.xpose.msra.mxu0 0.0
        %3295 = vmatprep.subr.mxu0 0.0
        %3296 = vmatpush1.xpose.msra.mxu0 0.0
        %3297 = vmatprep.subr.mxu0 0.0
        %3298 = vmatpush1.xpose.msra.mxu0 0.0
        %3299 = vmatprep.subr.mxu0 0.0
        %3300 = vmatpush1.xpose.msra.mxu0 0.0
        %3301 = vmatprep.subr.mxu0 0.0
        %3302 = vmatpush1.xpose.msra.mxu0 0.0
        %3303 = vmatprep.subr.mxu0 0.0
        %3304 = vmatpush1.xpose.msra.mxu0 0.0
        %3305 = vmatprep.subr.mxu0 0.0
        %3306 = vmatpush1.xpose.msra.mxu0 0.0
        %3307 = vmatprep.subr.mxu0 0.0
        %3308 = vmatpush1.xpose.msra.mxu0 0.0
        %3309 = vmatprep.subr.mxu0 0.0
        %3310 = vmatpush1.xpose.msra.mxu0 0.0
        %3311 = vmatprep.subr.mxu0 0.0
        %3312 = vmatpush1.xpose.msra.mxu0 0.0
        %3313 = vmatprep.subr.mxu0 0.0
        %3314 = vmatpush1.xpose.msra.mxu0 0.0
        %3315 = vmatprep.subr.mxu0 0.0
        %3316 = vmatpush1.xpose.msra.mxu0 0.0
        %3317 = vmatprep.subr.mxu0 0.0
        %3318 = vmatpush1.xpose.msra.mxu0 0.0
        %3319 = vmatprep.subr.mxu0 0.0
        %3320 = vmatpush1.xpose.msra.mxu0 0.0
        %3321 = vmatprep.subr.mxu0 0.0
        %3322 = vmatpush1.xpose.msra.mxu0 0.0
        %3323 = vmatprep.subr.mxu0 0.0
        %3324 = vmatpush1.xpose.msra.mxu0 0.0
        %3325 = vmatprep.subr.mxu0 0.0
        %3326 = vmatpush1.xpose.msra.mxu0 0.0
        %3327 = vmatprep.subr.mxu0 0.0
        %3328 = vmatpush1.xpose.msra.mxu0 0.0
        %3329 = vmatprep.subr.mxu0 0.0
        %3330 = vmatpush1.xpose.msra.mxu0 0.0
        %3331 = vmatprep.subr.mxu0 0.0
        %3332 = vmatpush1.xpose.msra.mxu0 0.0
        %3333 = vmatprep.subr.mxu0 0.0
        %3334 = vmatpush1.xpose.msra.mxu0 0.0
        %3335 = vmatprep.subr.mxu0 0.0
        %3336 = vmatpush1.xpose.msra.mxu0 0.0
        %3337 = vmatprep.subr.mxu0 0.0
        %3338 = vmatpush1.xpose.msra.mxu0 0.0
        %3339 = vmatprep.mubr.f32.mxu0 0.0
        %3340 = vmatmul.mubr.f32.gmra.mrb[0].mxu0 %v3269
        %v3341 = vpop.f32.mrb[0].mxu0
        %v3342 = vadd.f32 0.0, %v3341
        %v3343 = vpop.f32.mrb[0].mxu0
        %3344 = vdwg.mxu0
        %v3345 = vsel %vm1099, %v3342, -inf
        %3346 = vmax.xlane.f32.xlu0 %v3345
        %v3347 = vpop.xlane.xlu0 %3346
        %v3348 = vsub.f32 %v3342, %v3347
        %v3349 = vmul.f32 %v3348, 1.442695
        %v3350 = vpow.pop %v3349
        %v3351 = vsel %vm1099, %v3350, 0.0
        %3352 = vadd.xlane.f32.xlu0 %v3351
        %v3353 = vpop.xlane.xlu0 %3352
        %v3354 = vrcp.pop %v3353
        %3355 = vrot.lane.b32.xlu0 %v2510, 104
        %v3356 = vpop.permute.xlu0 %3355
        %3357 = vrot.lane.b32.xlu0 %v2515, 104
        %v3358 = vpop.permute.xlu0 %3357
        %v3362 = vsel %vm1099, %v3350, 0
        %3364 = vmatprep.subr.mxu0 0.0
        %3365 = vmatpush1.msra.mxu0 %v3356
        %3366 = vmatprep.subr.mxu0 0.0
        %3367 = vmatpush1.msra.mxu0 %v3358
        %3368 = vmatprep.subr.mxu0 0.0
        %3369 = vmatpush1.msra.mxu0 0.0
        %3370 = vmatprep.subr.mxu0 0.0
        %3371 = vmatpush1.msra.mxu0 0.0
        %3372 = vmatprep.subr.mxu0 0.0
        %3373 = vmatpush1.msra.mxu0 0.0
        %3374 = vmatprep.subr.mxu0 0.0
        %3375 = vmatpush1.msra.mxu0 0.0
        %3376 = vmatprep.subr.mxu0 0.0
        %3377 = vmatpush1.msra.mxu0 0.0
        %3378 = vmatprep.subr.mxu0 0.0
        %3379 = vmatpush1.msra.mxu0 0.0
        %3380 = vmatprep.subr.mxu0 0.0
        %3381 = vmatpush1.msra.mxu0 0.0
        %3382 = vmatprep.subr.mxu0 0.0
        %3383 = vmatpush1.msra.mxu0 0.0
        %3384 = vmatprep.subr.mxu0 0.0
        %3385 = vmatpush1.msra.mxu0 0.0
        %3386 = vmatprep.subr.mxu0 0.0
        %3387 = vmatpush1.msra.mxu0 0.0
        %3388 = vmatprep.subr.mxu0 0.0
        %3389 = vmatpush1.msra.mxu0 0.0
        %3390 = vmatprep.subr.mxu0 0.0
        %3391 = vmatpush1.msra.mxu0 0.0
        %3392 = vmatprep.subr.mxu0 0.0
        %3393 = vmatpush1.msra.mxu0 0.0
        %3394 = vmatprep.subr.mxu0 0.0
        %3395 = vmatpush1.msra.mxu0 0.0
        %3396 = vmatprep.subr.mxu0 0.0
        %3397 = vmatpush1.msra.mxu0 0.0
        %3398 = vmatprep.subr.mxu0 0.0
        %3399 = vmatpush1.msra.mxu0 0.0
        %3400 = vmatprep.subr.mxu0 0.0
        %3401 = vmatpush1.msra.mxu0 0.0
        %3402 = vmatprep.subr.mxu0 0.0
        %3403 = vmatpush1.msra.mxu0 0.0
        %3404 = vmatprep.subr.mxu0 0.0
        %3405 = vmatpush1.msra.mxu0 0.0
        %3406 = vmatprep.subr.mxu0 0.0
        %3407 = vmatpush1.msra.mxu0 0.0
        %3408 = vmatprep.subr.mxu0 0.0
        %3409 = vmatpush1.msra.mxu0 0.0
        %3410 = vmatprep.subr.mxu0 0.0
        %3411 = vmatpush1.msra.mxu0 0.0
        %3412 = vmatprep.subr.mxu0 0.0
        %3413 = vmatpush1.msra.mxu0 0.0
        %3414 = vmatprep.subr.mxu0 0.0
        %3415 = vmatpush1.msra.mxu0 0.0
        %3416 = vmatprep.subr.mxu0 0.0
        %3417 = vmatpush1.msra.mxu0 0.0
        %3418 = vmatprep.subr.mxu0 0.0
        %3419 = vmatpush1.msra.mxu0 0.0
        %3420 = vmatprep.subr.mxu0 0.0
        %3421 = vmatpush1.msra.mxu0 0.0
        %3422 = vmatprep.subr.mxu0 0.0
        %3423 = vmatpush1.msra.mxu0 0.0
        %3424 = vmatprep.subr.mxu0 0.0
        %3425 = vmatpush1.msra.mxu0 0.0
        %3426 = vmatprep.subr.mxu0 0.0
        %3427 = vmatpush1.msra.mxu0 0.0
        %3428 = vmatprep.mubr.f32.mxu0 0.0
        %3429 = vmatmul.mubr.f32.gmra.mrb[0].mxu0 %v3362
        %v3430 = vpop.f32.mrb[0].mxu0
        %v3431 = vadd.f32 0.0, %v3430
        %v3432 = vpop.f32.mrb[0].mxu0
        %3433 = vdwg.mxu0
        %v3434 = vmul.f32 %v3431, %v3354
        %v3436 = vsel %vm1019, %v3434, 0
        %3438 = vmatprep.subr.mxu0 0.0
        %3439 = vmatpush1.msra.mxu0 %v2522
        %3440 = vmatprep.subr.mxu0 0.0
        %3441 = vmatpush1.msra.mxu0 0.0
        %3442 = vmatprep.subr.mxu0 0.0
        %3443 = vmatpush1.msra.mxu0 0.0
        %3444 = vmatprep.subr.mxu0 0.0
        %3445 = vmatpush1.msra.mxu0 0.0
        %3446 = vmatprep.subr.mxu0 0.0
        %3447 = vmatpush1.msra.mxu0 0.0
        %3448 = vmatprep.subr.mxu0 0.0
        %3449 = vmatpush1.msra.mxu0 0.0
        %3450 = vmatprep.subr.mxu0 0.0
        %3451 = vmatpush1.msra.mxu0 0.0
        %3452 = vmatprep.subr.mxu0 0.0
        %3453 = vmatpush1.msra.mxu0 0.0
        %3454 = vmatprep.subr.mxu0 0.0
        %3455 = vmatpush1.msra.mxu0 0.0
        %3456 = vmatprep.subr.mxu0 0.0
        %3457 = vmatpush1.msra.mxu0 0.0
        %3458 = vmatprep.subr.mxu0 0.0
        %3459 = vmatpush1.msra.mxu0 0.0
        %3460 = vmatprep.subr.mxu0 0.0
        %3461 = vmatpush1.msra.mxu0 0.0
        %3462 = vmatprep.subr.mxu0 0.0
        %3463 = vmatpush1.msra.mxu0 0.0
        %3464 = vmatprep.subr.mxu0 0.0
        %3465 = vmatpush1.msra.mxu0 0.0
        %3466 = vmatprep.subr.mxu0 0.0
        %3467 = vmatpush1.msra.mxu0 0.0
        %3468 = vmatprep.subr.mxu0 0.0
        %3469 = vmatpush1.msra.mxu0 0.0
        %3470 = vmatprep.subr.mxu0 0.0
        %3471 = vmatpush1.msra.mxu0 0.0
        %3472 = vmatprep.subr.mxu0 0.0
        %3473 = vmatpush1.msra.mxu0 0.0
        %3474 = vmatprep.subr.mxu0 0.0
        %3475 = vmatpush1.msra.mxu0 0.0
        %3476 = vmatprep.subr.mxu0 0.0
        %3477 = vmatpush1.msra.mxu0 0.0
        %3478 = vmatprep.subr.mxu0 0.0
        %3479 = vmatpush1.msra.mxu0 0.0
        %3480 = vmatprep.subr.mxu0 0.0
        %3481 = vmatpush1.msra.mxu0 0.0
        %3482 = vmatprep.subr.mxu0 0.0
        %3483 = vmatpush1.msra.mxu0 0.0
        %3484 = vmatprep.subr.mxu0 0.0
        %3485 = vmatpush1.msra.mxu0 0.0
        %3486 = vmatprep.subr.mxu0 0.0
        %3487 = vmatpush1.msra.mxu0 0.0
        %3488 = vmatprep.subr.mxu0 0.0
        %3489 = vmatpush1.msra.mxu0 0.0
        %3490 = vmatprep.subr.mxu0 0.0
        %3491 = vmatpush1.msra.mxu0 0.0
        %3492 = vmatprep.subr.mxu0 0.0
        %3493 = vmatpush1.msra.mxu0 0.0
        %3494 = vmatprep.subr.mxu0 0.0
        %3495 = vmatpush1.msra.mxu0 0.0
        %3496 = vmatprep.subr.mxu0 0.0
        %3497 = vmatpush1.msra.mxu0 0.0
        %3498 = vmatprep.subr.mxu0 0.0
        %3499 = vmatpush1.msra.mxu0 0.0
        %3500 = vmatprep.subr.mxu0 0.0
        %3501 = vmatpush1.msra.mxu0 0.0
        %3502 = vmatprep.mubr.f32.mxu0 0.0
        %3503 = vmatmul.mubr.f32.gmra.mrb[0].mxu0 %v3436
        %v3504 = vpop.f32.mrb[0].mxu0
        %v3505 = vadd.f32 0.0, %v3504
        %v3506 = vpop.f32.mrb[0].mxu0
        %3507 = vdwg.mxu0
        %v3508 = vadd.f32 %v3262, %v3505
        %s3509 = sld [smem:[#allocation12 + $0x1]]
        %v3510 = vstv %s3509
        %v3511 = vmul.f32 %v3510, %v3508
        %v3512 = vadd.f32 %v2246, %v3511
        %s3513 = scalar_lea.vmem %s10, 1
        %v3514 = vld [vmem:[%s3513] sm:$0x1]
        %s3515 = scalar_lea.vmem %s11, 1
        %v3516 = vld [vmem:[%s3515] sm:$0x1]
        %v3517 = vsel %vm739, %v3512, 0.0
        %3518 = vadd.xlane.f32.xlu0 %v3517
        %v3519 = vpop.xlane.xlu0 %3518
        %v3520 = vmul.f32 %v3519, %v2007
        %v3521 = vsub.f32 %v3512, %v3520
        %v3522 = vmul.f32 %v3521, %v3521
        %v3523 = vsel %vm739, %v3522, 0.0
        %3524 = vadd.xlane.f32.xlu0 %v3523
        %v3525 = vpop.xlane.xlu0 %3524
        %v3526 = vmul.f32 %v3525, %v2007
        %v3527 = vadd.f32 %v3526, 1e-05
        %v3528 = vrsqrt.pop %v3527
        %v3529 = vmul.f32 %v3521, %v3528
        %v3531 = vlaneseq
        %v3532 = vshrl.u32 %v3531, 7
        %v3533 = vsub.s32 0, %v3532
        %v3534 = vrot.slane %v3514, %v3533
        %v3536 = vmul.f32 %v3529, %v3534
        %v3538 = vlaneseq
        %v3539 = vshrl.u32 %v3538, 7
        %v3540 = vsub.s32 0, %v3539
        %v3541 = vrot.slane %v3516, %v3540
        %v3543 = vadd.f32 %v3536, %v3541
        %s3544 = scalar_lea.vmem [#allocation10], 32
        %v3545 = vld [vmem:[%s3544] sm:$0xff]
        %v3546 = vld [vmem:[%s3544 + $0x8] sm:$0xff]
        %v3547 = vld [vmem:[%s3544 + $0x10] sm:$0xff]
        %v3548 = vld [vmem:[%s3544 + $0x18] sm:$0xff]
        %s3549 = scalar_lea.vmem %s13, 1
        %v3550 = vld [vmem:[%s3549] sm:$0x1]
        %v3552 = vlaneseq
        %v3553 = vshrl.u32 %v3552, 7
        %v3554 = vsub.s32 0, %v3553
        %v3555 = vrot.slane %v3550, %v3554
        %v3558 = vsel %vm739, %v3543, 0
        %3560 = vmatprep.subr.mxu0 0.0
        %3561 = vmatpush1.msra.mxu0 %v3545
        %3562 = vmatprep.subr.mxu0 0.0
        %3563 = vmatpush1.msra.mxu0 %v3546
        %3564 = vmatprep.subr.mxu0 0.0
        %3565 = vmatpush1.msra.mxu0 %v3547
        %3566 = vmatprep.subr.mxu0 0.0
        %3567 = vmatpush1.msra.mxu0 %v3548
        %3568 = vmatprep.subr.mxu0 0.0
        %3569 = vmatpush1.msra.mxu0 0.0
        %3570 = vmatprep.subr.mxu0 0.0
        %3571 = vmatpush1.msra.mxu0 0.0
        %3572 = vmatprep.subr.mxu0 0.0
        %3573 = vmatpush1.msra.mxu0 0.0
        %3574 = vmatprep.subr.mxu0 0.0
        %3575 = vmatpush1.msra.mxu0 0.0
        %3576 = vmatprep.subr.mxu0 0.0
        %3577 = vmatpush1.msra.mxu0 0.0
        %3578 = vmatprep.subr.mxu0 0.0
        %3579 = vmatpush1.msra.mxu0 0.0
        %3580 = vmatprep.subr.mxu0 0.0
        %3581 = vmatpush1.msra.mxu0 0.0
        %3582 = vmatprep.subr.mxu0 0.0
        %3583 = vmatpush1.msra.mxu0 0.0
        %3584 = vmatprep.subr.mxu0 0.0
        %3585 = vmatpush1.msra.mxu0 0.0
        %3586 = vmatprep.subr.mxu0 0.0
        %3587 = vmatpush1.msra.mxu0 0.0
        %3588 = vmatprep.subr.mxu0 0.0
        %3589 = vmatpush1.msra.mxu0 0.0
        %3590 = vmatprep.subr.mxu0 0.0
        %3591 = vmatpush1.msra.mxu0 0.0
        %3592 = vmatprep.subr.mxu0 0.0
        %3593 = vmatpush1.msra.mxu0 0.0
        %3594 = vmatprep.subr.mxu0 0.0
        %3595 = vmatpush1.msra.mxu0 0.0
        %3596 = vmatprep.subr.mxu0 0.0
        %3597 = vmatpush1.msra.mxu0 0.0
        %3598 = vmatprep.subr.mxu0 0.0
        %3599 = vmatpush1.msra.mxu0 0.0
        %3600 = vmatprep.subr.mxu0 0.0
        %3601 = vmatpush1.msra.mxu0 0.0
        %3602 = vmatprep.subr.mxu0 0.0
        %3603 = vmatpush1.msra.mxu0 0.0
        %3604 = vmatprep.subr.mxu0 0.0
        %3605 = vmatpush1.msra.mxu0 0.0
        %3606 = vmatprep.subr.mxu0 0.0
        %3607 = vmatpush1.msra.mxu0 0.0
        %3608 = vmatprep.subr.mxu0 0.0
        %3609 = vmatpush1.msra.mxu0 0.0
        %3610 = vmatprep.subr.mxu0 0.0
        %3611 = vmatpush1.msra.mxu0 0.0
        %3612 = vmatprep.subr.mxu0 0.0
        %3613 = vmatpush1.msra.mxu0 0.0
        %3614 = vmatprep.subr.mxu0 0.0
        %3615 = vmatpush1.msra.mxu0 0.0
        %3616 = vmatprep.subr.mxu0 0.0
        %3617 = vmatpush1.msra.mxu0 0.0
        %3618 = vmatprep.subr.mxu0 0.0
        %3619 = vmatpush1.msra.mxu0 0.0
        %3620 = vmatprep.subr.mxu0 0.0
        %3621 = vmatpush1.msra.mxu0 0.0
        %3622 = vmatprep.subr.mxu0 0.0
        %3623 = vmatpush1.msra.mxu0 0.0
        %3624 = vmatprep.mubr.f32.mxu0 0.0
        %3625 = vmatmul.mubr.f32.gmra.mrb[0].mxu0 %v3558
        %v3626 = vpop.f32.mrb[0].mxu0
        %v3627 = vadd.f32 %v3555, %v3626
        %v3628 = vpop.f32.mrb[0].mxu0
        %3629 = vdwg.mxu0
        %v3630 = vmul.f32 %v3627, 0.5
        %v3631 = vmul.f32 %v3627, 0.044715
        %v3632 = vmul.f32 %v3631, %v3627
        %v3633 = vmul.f32 %v3632, %v3627
        %v3634 = vadd.f32 %v3627, %v3633
        %v3635 = vmul.f32 %v3634, 0.7978846
        %v3636 = vtanh.pop %v3635
        %v3637 = vadd.f32 %v3636, 1.0
        %v3638 = vmul.f32 %v3630, %v3637
        %s3639 = scalar_lea.vmem %s14, 64
        %v3640 = vld [vmem:[%s3639] sm:$0xff]
        %v3641 = vld [vmem:[%s3639 + $0x8] sm:$0xff]
        %v3642 = vld [vmem:[%s3639 + $0x10] sm:$0xff]
        %v3643 = vld [vmem:[%s3639 + $0x18] sm:$0xff]
        %v3644 = vld [vmem:[%s3639 + $0x20] sm:$0xff]
        %v3645 = vld [vmem:[%s3639 + $0x28] sm:$0xff]
        %v3646 = vld [vmem:[%s3639 + $0x30] sm:$0xff]
        %v3647 = vld [vmem:[%s3639 + $0x38] sm:$0xff]
        %s3648 = scalar_lea.vmem %s15, 1
        %v3649 = vld [vmem:[%s3648] sm:$0x1]
        %v3651 = vlaneseq
        %v3652 = vshrl.u32 %v3651, 7
        %v3653 = vsub.s32 0, %v3652
        %v3654 = vrot.slane %v3649, %v3653
        %v3657 = vsel %vm2140, %v3638, 0
        %3659 = vmatprep.subr.mxu0 0.0
        %3660 = vmatpush1.msra.mxu0 %v3640
        %3661 = vmatprep.subr.mxu0 0.0
        %3662 = vmatpush1.msra.mxu0 %v3641
        %3663 = vmatprep.subr.mxu0 0.0
        %3664 = vmatpush1.msra.mxu0 %v3642
        %3665 = vmatprep.subr.mxu0 0.0
        %3666 = vmatpush1.msra.mxu0 %v3643
        %3667 = vmatprep.subr.mxu0 0.0
        %3668 = vmatpush1.msra.mxu0 %v3644
        %3669 = vmatprep.subr.mxu0 0.0
        %3670 = vmatpush1.msra.mxu0 %v3645
        %3671 = vmatprep.subr.mxu0 0.0
        %3672 = vmatpush1.msra.mxu0 %v3646
        %3673 = vmatprep.subr.mxu0 0.0
        %3674 = vmatpush1.msra.mxu0 %v3647
        %3675 = vmatprep.subr.mxu0 0.0
        %3676 = vmatpush1.msra.mxu0 0.0
        %3677 = vmatprep.subr.mxu0 0.0
        %3678 = vmatpush1.msra.mxu0 0.0
        %3679 = vmatprep.subr.mxu0 0.0
        %3680 = vmatpush1.msra.mxu0 0.0
        %3681 = vmatprep.subr.mxu0 0.0
        %3682 = vmatpush1.msra.mxu0 0.0
        %3683 = vmatprep.subr.mxu0 0.0
        %3684 = vmatpush1.msra.mxu0 0.0
        %3685 = vmatprep.subr.mxu0 0.0
        %3686 = vmatpush1.msra.mxu0 0.0
        %3687 = vmatprep.subr.mxu0 0.0
        %3688 = vmatpush1.msra.mxu0 0.0
        %3689 = vmatprep.subr.mxu0 0.0
        %3690 = vmatpush1.msra.mxu0 0.0
        %3691 = vmatprep.subr.mxu0 0.0
        %3692 = vmatpush1.msra.mxu0 0.0
        %3693 = vmatprep.subr.mxu0 0.0
        %3694 = vmatpush1.msra.mxu0 0.0
        %3695 = vmatprep.subr.mxu0 0.0
        %3696 = vmatpush1.msra.mxu0 0.0
        %3697 = vmatprep.subr.mxu0 0.0
        %3698 = vmatpush1.msra.mxu0 0.0
        %3699 = vmatprep.subr.mxu0 0.0
        %3700 = vmatpush1.msra.mxu0 0.0
        %3701 = vmatprep.subr.mxu0 0.0
        %3702 = vmatpush1.msra.mxu0 0.0
        %3703 = vmatprep.subr.mxu0 0.0
        %3704 = vmatpush1.msra.mxu0 0.0
        %3705 = vmatprep.subr.mxu0 0.0
        %3706 = vmatpush1.msra.mxu0 0.0
        %3707 = vmatprep.subr.mxu0 0.0
        %3708 = vmatpush1.msra.mxu0 0.0
        %3709 = vmatprep.subr.mxu0 0.0
        %3710 = vmatpush1.msra.mxu0 0.0
        %3711 = vmatprep.subr.mxu0 0.0
        %3712 = vmatpush1.msra.mxu0 0.0
        %3713 = vmatprep.subr.mxu0 0.0
        %3714 = vmatpush1.msra.mxu0 0.0
        %3715 = vmatprep.subr.mxu0 0.0
        %3716 = vmatpush1.msra.mxu0 0.0
        %3717 = vmatprep.subr.mxu0 0.0
        %3718 = vmatpush1.msra.mxu0 0.0
        %3719 = vmatprep.subr.mxu0 0.0
        %3720 = vmatpush1.msra.mxu0 0.0
        %3721 = vmatprep.subr.mxu0 0.0
        %3722 = vmatpush1.msra.mxu0 0.0
        %3723 = vmatprep.mubr.f32.mxu0 0.0
        %3724 = vmatmul.mubr.f32.gmra.mrb[0].mxu0 %v3657
        %v3725 = vpop.f32.mrb[0].mxu0
        %v3726 = vadd.f32 %v3654, %v3725
        %v3727 = vpop.f32.mrb[0].mxu0
        %3728 = vdwg.mxu0
        %s3729 = sld [smem:[#allocation13 + $0x1]]
        %v3730 = vstv %s3729
        %v3731 = vmul.f32 %v3730, %v3726
        %v3732 = vadd.f32 %v3543, %v3731
        %s3733 = scalar_lea.vmem %s16, 1
        %v3734 = vld [vmem:[%s3733] sm:$0x1]
        %s3735 = scalar_lea.vmem %s17, 1
        %v3736 = vld [vmem:[%s3735] sm:$0x1]
        %v3737 = vsel %vm739, %v3732, 0.0
        %3738 = vadd.xlane.f32.xlu0 %v3737
        %v3739 = vpop.xlane.xlu0 %3738
        %v3740 = vmul.f32 %v3739, %v2007
        %v3741 = vsub.f32 %v3732, %v3740
        %v3742 = vmul.f32 %v3741, %v3741
        %v3743 = vsel %vm739, %v3742, 0.0
        %3744 = vadd.xlane.f32.xlu0 %v3743
        %v3745 = vpop.xlane.xlu0 %3744
        %v3746 = vmul.f32 %v3745, %v2007
        %v3747 = vadd.f32 %v3746, 1e-05
        %v3748 = vrsqrt.pop %v3747
        %v3749 = vmul.f32 %v3741, %v3748
        %v3751 = vlaneseq
        %v3752 = vshrl.u32 %v3751, 7
        %v3753 = vsub.s32 0, %v3752
        %v3754 = vrot.slane %v3734, %v3753
        %v3756 = vmul.f32 %v3749, %v3754
        %v3758 = vlaneseq
        %v3759 = vshrl.u32 %v3758, 7
        %v3760 = vsub.s32 0, %v3759
        %v3761 = vrot.slane %v3736, %v3760
        %v3763 = vadd.f32 %v3756, %v3761
        %3764 = vst.msk [vmem:[%s737] sm:$0xff] %vm739, %v3763
        %s3765 = sand.u32 %s481, 1
        %s3766 = scalar_lea.sflag [#allocation5], %s3765
        %s3767 = sand.u32 %s481, 1
        %s3768 = smul.addr %s3767, 8
        %s3769 = scalar_lea.vmem [#allocation15], %s3768
        // Predicated region
        $region125: #{tpu_custom_call.1} parent=99 // pred_check
          %p3770 = pneg %p491
        $region126: #{tpu_custom_call.1} parent=99 // pred_check_branch
          %3772 = sbr.rel (%p3770) target = $region128
        $region127: #{tpu_custom_call.1} parent=99 // pred_region
          %s3774 = ssub.s32 128, 128
          %3775 = vsyncadd %s3766, %s3774
          %s3776 = smul.addr %s43, 128
          %s3777 = scalar_lea.hbm %s20, %s3776
          %s3779 = sshll.u32 %s3769, 4
          %s3780 = int_to_ptr.vmem [resolvable:$true] %s3779
          %3782 = dma.vmem_to_hbm [thread:$0]  %s3780, 128, %s3777, %s3766
        $region128: #{tpu_custom_call.1} parent=99 // pred_fallthru
          _
      $region100: #{tpu_custom_call.1} parent=5 // pred_fallthru
        _
      %p3783 = scmp.le.s32.totalorder 2, %s38
      // Predicated region
      $region129: #{tpu_custom_call.1} parent=5 // pred_check
        %p3784 = pneg %p3783
      $region130: #{tpu_custom_call.1} parent=5 // pred_check_branch
        %3786 = sbr.rel (%p3784) target = $region132
      $region131: #{tpu_custom_call.1} parent=5 // pred_region
        %s3787 = ssub.s32 %s38, 2
        // Predicated region
        $region133: #{tpu_custom_call.1} parent=131 // pred_check
          %p3788 = pneg %p497
        $region134: #{tpu_custom_call.1} parent=131 // pred_check_branch
          %3790 = sbr.rel (%p3788) target = $region136
        $region135: #{tpu_custom_call.1} parent=131 // pred_region
          %s3791 = sand.u32 %s482, 1
          %s3792 = scalar_lea.sflag [#allocation5], %s3791
          %s3793 = sand.u32 %s482, 1
          %s3794 = smul.addr %s3793, 8
          %s3795 = scalar_lea.vmem [#allocation15], %s3794
          %3796 = dma.done %s3792, 128
        $region136: #{tpu_custom_call.1} parent=131 // pred_fallthru
          _
      $region132: #{tpu_custom_call.1} parent=5 // pred_fallthru
        _
    $region6: #{tpu_custom_call.1} parent=1 // loop_footer
      %s42 = sadd.s32 1, %s38
    $region7: #{tpu_custom_call.1} parent=1 // loop_footer_branch
      %37 = sbr.rel target = $region3
    $region8: #{tpu_custom_call.1} parent=1 // loop_exit
      _
    %3797 = vsyncpa [#allocation4], 1
    %s3798 = scalar_lea.sflag [#allocation4], 1
    %3799 = vsyncpa %s3798, 1
    %3800 = vsyncpa [#allocation8], 1
    %s3801 = scalar_lea.sflag [#allocation8], 1
    %3802 = vsyncpa %s3801, 1
    %3803 = vsyncpa [#allocation11], 1
    %3804 = vsyncpa [#allocation5], 1
    %s3805 = scalar_lea.sflag [#allocation5], 1
    %3806 = vsyncpa %s3805, 1
    %3807 = vsyncpa [#allocation6], 1
    %s3808 = scalar_lea.sflag [#allocation6], 1
    %3809 = vsyncpa %s3808, 1
    %3810 = vsyncpa [#allocation14], 1

</llo_original>
